<compile_context>
chip_gen: v7x
topology: tpu7x:2x2x1
jax: 0.10.0
libtpu: 0.0.40
codegen_flags: <defaults>
</compile_context>

<pallas_src>
import functools

import jax
import jax.numpy as jnp
from jax import lax
from jax.experimental import pallas as pl
from jax.experimental.pallas import tpu as pltpu


# -----------------------------------------------------------------------------
# Fused Pallas kernel
# -----------------------------------------------------------------------------
def _fused_bilstm_kernel(x_ref,                       # (T*B, E)   time-major, flattened
                         wih1_ref,                    # (E, 8*H1)  [fwd 4H1 | bwd 4H1]
                         whh1f_ref, whh1b_ref,        # (H1, 4*H1) each
                         b1_ref,                      # (1, 8*H1)  b_ih + b_hh, [fwd | bwd]
                         wih2_ref,                    # (2*H1, 8*H2)
                         whh2f_ref, whh2b_ref,        # (H2, 4*H2) each
                         b2_ref,                      # (1, 8*H2)
                         fc1w_ref, fc1b_ref,          # (2*H2, 64), (1, 64)
                         fc2w_ref, fc2b_ref,          # (64, OUT_PAD), (1, OUT_PAD)
                         out_ref,                     # (B, OUT_PAD)
                         l1f_ref, l1b_ref,            # (T*B, H1) VMEM scratch
                         *, T, B):
    H1 = whh1f_ref.shape[0]
    H2 = whh2f_ref.shape[0]

    def cell(gates, c_prev, H):
        # PyTorch gate order (i, f, g, o).
        i = jax.nn.sigmoid(gates[:, 0:H])
        f = jax.nn.sigmoid(gates[:, H:2 * H])
        g = jnp.tanh(gates[:, 2 * H:3 * H])
        o = jax.nn.sigmoid(gates[:, 3 * H:4 * H])
        c_new = f * c_prev + i * g
        return o * jnp.tanh(c_new), c_new

    # ---- Layer 1: hoisted input projection (both directions, one matmul) ----
    g1 = (jnp.dot(x_ref[...], wih1_ref[...], preferred_element_type=jnp.float32)
          + b1_ref[...])                              # (T*B, 8*H1)

    hf = jnp.zeros((B, H1), jnp.float32)
    cf = jnp.zeros((B, H1), jnp.float32)
    hb = jnp.zeros((B, H1), jnp.float32)
    cb = jnp.zeros((B, H1), jnp.float32)

    # Static fully-unrolled time loop (T is compile-time small); fwd processes
    # step t while bwd processes step T-1-t in the same iteration.
    # TODO(synk): for large T, switch to lax.fori_loop with dynamic ref indexing
    # and a batch grid axis (parallel) so v7x's second TensorCore is used.
    for s in range(T):
        tf, tb = s, T - 1 - s
        gf = (g1[tf * B:(tf + 1) * B, 0:4 * H1]
              + jnp.dot(hf, whh1f_ref[...], preferred_element_type=jnp.float32))
        gb = (g1[tb * B:(tb + 1) * B, 4 * H1:8 * H1]
              + jnp.dot(hb, whh1b_ref[...], preferred_element_type=jnp.float32))
        hf, cf = cell(gf, cf, H1)
        hb, cb = cell(gb, cb, H1)
        l1f_ref[tf * B:(tf + 1) * B, :] = hf
        l1b_ref[tb * B:(tb + 1) * B, :] = hb

    # ---- Layer 2: hoisted projection over VMEM-resident layer-1 outputs ----
    g2 = (jnp.dot(l1f_ref[...], wih2_ref[0:H1, :], preferred_element_type=jnp.float32)
          + jnp.dot(l1b_ref[...], wih2_ref[H1:2 * H1, :], preferred_element_type=jnp.float32)
          + b2_ref[...])                              # (T*B, 8*H2)

    hf2 = jnp.zeros((B, H2), jnp.float32)
    cf2 = jnp.zeros((B, H2), jnp.float32)
    hb2 = jnp.zeros((B, H2), jnp.float32)
    cb2 = jnp.zeros((B, H2), jnp.float32)
    for s in range(T):
        tf, tb = s, T - 1 - s
        gf = (g2[tf * B:(tf + 1) * B, 0:4 * H2]
              + jnp.dot(hf2, whh2f_ref[...], preferred_element_type=jnp.float32))
        gb = (g2[tb * B:(tb + 1) * B, 4 * H2:8 * H2]
              + jnp.dot(hb2, whh2b_ref[...], preferred_element_type=jnp.float32))
        hf2, cf2 = cell(gf, cf2, H2)
        hb2, cb2 = cell(gb, cb2, H2)
    # Layer-2 per-step outputs are never materialized; only h_last is used.

    # ---- Head: cat(h_fwd, h_bwd) -> fc1 + ReLU -> dropout(identity) -> fc2 ----
    # cat(h_f, h_b) @ fc1_w  ==  h_f @ fc1_w[:H2] + h_b @ fc1_w[H2:]  (no lane concat)
    z = (jnp.dot(hf2, fc1w_ref[0:H2, :], preferred_element_type=jnp.float32)
         + jnp.dot(hb2, fc1w_ref[H2:2 * H2, :], preferred_element_type=jnp.float32)
         + fc1b_ref[...])
    z = jnp.maximum(z, 0.0)
    # TODO(synk): nn.Dropout is only active in train mode; identity here (eval).
    out_ref[...] = (jnp.dot(z, fc2w_ref[...], preferred_element_type=jnp.float32)
                    + fc2b_ref[...])                  # lane-dense (B, OUT_PAD)


# -----------------------------------------------------------------------------
# Wrapper
# -----------------------------------------------------------------------------
_VMEM = pl.BlockSpec(memory_space=pltpu.MemorySpace.VMEM)
_OUT_PAD = 128  # lane-dense classifier output width (sliced back to num_classes)


def forward(packed, x_ids, *, num_classes):
    """Pallas-backed forward pass. x_ids: (B, T) int32 -> logits (B, num_classes)."""
    B, T = x_ids.shape
    E = packed["embedding"].shape[1]
    H1 = packed["whh1_f"].shape[0]

    # Embedding gather directly in time-major order (glue, plain JAX); the
    # (T, B, E) -> (T*B, E) flatten happens here so the kernel needs no reshape.
    emb_tm = jnp.take(packed["embedding"], x_ids.T, axis=0)      # (T, B, E)
    x_flat = emb_tm.reshape(T * B, E).astype(jnp.float32)

    kernel = functools.partial(_fused_bilstm_kernel, T=T, B=B)
    out_pad = packed["fc2_w"].shape[1]
    out = pl.pallas_call(
        kernel,
        out_shape=jax.ShapeDtypeStruct((B, out_pad), jnp.float32),
        in_specs=[_VMEM] * 13,
        out_specs=_VMEM,
        scratch_shapes=[pltpu.VMEM((T * B, H1), jnp.float32),    # layer-1 fwd seq
                        pltpu.VMEM((T * B, H1), jnp.float32)],   # layer-1 bwd seq
    )(x_flat,
      packed["wih1"], packed["whh1_f"], packed["whh1_b"], packed["b1"],
      packed["wih2"], packed["whh2_f"], packed["whh2_b"], packed["b2"],
      packed["fc1_w"], packed["fc1_b"], packed["fc2_w"], packed["fc2_b"])
    return out[:, :num_classes]


def pack_params(params, *, out_pad=_OUT_PAD):
    """Pack per-direction weights into the kernel layout (done once, offline)."""
    l1, l2 = params["lstm1"], params["lstm2"]
    nc = params["fc2_w"].shape[1]
    fc2_w = jnp.zeros((params["fc2_w"].shape[0], out_pad), jnp.float32)
    fc2_w = fc2_w.at[:, :nc].set(params["fc2_w"])
    fc2_b = jnp.zeros((1, out_pad), jnp.float32).at[:, :nc].set(params["fc2_b"])
    return {
        "embedding": params["embedding"],
        "wih1": jnp.concatenate([l1["wih_f"], l1["wih_b"]], axis=1),
        "b1": jnp.concatenate([l1["b_f"], l1["b_b"]], axis=1),
        "whh1_f": l1["whh_f"], "whh1_b": l1["whh_b"],
        "wih2": jnp.concatenate([l2["wih_f"], l2["wih_b"]], axis=1),
        "b2": jnp.concatenate([l2["b_f"], l2["b_b"]], axis=1),
        "whh2_f": l2["whh_f"], "whh2_b": l2["whh_b"],
        "fc1_w": params["fc1_w"], "fc1_b": params["fc1_b"],
        "fc2_w": fc2_w, "fc2_b": fc2_b,
    }


# -----------------------------------------------------------------------------
# Pure-JAX reference (for correctness check)
# -----------------------------------------------------------------------------
def _lstm_dir_ref(x_tm, wih, whh, b, *, reverse):
    T, B, _ = x_tm.shape
    H = whh.shape[0]
    xs = x_tm[::-1] if reverse else x_tm

    def step(carry, x_t):
        h, c = carry
        gates = x_t @ wih + h @ whh + b
        i = jax.nn.sigmoid(gates[:, 0:H])
        f = jax.nn.sigmoid(gates[:, H:2 * H])
        g = jnp.tanh(gates[:, 2 * H:3 * H])
        o = jax.nn.sigmoid(gates[:, 3 * H:4 * H])
        c = f * c + i * g
        h = o * jnp.tanh(c)
        return (h, c), h

    (h_last, _), outs = lax.scan(step, (jnp.zeros((B, H)), jnp.zeros((B, H))), xs)
    if reverse:
        outs = outs[::-1]
    return outs, h_last


def _bilstm_ref(x_tm, p):
    out_f, h_f = _lstm_dir_ref(x_tm, p["wih_f"], p["whh_f"], p["b_f"], reverse=False)
    out_b, h_b = _lstm_dir_ref(x_tm, p["wih_b"], p["whh_b"], p["b_b"], reverse=True)
    return jnp.concatenate([out_f, out_b], axis=-1), h_f, h_b


def forward_ref(params, x_ids):
    emb = jnp.take(params["embedding"], x_ids, axis=0)
    x_tm = jnp.transpose(emb, (1, 0, 2)).astype(jnp.float32)
    l1_out, _, _ = _bilstm_ref(x_tm, params["lstm1"])
    _, h2_f, h2_b = _bilstm_ref(l1_out, params["lstm2"])
    last_hidden = jnp.concatenate([h2_f, h2_b], axis=-1)
    z = jnp.maximum(last_hidden @ params["fc1_w"] + params["fc1_b"], 0.0)
    return z @ params["fc2_w"] + params["fc2_b"]


# -----------------------------------------------------------------------------
# Deterministic parameter init (shapes follow the nn.Module __init__)
# -----------------------------------------------------------------------------
def _lstm_dir_params(key, d_in, h):
    k1, k2, k3 = jax.random.split(key, 3)
    s = 1.0 / jnp.sqrt(h)
    return {
        "wih": jax.random.uniform(k1, (d_in, 4 * h), jnp.float32, -s, s),
        "whh": jax.random.uniform(k2, (h, 4 * h), jnp.float32, -s, s),
        "b": jax.random.uniform(k3, (1, 4 * h), jnp.float32, -s, s),
    }


def _bilstm_params(key, d_in, h):
    kf, kb = jax.random.split(key)
    pf, pb = _lstm_dir_params(kf, d_in, h), _lstm_dir_params(kb, d_in, h)
    return {"wih_f": pf["wih"], "whh_f": pf["whh"], "b_f": pf["b"],
            "wih_b": pb["wih"], "whh_b": pb["whh"], "b_b": pb["b"]}


def init_params(key, vocab_size, embedding_dim, hidden_dim, num_classes):
    ke, k1, k2, kf1a, kf1b, kf2a, kf2b = jax.random.split(key, 7)
    emb = jax.random.normal(ke, (vocab_size, embedding_dim), jnp.float32)
    emb = emb.at[0].set(0.0)  # padding_idx=0
    h2 = 32  # lstm2 hidden size is hard-coded in the module
    return {
        "embedding": emb,
        "lstm1": _bilstm_params(k1, embedding_dim, hidden_dim),
        "lstm2": _bilstm_params(k2, 2 * hidden_dim, h2),
        "fc1_w": jax.random.uniform(kf1a, (2 * h2, 64), jnp.float32, -0.125, 0.125),
        "fc1_b": jax.random.uniform(kf1b, (1, 64), jnp.float32, -0.125, 0.125),
        "fc2_w": jax.random.uniform(kf2a, (64, num_classes), jnp.float32, -0.125, 0.125),
        "fc2_b": jax.random.uniform(kf2b, (1, num_classes), jnp.float32, -0.125, 0.125),
    }


# -----------------------------------------------------------------------------
# Main
# -----------------------------------------------------------------------------
if __name__ == "__main__":
    B, T = 2, 8
    vocab_size, embedding_dim, hidden_dim, num_classes = 50, 32, 32, 7

    root = jax.random.PRNGKey(0)
    pkey, xkey = jax.random.split(root)
    params = init_params(pkey, vocab_size, embedding_dim, hidden_dim, num_classes)
    packed = pack_params(params)
    x_ids = jax.random.randint(xkey, (B, T), 0, vocab_size, dtype=jnp.int32)

    fwd = jax.jit(forward, static_argnames="num_classes")
    logits = fwd(packed, x_ids, num_classes=num_classes)
    logits = jax.block_until_ready(logits)

    ref = forward_ref(params, x_ids)
    assert logits.shape == (B, num_classes), logits.shape
    max_err = float(jnp.max(jnp.abs(logits - ref)))
    assert max_err < 2e-3, f"mismatch vs reference: {max_err}"

    print("KERNEL_OK")
</pallas_src>

<mosaic_0001>
module attributes {stable_mosaic.version = 11 : i64} {
  func.func @_fused_bilstm_kernel(%arg0: memref<16x32xf32, #tpu.memory_space<vmem>>, %arg1: memref<32x256xf32, #tpu.memory_space<vmem>>, %arg2: memref<32x128xf32, #tpu.memory_space<vmem>>, %arg3: memref<32x128xf32, #tpu.memory_space<vmem>>, %arg4: memref<1x256xf32, #tpu.memory_space<vmem>>, %arg5: memref<64x256xf32, #tpu.memory_space<vmem>>, %arg6: memref<32x128xf32, #tpu.memory_space<vmem>>, %arg7: memref<32x128xf32, #tpu.memory_space<vmem>>, %arg8: memref<1x256xf32, #tpu.memory_space<vmem>>, %arg9: memref<64x64xf32, #tpu.memory_space<vmem>>, %arg10: memref<1x64xf32, #tpu.memory_space<vmem>>, %arg11: memref<64x128xf32, #tpu.memory_space<vmem>>, %arg12: memref<1x128xf32, #tpu.memory_space<vmem>>, %arg13: memref<2x128xf32, #tpu.memory_space<vmem>>, %arg14: memref<16x32xf32, #tpu.memory_space<vmem>>, %arg15: memref<16x32xf32, #tpu.memory_space<vmem>>) attributes {dimension_semantics = [], scalar_prefetch = 0 : i64, scratch_operands = 2 : i64, tpu.core_type = #tpu.core_type<tc>} {
    %c0 = arith.constant 0 : index
    %c0_0 = arith.constant 0 : index
    %0 = vector.load %arg0[%c0, %c0_0] : memref<16x32xf32, #tpu.memory_space<vmem>>, vector<16x32xf32>
    %c0_1 = arith.constant 0 : index
    %c0_2 = arith.constant 0 : index
    %1 = vector.load %arg1[%c0_1, %c0_2] : memref<32x256xf32, #tpu.memory_space<vmem>>, vector<32x256xf32>
    %cst = arith.constant dense<0.000000e+00> : vector<16x256xf32>
    %2 = tpu.matmul %0, %1, %cst {dimension_numbers = #tpu.dot_dimension_numbers<[1], [0], [0], [1], [0, 0, 1, 1], [], []>} : vector<16x32xf32>, vector<32x256xf32>, vector<16x256xf32> -> vector<16x256xf32>
    %c0_3 = arith.constant 0 : index
    %c0_4 = arith.constant 0 : index
    %3 = vector.load %arg4[%c0_3, %c0_4] : memref<1x256xf32, #tpu.memory_space<vmem>>, vector<1x256xf32>
    %4 = vector.broadcast %3 : vector<1x256xf32> to vector<16x256xf32>
    %5 = arith.addf %2, %4 : vector<16x256xf32>
    %cst_5 = arith.constant 0.000000e+00 : f32
    %6 = vector.broadcast %cst_5 : f32 to vector<2x32xf32>
    %cst_6 = arith.constant 0.000000e+00 : f32
    %7 = vector.broadcast %cst_6 : f32 to vector<2x32xf32>
    %cst_7 = arith.constant 0.000000e+00 : f32
    %8 = vector.broadcast %cst_7 : f32 to vector<2x32xf32>
    %cst_8 = arith.constant 0.000000e+00 : f32
    %9 = vector.broadcast %cst_8 : f32 to vector<2x32xf32>
    %10 = vector.extract_strided_slice %5 {offsets = [0, 0], sizes = [2, 128], strides = [1, 1]} : vector<16x256xf32> to vector<2x128xf32>
    %c0_9 = arith.constant 0 : index
    %c0_10 = arith.constant 0 : index
    %11 = vector.load %arg2[%c0_9, %c0_10] : memref<32x128xf32, #tpu.memory_space<vmem>>, vector<32x128xf32>
    %cst_11 = arith.constant dense<0.000000e+00> : vector<2x128xf32>
    %12 = tpu.matmul %6, %11, %cst_11 {dimension_numbers = #tpu.dot_dimension_numbers<[1], [0], [0], [1], [0, 0, 1, 1], [], []>} : vector<2x32xf32>, vector<32x128xf32>, vector<2x128xf32> -> vector<2x128xf32>
    %13 = arith.addf %10, %12 : vector<2x128xf32>
    %14 = vector.extract_strided_slice %5 {offsets = [14, 128], sizes = [2, 128], strides = [1, 1]} : vector<16x256xf32> to vector<2x128xf32>
    %c0_12 = arith.constant 0 : index
    %c0_13 = arith.constant 0 : index
    %15 = vector.load %arg3[%c0_12, %c0_13] : memref<32x128xf32, #tpu.memory_space<vmem>>, vector<32x128xf32>
    %cst_14 = arith.constant dense<0.000000e+00> : vector<2x128xf32>
    %16 = tpu.matmul %8, %15, %cst_14 {dimension_numbers = #tpu.dot_dimension_numbers<[1], [0], [0], [1], [0, 0, 1, 1], [], []>} : vector<2x32xf32>, vector<32x128xf32>, vector<2x128xf32> -> vector<2x128xf32>
    %17 = arith.addf %14, %16 : vector<2x128xf32>
    %18 = vector.extract_strided_slice %13 {offsets = [0, 0], sizes = [2, 32], strides = [1, 1]} : vector<2x128xf32> to vector<2x32xf32>
    %19 = arith.negf %18 : vector<2x32xf32>
    %20 = math.exp %19 : vector<2x32xf32>
    %cst_15 = arith.constant 1.000000e+00 : f32
    %21 = vector.broadcast %cst_15 : f32 to vector<2x32xf32>
    %22 = arith.addf %21, %20 : vector<2x32xf32>
    %23 = arith.divf %21, %22 : vector<2x32xf32>
    %24 = vector.extract_strided_slice %13 {offsets = [0, 32], sizes = [2, 32], strides = [1, 1]} : vector<2x128xf32> to vector<2x32xf32>
    %25 = arith.negf %24 : vector<2x32xf32>
    %26 = math.exp %25 : vector<2x32xf32>
    %cst_16 = arith.constant 1.000000e+00 : f32
    %27 = vector.broadcast %cst_16 : f32 to vector<2x32xf32>
    %28 = arith.addf %27, %26 : vector<2x32xf32>
    %29 = arith.divf %27, %28 : vector<2x32xf32>
    %30 = vector.extract_strided_slice %13 {offsets = [0, 64], sizes = [2, 32], strides = [1, 1]} : vector<2x128xf32> to vector<2x32xf32>
    %31 = math.tanh %30 : vector<2x32xf32>
    %32 = vector.extract_strided_slice %13 {offsets = [0, 96], sizes = [2, 32], strides = [1, 1]} : vector<2x128xf32> to vector<2x32xf32>
    %33 = arith.negf %32 : vector<2x32xf32>
    %34 = math.exp %33 : vector<2x32xf32>
    %cst_17 = arith.constant 1.000000e+00 : f32
    %35 = vector.broadcast %cst_17 : f32 to vector<2x32xf32>
    %36 = arith.addf %35, %34 : vector<2x32xf32>
    %37 = arith.divf %35, %36 : vector<2x32xf32>
    %38 = arith.mulf %29, %7 : vector<2x32xf32>
    %39 = arith.mulf %23, %31 : vector<2x32xf32>
    %40 = arith.addf %38, %39 : vector<2x32xf32>
    %41 = math.tanh %40 : vector<2x32xf32>
    %42 = arith.mulf %37, %41 : vector<2x32xf32>
    %43 = vector.extract_strided_slice %17 {offsets = [0, 0], sizes = [2, 32], strides = [1, 1]} : vector<2x128xf32> to vector<2x32xf32>
    %44 = arith.negf %43 : vector<2x32xf32>
    %45 = math.exp %44 : vector<2x32xf32>
    %cst_18 = arith.constant 1.000000e+00 : f32
    %46 = vector.broadcast %cst_18 : f32 to vector<2x32xf32>
    %47 = arith.addf %46, %45 : vector<2x32xf32>
    %48 = arith.divf %46, %47 : vector<2x32xf32>
    %49 = vector.extract_strided_slice %17 {offsets = [0, 32], sizes = [2, 32], strides = [1, 1]} : vector<2x128xf32> to vector<2x32xf32>
    %50 = arith.negf %49 : vector<2x32xf32>
    %51 = math.exp %50 : vector<2x32xf32>
    %cst_19 = arith.constant 1.000000e+00 : f32
    %52 = vector.broadcast %cst_19 : f32 to vector<2x32xf32>
    %53 = arith.addf %52, %51 : vector<2x32xf32>
    %54 = arith.divf %52, %53 : vector<2x32xf32>
    %55 = vector.extract_strided_slice %17 {offsets = [0, 64], sizes = [2, 32], strides = [1, 1]} : vector<2x128xf32> to vector<2x32xf32>
    %56 = math.tanh %55 : vector<2x32xf32>
    %57 = vector.extract_strided_slice %17 {offsets = [0, 96], sizes = [2, 32], strides = [1, 1]} : vector<2x128xf32> to vector<2x32xf32>
    %58 = arith.negf %57 : vector<2x32xf32>
    %59 = math.exp %58 : vector<2x32xf32>
    %cst_20 = arith.constant 1.000000e+00 : f32
    %60 = vector.broadcast %cst_20 : f32 to vector<2x32xf32>
    %61 = arith.addf %60, %59 : vector<2x32xf32>
    %62 = arith.divf %60, %61 : vector<2x32xf32>
    %63 = arith.mulf %54, %9 : vector<2x32xf32>
    %64 = arith.mulf %48, %56 : vector<2x32xf32>
    %65 = arith.addf %63, %64 : vector<2x32xf32>
    %66 = math.tanh %65 : vector<2x32xf32>
    %67 = arith.mulf %62, %66 : vector<2x32xf32>
    %c0_21 = arith.constant 0 : index
    %c0_22 = arith.constant 0 : index
    %68 = vector.load %arg14[%c0_21, %c0_22] : memref<16x32xf32, #tpu.memory_space<vmem>>, vector<2x32xf32>
    tpu.vector_store %arg14[%c0_21, %c0_22], %42 {strides = array<i32>} : memref<16x32xf32, #tpu.memory_space<vmem>>, vector<2x32xf32>,
    %c14 = arith.constant 14 : index
    %c0_23 = arith.constant 0 : index
    %69 = vector.load %arg15[%c14, %c0_23] : memref<16x32xf32, #tpu.memory_space<vmem>>, vector<2x32xf32>
    tpu.vector_store %arg15[%c14, %c0_23], %67 {strides = array<i32>} : memref<16x32xf32, #tpu.memory_space<vmem>>, vector<2x32xf32>,
    %70 = vector.extract_strided_slice %5 {offsets = [2, 0], sizes = [2, 128], strides = [1, 1]} : vector<16x256xf32> to vector<2x128xf32>
    %c0_24 = arith.constant 0 : index
    %c0_25 = arith.constant 0 : index
    %71 = vector.load %arg2[%c0_24, %c0_25] : memref<32x128xf32, #tpu.memory_space<vmem>>, vector<32x128xf32>
    %cst_26 = arith.constant dense<0.000000e+00> : vector<2x128xf32>
    %72 = tpu.matmul %42, %71, %cst_26 {dimension_numbers = #tpu.dot_dimension_numbers<[1], [0], [0], [1], [0, 0, 1, 1], [], []>} : vector<2x32xf32>, vector<32x128xf32>, vector<2x128xf32> -> vector<2x128xf32>
    %73 = arith.addf %70, %72 : vector<2x128xf32>
    %74 = vector.extract_strided_slice %5 {offsets = [12, 128], sizes = [2, 128], strides = [1, 1]} : vector<16x256xf32> to vector<2x128xf32>
    %c0_27 = arith.constant 0 : index
    %c0_28 = arith.constant 0 : index
    %75 = vector.load %arg3[%c0_27, %c0_28] : memref<32x128xf32, #tpu.memory_space<vmem>>, vector<32x128xf32>
    %cst_29 = arith.constant dense<0.000000e+00> : vector<2x128xf32>
    %76 = tpu.matmul %67, %75, %cst_29 {dimension_numbers = #tpu.dot_dimension_numbers<[1], [0], [0], [1], [0, 0, 1, 1], [], []>} : vector<2x32xf32>, vector<32x128xf32>, vector<2x128xf32> -> vector<2x128xf32>
    %77 = arith.addf %74, %76 : vector<2x128xf32>
    %78 = vector.extract_strided_slice %73 {offsets = [0, 0], sizes = [2, 32], strides = [1, 1]} : vector<2x128xf32> to vector<2x32xf32>
    %79 = arith.negf %78 : vector<2x32xf32>
    %80 = math.exp %79 : vector<2x32xf32>
    %cst_30 = arith.constant 1.000000e+00 : f32
    %81 = vector.broadcast %cst_30 : f32 to vector<2x32xf32>
    %82 = arith.addf %81, %80 : vector<2x32xf32>
    %83 = arith.divf %81, %82 : vector<2x32xf32>
    %84 = vector.extract_strided_slice %73 {offsets = [0, 32], sizes = [2, 32], strides = [1, 1]} : vector<2x128xf32> to vector<2x32xf32>
    %85 = arith.negf %84 : vector<2x32xf32>
    %86 = math.exp %85 : vector<2x32xf32>
    %cst_31 = arith.constant 1.000000e+00 : f32
    %87 = vector.broadcast %cst_31 : f32 to vector<2x32xf32>
    %88 = arith.addf %87, %86 : vector<2x32xf32>
    %89 = arith.divf %87, %88 : vector<2x32xf32>
    %90 = vector.extract_strided_slice %73 {offsets = [0, 64], sizes = [2, 32], strides = [1, 1]} : vector<2x128xf32> to vector<2x32xf32>
    %91 = math.tanh %90 : vector<2x32xf32>
    %92 = vector.extract_strided_slice %73 {offsets = [0, 96], sizes = [2, 32], strides = [1, 1]} : vector<2x128xf32> to vector<2x32xf32>
    %93 = arith.negf %92 : vector<2x32xf32>
    %94 = math.exp %93 : vector<2x32xf32>
    %cst_32 = arith.constant 1.000000e+00 : f32
    %95 = vector.broadcast %cst_32 : f32 to vector<2x32xf32>
    %96 = arith.addf %95, %94 : vector<2x32xf32>
    %97 = arith.divf %95, %96 : vector<2x32xf32>
    %98 = arith.mulf %89, %40 : vector<2x32xf32>
    %99 = arith.mulf %83, %91 : vector<2x32xf32>
    %100 = arith.addf %98, %99 : vector<2x32xf32>
    %101 = math.tanh %100 : vector<2x32xf32>
    %102 = arith.mulf %97, %101 : vector<2x32xf32>
    %103 = vector.extract_strided_slice %77 {offsets = [0, 0], sizes = [2, 32], strides = [1, 1]} : vector<2x128xf32> to vector<2x32xf32>
    %104 = arith.negf %103 : vector<2x32xf32>
    %105 = math.exp %104 : vector<2x32xf32>
    %cst_33 = arith.constant 1.000000e+00 : f32
    %106 = vector.broadcast %cst_33 : f32 to vector<2x32xf32>
    %107 = arith.addf %106, %105 : vector<2x32xf32>
    %108 = arith.divf %106, %107 : vector<2x32xf32>
    %109 = vector.extract_strided_slice %77 {offsets = [0, 32], sizes = [2, 32], strides = [1, 1]} : vector<2x128xf32> to vector<2x32xf32>
    %110 = arith.negf %109 : vector<2x32xf32>
    %111 = math.exp %110 : vector<2x32xf32>
    %cst_34 = arith.constant 1.000000e+00 : f32
    %112 = vector.broadcast %cst_34 : f32 to vector<2x32xf32>
    %113 = arith.addf %112, %111 : vector<2x32xf32>
    %114 = arith.divf %112, %113 : vector<2x32xf32>
    %115 = vector.extract_strided_slice %77 {offsets = [0, 64], sizes = [2, 32], strides = [1, 1]} : vector<2x128xf32> to vector<2x32xf32>
    %116 = math.tanh %115 : vector<2x32xf32>
    %117 = vector.extract_strided_slice %77 {offsets = [0, 96], sizes = [2, 32], strides = [1, 1]} : vector<2x128xf32> to vector<2x32xf32>
    %118 = arith.negf %117 : vector<2x32xf32>
    %119 = math.exp %118 : vector<2x32xf32>
    %cst_35 = arith.constant 1.000000e+00 : f32
    %120 = vector.broadcast %cst_35 : f32 to vector<2x32xf32>
    %121 = arith.addf %120, %119 : vector<2x32xf32>
    %122 = arith.divf %120, %121 : vector<2x32xf32>
    %123 = arith.mulf %114, %65 : vector<2x32xf32>
    %124 = arith.mulf %108, %116 : vector<2x32xf32>
    %125 = arith.addf %123, %124 : vector<2x32xf32>
    %126 = math.tanh %125 : vector<2x32xf32>
    %127 = arith.mulf %122, %126 : vector<2x32xf32>
    %c2 = arith.constant 2 : index
    %c0_36 = arith.constant 0 : index
    %128 = vector.load %arg14[%c2, %c0_36] : memref<16x32xf32, #tpu.memory_space<vmem>>, vector<2x32xf32>
    tpu.vector_store %arg14[%c2, %c0_36], %102 {strides = array<i32>} : memref<16x32xf32, #tpu.memory_space<vmem>>, vector<2x32xf32>,
    %c12 = arith.constant 12 : index
    %c0_37 = arith.constant 0 : index
    %129 = vector.load %arg15[%c12, %c0_37] : memref<16x32xf32, #tpu.memory_space<vmem>>, vector<2x32xf32>
    tpu.vector_store %arg15[%c12, %c0_37], %127 {strides = array<i32>} : memref<16x32xf32, #tpu.memory_space<vmem>>, vector<2x32xf32>,
    %130 = vector.extract_strided_slice %5 {offsets = [4, 0], sizes = [2, 128], strides = [1, 1]} : vector<16x256xf32> to vector<2x128xf32>
    %c0_38 = arith.constant 0 : index
    %c0_39 = arith.constant 0 : index
    %131 = vector.load %arg2[%c0_38, %c0_39] : memref<32x128xf32, #tpu.memory_space<vmem>>, vector<32x128xf32>
    %cst_40 = arith.constant dense<0.000000e+00> : vector<2x128xf32>
    %132 = tpu.matmul %102, %131, %cst_40 {dimension_numbers = #tpu.dot_dimension_numbers<[1], [0], [0], [1], [0, 0, 1, 1], [], []>} : vector<2x32xf32>, vector<32x128xf32>, vector<2x128xf32> -> vector<2x128xf32>
    %133 = arith.addf %130, %132 : vector<2x128xf32>
    %134 = vector.extract_strided_slice %5 {offsets = [10, 128], sizes = [2, 128], strides = [1, 1]} : vector<16x256xf32> to vector<2x128xf32>
    %c0_41 = arith.constant 0 : index
    %c0_42 = arith.constant 0 : index
    %135 = vector.load %arg3[%c0_41, %c0_42] : memref<32x128xf32, #tpu.memory_space<vmem>>, vector<32x128xf32>
    %cst_43 = arith.constant dense<0.000000e+00> : vector<2x128xf32>
    %136 = tpu.matmul %127, %135, %cst_43 {dimension_numbers = #tpu.dot_dimension_numbers<[1], [0], [0], [1], [0, 0, 1, 1], [], []>} : vector<2x32xf32>, vector<32x128xf32>, vector<2x128xf32> -> vector<2x128xf32>
    %137 = arith.addf %134, %136 : vector<2x128xf32>
    %138 = vector.extract_strided_slice %133 {offsets = [0, 0], sizes = [2, 32], strides = [1, 1]} : vector<2x128xf32> to vector<2x32xf32>
    %139 = arith.negf %138 : vector<2x32xf32>
    %140 = math.exp %139 : vector<2x32xf32>
    %cst_44 = arith.constant 1.000000e+00 : f32
    %141 = vector.broadcast %cst_44 : f32 to vector<2x32xf32>
    %142 = arith.addf %141, %140 : vector<2x32xf32>
    %143 = arith.divf %141, %142 : vector<2x32xf32>
    %144 = vector.extract_strided_slice %133 {offsets = [0, 32], sizes = [2, 32], strides = [1, 1]} : vector<2x128xf32> to vector<2x32xf32>
    %145 = arith.negf %144 : vector<2x32xf32>
    %146 = math.exp %145 : vector<2x32xf32>
    %cst_45 = arith.constant 1.000000e+00 : f32
    %147 = vector.broadcast %cst_45 : f32 to vector<2x32xf32>
    %148 = arith.addf %147, %146 : vector<2x32xf32>
    %149 = arith.divf %147, %148 : vector<2x32xf32>
    %150 = vector.extract_strided_slice %133 {offsets = [0, 64], sizes = [2, 32], strides = [1, 1]} : vector<2x128xf32> to vector<2x32xf32>
    %151 = math.tanh %150 : vector<2x32xf32>
    %152 = vector.extract_strided_slice %133 {offsets = [0, 96], sizes = [2, 32], strides = [1, 1]} : vector<2x128xf32> to vector<2x32xf32>
    %153 = arith.negf %152 : vector<2x32xf32>
    %154 = math.exp %153 : vector<2x32xf32>
    %cst_46 = arith.constant 1.000000e+00 : f32
    %155 = vector.broadcast %cst_46 : f32 to vector<2x32xf32>
    %156 = arith.addf %155, %154 : vector<2x32xf32>
    %157 = arith.divf %155, %156 : vector<2x32xf32>
    %158 = arith.mulf %149, %100 : vector<2x32xf32>
    %159 = arith.mulf %143, %151 : vector<2x32xf32>
    %160 = arith.addf %158, %159 : vector<2x32xf32>
    %161 = math.tanh %160 : vector<2x32xf32>
    %162 = arith.mulf %157, %161 : vector<2x32xf32>
    %163 = vector.extract_strided_slice %137 {offsets = [0, 0], sizes = [2, 32], strides = [1, 1]} : vector<2x128xf32> to vector<2x32xf32>
    %164 = arith.negf %163 : vector<2x32xf32>
    %165 = math.exp %164 : vector<2x32xf32>
    %cst_47 = arith.constant 1.000000e+00 : f32
    %166 = vector.broadcast %cst_47 : f32 to vector<2x32xf32>
    %167 = arith.addf %166, %165 : vector<2x32xf32>
    %168 = arith.divf %166, %167 : vector<2x32xf32>
    %169 = vector.extract_strided_slice %137 {offsets = [0, 32], sizes = [2, 32], strides = [1, 1]} : vector<2x128xf32> to vector<2x32xf32>
    %170 = arith.negf %169 : vector<2x32xf32>
    %171 = math.exp %170 : vector<2x32xf32>
    %cst_48 = arith.constant 1.000000e+00 : f32
    %172 = vector.broadcast %cst_48 : f32 to vector<2x32xf32>
    %173 = arith.addf %172, %171 : vector<2x32xf32>
    %174 = arith.divf %172, %173 : vector<2x32xf32>
    %175 = vector.extract_strided_slice %137 {offsets = [0, 64], sizes = [2, 32], strides = [1, 1]} : vector<2x128xf32> to vector<2x32xf32>
    %176 = math.tanh %175 : vector<2x32xf32>
    %177 = vector.extract_strided_slice %137 {offsets = [0, 96], sizes = [2, 32], strides = [1, 1]} : vector<2x128xf32> to vector<2x32xf32>
    %178 = arith.negf %177 : vector<2x32xf32>
    %179 = math.exp %178 : vector<2x32xf32>
    %cst_49 = arith.constant 1.000000e+00 : f32
    %180 = vector.broadcast %cst_49 : f32 to vector<2x32xf32>
    %181 = arith.addf %180, %179 : vector<2x32xf32>
    %182 = arith.divf %180, %181 : vector<2x32xf32>
    %183 = arith.mulf %174, %125 : vector<2x32xf32>
    %184 = arith.mulf %168, %176 : vector<2x32xf32>
    %185 = arith.addf %183, %184 : vector<2x32xf32>
    %186 = math.tanh %185 : vector<2x32xf32>
    %187 = arith.mulf %182, %186 : vector<2x32xf32>
    %c4 = arith.constant 4 : index
    %c0_50 = arith.constant 0 : index
    %188 = vector.load %arg14[%c4, %c0_50] : memref<16x32xf32, #tpu.memory_space<vmem>>, vector<2x32xf32>
    tpu.vector_store %arg14[%c4, %c0_50], %162 {strides = array<i32>} : memref<16x32xf32, #tpu.memory_space<vmem>>, vector<2x32xf32>,
    %c10 = arith.constant 10 : index
    %c0_51 = arith.constant 0 : index
    %189 = vector.load %arg15[%c10, %c0_51] : memref<16x32xf32, #tpu.memory_space<vmem>>, vector<2x32xf32>
    tpu.vector_store %arg15[%c10, %c0_51], %187 {strides = array<i32>} : memref<16x32xf32, #tpu.memory_space<vmem>>, vector<2x32xf32>,
    %190 = vector.extract_strided_slice %5 {offsets = [6, 0], sizes = [2, 128], strides = [1, 1]} : vector<16x256xf32> to vector<2x128xf32>
    %c0_52 = arith.constant 0 : index
    %c0_53 = arith.constant 0 : index
    %191 = vector.load %arg2[%c0_52, %c0_53] : memref<32x128xf32, #tpu.memory_space<vmem>>, vector<32x128xf32>
    %cst_54 = arith.constant dense<0.000000e+00> : vector<2x128xf32>
    %192 = tpu.matmul %162, %191, %cst_54 {dimension_numbers = #tpu.dot_dimension_numbers<[1], [0], [0], [1], [0, 0, 1, 1], [], []>} : vector<2x32xf32>, vector<32x128xf32>, vector<2x128xf32> -> vector<2x128xf32>
    %193 = arith.addf %190, %192 : vector<2x128xf32>
    %194 = vector.extract_strided_slice %5 {offsets = [8, 128], sizes = [2, 128], strides = [1, 1]} : vector<16x256xf32> to vector<2x128xf32>
    %c0_55 = arith.constant 0 : index
    %c0_56 = arith.constant 0 : index
    %195 = vector.load %arg3[%c0_55, %c0_56] : memref<32x128xf32, #tpu.memory_space<vmem>>, vector<32x128xf32>
    %cst_57 = arith.constant dense<0.000000e+00> : vector<2x128xf32>
    %196 = tpu.matmul %187, %195, %cst_57 {dimension_numbers = #tpu.dot_dimension_numbers<[1], [0], [0], [1], [0, 0, 1, 1], [], []>} : vector<2x32xf32>, vector<32x128xf32>, vector<2x128xf32> -> vector<2x128xf32>
    %197 = arith.addf %194, %196 : vector<2x128xf32>
    %198 = vector.extract_strided_slice %193 {offsets = [0, 0], sizes = [2, 32], strides = [1, 1]} : vector<2x128xf32> to vector<2x32xf32>
    %199 = arith.negf %198 : vector<2x32xf32>
    %200 = math.exp %199 : vector<2x32xf32>
    %cst_58 = arith.constant 1.000000e+00 : f32
    %201 = vector.broadcast %cst_58 : f32 to vector<2x32xf32>
    %202 = arith.addf %201, %200 : vector<2x32xf32>
    %203 = arith.divf %201, %202 : vector<2x32xf32>
    %204 = vector.extract_strided_slice %193 {offsets = [0, 32], sizes = [2, 32], strides = [1, 1]} : vector<2x128xf32> to vector<2x32xf32>
    %205 = arith.negf %204 : vector<2x32xf32>
    %206 = math.exp %205 : vector<2x32xf32>
    %cst_59 = arith.constant 1.000000e+00 : f32
    %207 = vector.broadcast %cst_59 : f32 to vector<2x32xf32>
    %208 = arith.addf %207, %206 : vector<2x32xf32>
    %209 = arith.divf %207, %208 : vector<2x32xf32>
    %210 = vector.extract_strided_slice %193 {offsets = [0, 64], sizes = [2, 32], strides = [1, 1]} : vector<2x128xf32> to vector<2x32xf32>
    %211 = math.tanh %210 : vector<2x32xf32>
    %212 = vector.extract_strided_slice %193 {offsets = [0, 96], sizes = [2, 32], strides = [1, 1]} : vector<2x128xf32> to vector<2x32xf32>
    %213 = arith.negf %212 : vector<2x32xf32>
    %214 = math.exp %213 : vector<2x32xf32>
    %cst_60 = arith.constant 1.000000e+00 : f32
    %215 = vector.broadcast %cst_60 : f32 to vector<2x32xf32>
    %216 = arith.addf %215, %214 : vector<2x32xf32>
    %217 = arith.divf %215, %216 : vector<2x32xf32>
    %218 = arith.mulf %209, %160 : vector<2x32xf32>
    %219 = arith.mulf %203, %211 : vector<2x32xf32>
    %220 = arith.addf %218, %219 : vector<2x32xf32>
    %221 = math.tanh %220 : vector<2x32xf32>
    %222 = arith.mulf %217, %221 : vector<2x32xf32>
    %223 = vector.extract_strided_slice %197 {offsets = [0, 0], sizes = [2, 32], strides = [1, 1]} : vector<2x128xf32> to vector<2x32xf32>
    %224 = arith.negf %223 : vector<2x32xf32>
    %225 = math.exp %224 : vector<2x32xf32>
    %cst_61 = arith.constant 1.000000e+00 : f32
    %226 = vector.broadcast %cst_61 : f32 to vector<2x32xf32>
    %227 = arith.addf %226, %225 : vector<2x32xf32>
    %228 = arith.divf %226, %227 : vector<2x32xf32>
    %229 = vector.extract_strided_slice %197 {offsets = [0, 32], sizes = [2, 32], strides = [1, 1]} : vector<2x128xf32> to vector<2x32xf32>
    %230 = arith.negf %229 : vector<2x32xf32>
    %231 = math.exp %230 : vector<2x32xf32>
    %cst_62 = arith.constant 1.000000e+00 : f32
    %232 = vector.broadcast %cst_62 : f32 to vector<2x32xf32>
    %233 = arith.addf %232, %231 : vector<2x32xf32>
    %234 = arith.divf %232, %233 : vector<2x32xf32>
    %235 = vector.extract_strided_slice %197 {offsets = [0, 64], sizes = [2, 32], strides = [1, 1]} : vector<2x128xf32> to vector<2x32xf32>
    %236 = math.tanh %235 : vector<2x32xf32>
    %237 = vector.extract_strided_slice %197 {offsets = [0, 96], sizes = [2, 32], strides = [1, 1]} : vector<2x128xf32> to vector<2x32xf32>
    %238 = arith.negf %237 : vector<2x32xf32>
    %239 = math.exp %238 : vector<2x32xf32>
    %cst_63 = arith.constant 1.000000e+00 : f32
    %240 = vector.broadcast %cst_63 : f32 to vector<2x32xf32>
    %241 = arith.addf %240, %239 : vector<2x32xf32>
    %242 = arith.divf %240, %241 : vector<2x32xf32>
    %243 = arith.mulf %234, %185 : vector<2x32xf32>
    %244 = arith.mulf %228, %236 : vector<2x32xf32>
    %245 = arith.addf %243, %244 : vector<2x32xf32>
    %246 = math.tanh %245 : vector<2x32xf32>
    %247 = arith.mulf %242, %246 : vector<2x32xf32>
    %c6 = arith.constant 6 : index
    %c0_64 = arith.constant 0 : index
    %248 = vector.load %arg14[%c6, %c0_64] : memref<16x32xf32, #tpu.memory_space<vmem>>, vector<2x32xf32>
    tpu.vector_store %arg14[%c6, %c0_64], %222 {strides = array<i32>} : memref<16x32xf32, #tpu.memory_space<vmem>>, vector<2x32xf32>,
    %c8 = arith.constant 8 : index
    %c0_65 = arith.constant 0 : index
    %249 = vector.load %arg15[%c8, %c0_65] : memref<16x32xf32, #tpu.memory_space<vmem>>, vector<2x32xf32>
    tpu.vector_store %arg15[%c8, %c0_65], %247 {strides = array<i32>} : memref<16x32xf32, #tpu.memory_space<vmem>>, vector<2x32xf32>,
    %250 = vector.extract_strided_slice %5 {offsets = [8, 0], sizes = [2, 128], strides = [1, 1]} : vector<16x256xf32> to vector<2x128xf32>
    %c0_66 = arith.constant 0 : index
    %c0_67 = arith.constant 0 : index
    %251 = vector.load %arg2[%c0_66, %c0_67] : memref<32x128xf32, #tpu.memory_space<vmem>>, vector<32x128xf32>
    %cst_68 = arith.constant dense<0.000000e+00> : vector<2x128xf32>
    %252 = tpu.matmul %222, %251, %cst_68 {dimension_numbers = #tpu.dot_dimension_numbers<[1], [0], [0], [1], [0, 0, 1, 1], [], []>} : vector<2x32xf32>, vector<32x128xf32>, vector<2x128xf32> -> vector<2x128xf32>
    %253 = arith.addf %250, %252 : vector<2x128xf32>
    %254 = vector.extract_strided_slice %5 {offsets = [6, 128], sizes = [2, 128], strides = [1, 1]} : vector<16x256xf32> to vector<2x128xf32>
    %c0_69 = arith.constant 0 : index
    %c0_70 = arith.constant 0 : index
    %255 = vector.load %arg3[%c0_69, %c0_70] : memref<32x128xf32, #tpu.memory_space<vmem>>, vector<32x128xf32>
    %cst_71 = arith.constant dense<0.000000e+00> : vector<2x128xf32>
    %256 = tpu.matmul %247, %255, %cst_71 {dimension_numbers = #tpu.dot_dimension_numbers<[1], [0], [0], [1], [0, 0, 1, 1], [], []>} : vector<2x32xf32>, vector<32x128xf32>, vector<2x128xf32> -> vector<2x128xf32>
    %257 = arith.addf %254, %256 : vector<2x128xf32>
    %258 = vector.extract_strided_slice %253 {offsets = [0, 0], sizes = [2, 32], strides = [1, 1]} : vector<2x128xf32> to vector<2x32xf32>
    %259 = arith.negf %258 : vector<2x32xf32>
    %260 = math.exp %259 : vector<2x32xf32>
    %cst_72 = arith.constant 1.000000e+00 : f32
    %261 = vector.broadcast %cst_72 : f32 to vector<2x32xf32>
    %262 = arith.addf %261, %260 : vector<2x32xf32>
    %263 = arith.divf %261, %262 : vector<2x32xf32>
    %264 = vector.extract_strided_slice %253 {offsets = [0, 32], sizes = [2, 32], strides = [1, 1]} : vector<2x128xf32> to vector<2x32xf32>
    %265 = arith.negf %264 : vector<2x32xf32>
    %266 = math.exp %265 : vector<2x32xf32>
    %cst_73 = arith.constant 1.000000e+00 : f32
    %267 = vector.broadcast %cst_73 : f32 to vector<2x32xf32>
    %268 = arith.addf %267, %266 : vector<2x32xf32>
    %269 = arith.divf %267, %268 : vector<2x32xf32>
    %270 = vector.extract_strided_slice %253 {offsets = [0, 64], sizes = [2, 32], strides = [1, 1]} : vector<2x128xf32> to vector<2x32xf32>
    %271 = math.tanh %270 : vector<2x32xf32>
    %272 = vector.extract_strided_slice %253 {offsets = [0, 96], sizes = [2, 32], strides = [1, 1]} : vector<2x128xf32> to vector<2x32xf32>
    %273 = arith.negf %272 : vector<2x32xf32>
    %274 = math.exp %273 : vector<2x32xf32>
    %cst_74 = arith.constant 1.000000e+00 : f32
    %275 = vector.broadcast %cst_74 : f32 to vector<2x32xf32>
    %276 = arith.addf %275, %274 : vector<2x32xf32>
    %277 = arith.divf %275, %276 : vector<2x32xf32>
    %278 = arith.mulf %269, %220 : vector<2x32xf32>
    %279 = arith.mulf %263, %271 : vector<2x32xf32>
    %280 = arith.addf %278, %279 : vector<2x32xf32>
    %281 = math.tanh %280 : vector<2x32xf32>
    %282 = arith.mulf %277, %281 : vector<2x32xf32>
    %283 = vector.extract_strided_slice %257 {offsets = [0, 0], sizes = [2, 32], strides = [1, 1]} : vector<2x128xf32> to vector<2x32xf32>
    %284 = arith.negf %283 : vector<2x32xf32>
    %285 = math.exp %284 : vector<2x32xf32>
    %cst_75 = arith.constant 1.000000e+00 : f32
    %286 = vector.broadcast %cst_75 : f32 to vector<2x32xf32>
    %287 = arith.addf %286, %285 : vector<2x32xf32>
    %288 = arith.divf %286, %287 : vector<2x32xf32>
    %289 = vector.extract_strided_slice %257 {offsets = [0, 32], sizes = [2, 32], strides = [1, 1]} : vector<2x128xf32> to vector<2x32xf32>
    %290 = arith.negf %289 : vector<2x32xf32>
    %291 = math.exp %290 : vector<2x32xf32>
    %cst_76 = arith.constant 1.000000e+00 : f32
    %292 = vector.broadcast %cst_76 : f32 to vector<2x32xf32>
    %293 = arith.addf %292, %291 : vector<2x32xf32>
    %294 = arith.divf %292, %293 : vector<2x32xf32>
    %295 = vector.extract_strided_slice %257 {offsets = [0, 64], sizes = [2, 32], strides = [1, 1]} : vector<2x128xf32> to vector<2x32xf32>
    %296 = math.tanh %295 : vector<2x32xf32>
    %297 = vector.extract_strided_slice %257 {offsets = [0, 96], sizes = [2, 32], strides = [1, 1]} : vector<2x128xf32> to vector<2x32xf32>
    %298 = arith.negf %297 : vector<2x32xf32>
    %299 = math.exp %298 : vector<2x32xf32>
    %cst_77 = arith.constant 1.000000e+00 : f32
    %300 = vector.broadcast %cst_77 : f32 to vector<2x32xf32>
    %301 = arith.addf %300, %299 : vector<2x32xf32>
    %302 = arith.divf %300, %301 : vector<2x32xf32>
    %303 = arith.mulf %294, %245 : vector<2x32xf32>
    %304 = arith.mulf %288, %296 : vector<2x32xf32>
    %305 = arith.addf %303, %304 : vector<2x32xf32>
    %306 = math.tanh %305 : vector<2x32xf32>
    %307 = arith.mulf %302, %306 : vector<2x32xf32>
    %c8_78 = arith.constant 8 : index
    %c0_79 = arith.constant 0 : index
    %308 = vector.load %arg14[%c8_78, %c0_79] : memref<16x32xf32, #tpu.memory_space<vmem>>, vector<2x32xf32>
    tpu.vector_store %arg14[%c8_78, %c0_79], %282 {strides = array<i32>} : memref<16x32xf32, #tpu.memory_space<vmem>>, vector<2x32xf32>,
    %c6_80 = arith.constant 6 : index
    %c0_81 = arith.constant 0 : index
    %309 = vector.load %arg15[%c6_80, %c0_81] : memref<16x32xf32, #tpu.memory_space<vmem>>, vector<2x32xf32>
    tpu.vector_store %arg15[%c6_80, %c0_81], %307 {strides = array<i32>} : memref<16x32xf32, #tpu.memory_space<vmem>>, vector<2x32xf32>,
    %310 = vector.extract_strided_slice %5 {offsets = [10, 0], sizes = [2, 128], strides = [1, 1]} : vector<16x256xf32> to vector<2x128xf32>
    %c0_82 = arith.constant 0 : index
    %c0_83 = arith.constant 0 : index
    %311 = vector.load %arg2[%c0_82, %c0_83] : memref<32x128xf32, #tpu.memory_space<vmem>>, vector<32x128xf32>
    %cst_84 = arith.constant dense<0.000000e+00> : vector<2x128xf32>
    %312 = tpu.matmul %282, %311, %cst_84 {dimension_numbers = #tpu.dot_dimension_numbers<[1], [0], [0], [1], [0, 0, 1, 1], [], []>} : vector<2x32xf32>, vector<32x128xf32>, vector<2x128xf32> -> vector<2x128xf32>
    %313 = arith.addf %310, %312 : vector<2x128xf32>
    %314 = vector.extract_strided_slice %5 {offsets = [4, 128], sizes = [2, 128], strides = [1, 1]} : vector<16x256xf32> to vector<2x128xf32>
    %c0_85 = arith.constant 0 : index
    %c0_86 = arith.constant 0 : index
    %315 = vector.load %arg3[%c0_85, %c0_86] : memref<32x128xf32, #tpu.memory_space<vmem>>, vector<32x128xf32>
    %cst_87 = arith.constant dense<0.000000e+00> : vector<2x128xf32>
    %316 = tpu.matmul %307, %315, %cst_87 {dimension_numbers = #tpu.dot_dimension_numbers<[1], [0], [0], [1], [0, 0, 1, 1], [], []>} : vector<2x32xf32>, vector<32x128xf32>, vector<2x128xf32> -> vector<2x128xf32>
    %317 = arith.addf %314, %316 : vector<2x128xf32>
    %318 = vector.extract_strided_slice %313 {offsets = [0, 0], sizes = [2, 32], strides = [1, 1]} : vector<2x128xf32> to vector<2x32xf32>
    %319 = arith.negf %318 : vector<2x32xf32>
    %320 = math.exp %319 : vector<2x32xf32>
    %cst_88 = arith.constant 1.000000e+00 : f32
    %321 = vector.broadcast %cst_88 : f32 to vector<2x32xf32>
    %322 = arith.addf %321, %320 : vector<2x32xf32>
    %323 = arith.divf %321, %322 : vector<2x32xf32>
    %324 = vector.extract_strided_slice %313 {offsets = [0, 32], sizes = [2, 32], strides = [1, 1]} : vector<2x128xf32> to vector<2x32xf32>
    %325 = arith.negf %324 : vector<2x32xf32>
    %326 = math.exp %325 : vector<2x32xf32>
    %cst_89 = arith.constant 1.000000e+00 : f32
    %327 = vector.broadcast %cst_89 : f32 to vector<2x32xf32>
    %328 = arith.addf %327, %326 : vector<2x32xf32>
    %329 = arith.divf %327, %328 : vector<2x32xf32>
    %330 = vector.extract_strided_slice %313 {offsets = [0, 64], sizes = [2, 32], strides = [1, 1]} : vector<2x128xf32> to vector<2x32xf32>
    %331 = math.tanh %330 : vector<2x32xf32>
    %332 = vector.extract_strided_slice %313 {offsets = [0, 96], sizes = [2, 32], strides = [1, 1]} : vector<2x128xf32> to vector<2x32xf32>
    %333 = arith.negf %332 : vector<2x32xf32>
    %334 = math.exp %333 : vector<2x32xf32>
    %cst_90 = arith.constant 1.000000e+00 : f32
    %335 = vector.broadcast %cst_90 : f32 to vector<2x32xf32>
    %336 = arith.addf %335, %334 : vector<2x32xf32>
    %337 = arith.divf %335, %336 : vector<2x32xf32>
    %338 = arith.mulf %329, %280 : vector<2x32xf32>
    %339 = arith.mulf %323, %331 : vector<2x32xf32>
    %340 = arith.addf %338, %339 : vector<2x32xf32>
    %341 = math.tanh %340 : vector<2x32xf32>
    %342 = arith.mulf %337, %341 : vector<2x32xf32>
    %343 = vector.extract_strided_slice %317 {offsets = [0, 0], sizes = [2, 32], strides = [1, 1]} : vector<2x128xf32> to vector<2x32xf32>
    %344 = arith.negf %343 : vector<2x32xf32>
    %345 = math.exp %344 : vector<2x32xf32>
    %cst_91 = arith.constant 1.000000e+00 : f32
    %346 = vector.broadcast %cst_91 : f32 to vector<2x32xf32>
    %347 = arith.addf %346, %345 : vector<2x32xf32>
    %348 = arith.divf %346, %347 : vector<2x32xf32>
    %349 = vector.extract_strided_slice %317 {offsets = [0, 32], sizes = [2, 32], strides = [1, 1]} : vector<2x128xf32> to vector<2x32xf32>
    %350 = arith.negf %349 : vector<2x32xf32>
    %351 = math.exp %350 : vector<2x32xf32>
    %cst_92 = arith.constant 1.000000e+00 : f32
    %352 = vector.broadcast %cst_92 : f32 to vector<2x32xf32>
    %353 = arith.addf %352, %351 : vector<2x32xf32>
    %354 = arith.divf %352, %353 : vector<2x32xf32>
    %355 = vector.extract_strided_slice %317 {offsets = [0, 64], sizes = [2, 32], strides = [1, 1]} : vector<2x128xf32> to vector<2x32xf32>
    %356 = math.tanh %355 : vector<2x32xf32>
    %357 = vector.extract_strided_slice %317 {offsets = [0, 96], sizes = [2, 32], strides = [1, 1]} : vector<2x128xf32> to vector<2x32xf32>
    %358 = arith.negf %357 : vector<2x32xf32>
    %359 = math.exp %358 : vector<2x32xf32>
    %cst_93 = arith.constant 1.000000e+00 : f32
    %360 = vector.broadcast %cst_93 : f32 to vector<2x32xf32>
    %361 = arith.addf %360, %359 : vector<2x32xf32>
    %362 = arith.divf %360, %361 : vector<2x32xf32>
    %363 = arith.mulf %354, %305 : vector<2x32xf32>
    %364 = arith.mulf %348, %356 : vector<2x32xf32>
    %365 = arith.addf %363, %364 : vector<2x32xf32>
    %366 = math.tanh %365 : vector<2x32xf32>
    %367 = arith.mulf %362, %366 : vector<2x32xf32>
    %c10_94 = arith.constant 10 : index
    %c0_95 = arith.constant 0 : index
    %368 = vector.load %arg14[%c10_94, %c0_95] : memref<16x32xf32, #tpu.memory_space<vmem>>, vector<2x32xf32>
    tpu.vector_store %arg14[%c10_94, %c0_95], %342 {strides = array<i32>} : memref<16x32xf32, #tpu.memory_space<vmem>>, vector<2x32xf32>,
    %c4_96 = arith.constant 4 : index
    %c0_97 = arith.constant 0 : index
    %369 = vector.load %arg15[%c4_96, %c0_97] : memref<16x32xf32, #tpu.memory_space<vmem>>, vector<2x32xf32>
    tpu.vector_store %arg15[%c4_96, %c0_97], %367 {strides = array<i32>} : memref<16x32xf32, #tpu.memory_space<vmem>>, vector<2x32xf32>,
    %370 = vector.extract_strided_slice %5 {offsets = [12, 0], sizes = [2, 128], strides = [1, 1]} : vector<16x256xf32> to vector<2x128xf32>
    %c0_98 = arith.constant 0 : index
    %c0_99 = arith.constant 0 : index
    %371 = vector.load %arg2[%c0_98, %c0_99] : memref<32x128xf32, #tpu.memory_space<vmem>>, vector<32x128xf32>
    %cst_100 = arith.constant dense<0.000000e+00> : vector<2x128xf32>
    %372 = tpu.matmul %342, %371, %cst_100 {dimension_numbers = #tpu.dot_dimension_numbers<[1], [0], [0], [1], [0, 0, 1, 1], [], []>} : vector<2x32xf32>, vector<32x128xf32>, vector<2x128xf32> -> vector<2x128xf32>
    %373 = arith.addf %370, %372 : vector<2x128xf32>
    %374 = vector.extract_strided_slice %5 {offsets = [2, 128], sizes = [2, 128], strides = [1, 1]} : vector<16x256xf32> to vector<2x128xf32>
    %c0_101 = arith.constant 0 : index
    %c0_102 = arith.constant 0 : index
    %375 = vector.load %arg3[%c0_101, %c0_102] : memref<32x128xf32, #tpu.memory_space<vmem>>, vector<32x128xf32>
    %cst_103 = arith.constant dense<0.000000e+00> : vector<2x128xf32>
    %376 = tpu.matmul %367, %375, %cst_103 {dimension_numbers = #tpu.dot_dimension_numbers<[1], [0], [0], [1], [0, 0, 1, 1], [], []>} : vector<2x32xf32>, vector<32x128xf32>, vector<2x128xf32> -> vector<2x128xf32>
    %377 = arith.addf %374, %376 : vector<2x128xf32>
    %378 = vector.extract_strided_slice %373 {offsets = [0, 0], sizes = [2, 32], strides = [1, 1]} : vector<2x128xf32> to vector<2x32xf32>
    %379 = arith.negf %378 : vector<2x32xf32>
    %380 = math.exp %379 : vector<2x32xf32>
    %cst_104 = arith.constant 1.000000e+00 : f32
    %381 = vector.broadcast %cst_104 : f32 to vector<2x32xf32>
    %382 = arith.addf %381, %380 : vector<2x32xf32>
    %383 = arith.divf %381, %382 : vector<2x32xf32>
    %384 = vector.extract_strided_slice %373 {offsets = [0, 32], sizes = [2, 32], strides = [1, 1]} : vector<2x128xf32> to vector<2x32xf32>
    %385 = arith.negf %384 : vector<2x32xf32>
    %386 = math.exp %385 : vector<2x32xf32>
    %cst_105 = arith.constant 1.000000e+00 : f32
    %387 = vector.broadcast %cst_105 : f32 to vector<2x32xf32>
    %388 = arith.addf %387, %386 : vector<2x32xf32>
    %389 = arith.divf %387, %388 : vector<2x32xf32>
    %390 = vector.extract_strided_slice %373 {offsets = [0, 64], sizes = [2, 32], strides = [1, 1]} : vector<2x128xf32> to vector<2x32xf32>
    %391 = math.tanh %390 : vector<2x32xf32>
    %392 = vector.extract_strided_slice %373 {offsets = [0, 96], sizes = [2, 32], strides = [1, 1]} : vector<2x128xf32> to vector<2x32xf32>
    %393 = arith.negf %392 : vector<2x32xf32>
    %394 = math.exp %393 : vector<2x32xf32>
    %cst_106 = arith.constant 1.000000e+00 : f32
    %395 = vector.broadcast %cst_106 : f32 to vector<2x32xf32>
    %396 = arith.addf %395, %394 : vector<2x32xf32>
    %397 = arith.divf %395, %396 : vector<2x32xf32>
    %398 = arith.mulf %389, %340 : vector<2x32xf32>
    %399 = arith.mulf %383, %391 : vector<2x32xf32>
    %400 = arith.addf %398, %399 : vector<2x32xf32>
    %401 = math.tanh %400 : vector<2x32xf32>
    %402 = arith.mulf %397, %401 : vector<2x32xf32>
    %403 = vector.extract_strided_slice %377 {offsets = [0, 0], sizes = [2, 32], strides = [1, 1]} : vector<2x128xf32> to vector<2x32xf32>
    %404 = arith.negf %403 : vector<2x32xf32>
    %405 = math.exp %404 : vector<2x32xf32>
    %cst_107 = arith.constant 1.000000e+00 : f32
    %406 = vector.broadcast %cst_107 : f32 to vector<2x32xf32>
    %407 = arith.addf %406, %405 : vector<2x32xf32>
    %408 = arith.divf %406, %407 : vector<2x32xf32>
    %409 = vector.extract_strided_slice %377 {offsets = [0, 32], sizes = [2, 32], strides = [1, 1]} : vector<2x128xf32> to vector<2x32xf32>
    %410 = arith.negf %409 : vector<2x32xf32>
    %411 = math.exp %410 : vector<2x32xf32>
    %cst_108 = arith.constant 1.000000e+00 : f32
    %412 = vector.broadcast %cst_108 : f32 to vector<2x32xf32>
    %413 = arith.addf %412, %411 : vector<2x32xf32>
    %414 = arith.divf %412, %413 : vector<2x32xf32>
    %415 = vector.extract_strided_slice %377 {offsets = [0, 64], sizes = [2, 32], strides = [1, 1]} : vector<2x128xf32> to vector<2x32xf32>
    %416 = math.tanh %415 : vector<2x32xf32>
    %417 = vector.extract_strided_slice %377 {offsets = [0, 96], sizes = [2, 32], strides = [1, 1]} : vector<2x128xf32> to vector<2x32xf32>
    %418 = arith.negf %417 : vector<2x32xf32>
    %419 = math.exp %418 : vector<2x32xf32>
    %cst_109 = arith.constant 1.000000e+00 : f32
    %420 = vector.broadcast %cst_109 : f32 to vector<2x32xf32>
    %421 = arith.addf %420, %419 : vector<2x32xf32>
    %422 = arith.divf %420, %421 : vector<2x32xf32>
    %423 = arith.mulf %414, %365 : vector<2x32xf32>
    %424 = arith.mulf %408, %416 : vector<2x32xf32>
    %425 = arith.addf %423, %424 : vector<2x32xf32>
    %426 = math.tanh %425 : vector<2x32xf32>
    %427 = arith.mulf %422, %426 : vector<2x32xf32>
    %c12_110 = arith.constant 12 : index
    %c0_111 = arith.constant 0 : index
    %428 = vector.load %arg14[%c12_110, %c0_111] : memref<16x32xf32, #tpu.memory_space<vmem>>, vector<2x32xf32>
    tpu.vector_store %arg14[%c12_110, %c0_111], %402 {strides = array<i32>} : memref<16x32xf32, #tpu.memory_space<vmem>>, vector<2x32xf32>,
    %c2_112 = arith.constant 2 : index
    %c0_113 = arith.constant 0 : index
    %429 = vector.load %arg15[%c2_112, %c0_113] : memref<16x32xf32, #tpu.memory_space<vmem>>, vector<2x32xf32>
    tpu.vector_store %arg15[%c2_112, %c0_113], %427 {strides = array<i32>} : memref<16x32xf32, #tpu.memory_space<vmem>>, vector<2x32xf32>,
    %430 = vector.extract_strided_slice %5 {offsets = [14, 0], sizes = [2, 128], strides = [1, 1]} : vector<16x256xf32> to vector<2x128xf32>
    %c0_114 = arith.constant 0 : index
    %c0_115 = arith.constant 0 : index
    %431 = vector.load %arg2[%c0_114, %c0_115] : memref<32x128xf32, #tpu.memory_space<vmem>>, vector<32x128xf32>
    %cst_116 = arith.constant dense<0.000000e+00> : vector<2x128xf32>
    %432 = tpu.matmul %402, %431, %cst_116 {dimension_numbers = #tpu.dot_dimension_numbers<[1], [0], [0], [1], [0, 0, 1, 1], [], []>} : vector<2x32xf32>, vector<32x128xf32>, vector<2x128xf32> -> vector<2x128xf32>
    %433 = arith.addf %430, %432 : vector<2x128xf32>
    %434 = vector.extract_strided_slice %5 {offsets = [0, 128], sizes = [2, 128], strides = [1, 1]} : vector<16x256xf32> to vector<2x128xf32>
    %c0_117 = arith.constant 0 : index
    %c0_118 = arith.constant 0 : index
    %435 = vector.load %arg3[%c0_117, %c0_118] : memref<32x128xf32, #tpu.memory_space<vmem>>, vector<32x128xf32>
    %cst_119 = arith.constant dense<0.000000e+00> : vector<2x128xf32>
    %436 = tpu.matmul %427, %435, %cst_119 {dimension_numbers = #tpu.dot_dimension_numbers<[1], [0], [0], [1], [0, 0, 1, 1], [], []>} : vector<2x32xf32>, vector<32x128xf32>, vector<2x128xf32> -> vector<2x128xf32>
    %437 = arith.addf %434, %436 : vector<2x128xf32>
    %438 = vector.extract_strided_slice %433 {offsets = [0, 0], sizes = [2, 32], strides = [1, 1]} : vector<2x128xf32> to vector<2x32xf32>
    %439 = arith.negf %438 : vector<2x32xf32>
    %440 = math.exp %439 : vector<2x32xf32>
    %cst_120 = arith.constant 1.000000e+00 : f32
    %441 = vector.broadcast %cst_120 : f32 to vector<2x32xf32>
    %442 = arith.addf %441, %440 : vector<2x32xf32>
    %443 = arith.divf %441, %442 : vector<2x32xf32>
    %444 = vector.extract_strided_slice %433 {offsets = [0, 32], sizes = [2, 32], strides = [1, 1]} : vector<2x128xf32> to vector<2x32xf32>
    %445 = arith.negf %444 : vector<2x32xf32>
    %446 = math.exp %445 : vector<2x32xf32>
    %cst_121 = arith.constant 1.000000e+00 : f32
    %447 = vector.broadcast %cst_121 : f32 to vector<2x32xf32>
    %448 = arith.addf %447, %446 : vector<2x32xf32>
    %449 = arith.divf %447, %448 : vector<2x32xf32>
    %450 = vector.extract_strided_slice %433 {offsets = [0, 64], sizes = [2, 32], strides = [1, 1]} : vector<2x128xf32> to vector<2x32xf32>
    %451 = math.tanh %450 : vector<2x32xf32>
    %452 = vector.extract_strided_slice %433 {offsets = [0, 96], sizes = [2, 32], strides = [1, 1]} : vector<2x128xf32> to vector<2x32xf32>
    %453 = arith.negf %452 : vector<2x32xf32>
    %454 = math.exp %453 : vector<2x32xf32>
    %cst_122 = arith.constant 1.000000e+00 : f32
    %455 = vector.broadcast %cst_122 : f32 to vector<2x32xf32>
    %456 = arith.addf %455, %454 : vector<2x32xf32>
    %457 = arith.divf %455, %456 : vector<2x32xf32>
    %458 = arith.mulf %449, %400 : vector<2x32xf32>
    %459 = arith.mulf %443, %451 : vector<2x32xf32>
    %460 = arith.addf %458, %459 : vector<2x32xf32>
    %461 = math.tanh %460 : vector<2x32xf32>
    %462 = arith.mulf %457, %461 : vector<2x32xf32>
    %463 = vector.extract_strided_slice %437 {offsets = [0, 0], sizes = [2, 32], strides = [1, 1]} : vector<2x128xf32> to vector<2x32xf32>
    %464 = arith.negf %463 : vector<2x32xf32>
    %465 = math.exp %464 : vector<2x32xf32>
    %cst_123 = arith.constant 1.000000e+00 : f32
    %466 = vector.broadcast %cst_123 : f32 to vector<2x32xf32>
    %467 = arith.addf %466, %465 : vector<2x32xf32>
    %468 = arith.divf %466, %467 : vector<2x32xf32>
    %469 = vector.extract_strided_slice %437 {offsets = [0, 32], sizes = [2, 32], strides = [1, 1]} : vector<2x128xf32> to vector<2x32xf32>
    %470 = arith.negf %469 : vector<2x32xf32>
    %471 = math.exp %470 : vector<2x32xf32>
    %cst_124 = arith.constant 1.000000e+00 : f32
    %472 = vector.broadcast %cst_124 : f32 to vector<2x32xf32>
    %473 = arith.addf %472, %471 : vector<2x32xf32>
    %474 = arith.divf %472, %473 : vector<2x32xf32>
    %475 = vector.extract_strided_slice %437 {offsets = [0, 64], sizes = [2, 32], strides = [1, 1]} : vector<2x128xf32> to vector<2x32xf32>
    %476 = math.tanh %475 : vector<2x32xf32>
    %477 = vector.extract_strided_slice %437 {offsets = [0, 96], sizes = [2, 32], strides = [1, 1]} : vector<2x128xf32> to vector<2x32xf32>
    %478 = arith.negf %477 : vector<2x32xf32>
    %479 = math.exp %478 : vector<2x32xf32>
    %cst_125 = arith.constant 1.000000e+00 : f32
    %480 = vector.broadcast %cst_125 : f32 to vector<2x32xf32>
    %481 = arith.addf %480, %479 : vector<2x32xf32>
    %482 = arith.divf %480, %481 : vector<2x32xf32>
    %483 = arith.mulf %474, %425 : vector<2x32xf32>
    %484 = arith.mulf %468, %476 : vector<2x32xf32>
    %485 = arith.addf %483, %484 : vector<2x32xf32>
    %486 = math.tanh %485 : vector<2x32xf32>
    %487 = arith.mulf %482, %486 : vector<2x32xf32>
    %c14_126 = arith.constant 14 : index
    %c0_127 = arith.constant 0 : index
    %488 = vector.load %arg14[%c14_126, %c0_127] : memref<16x32xf32, #tpu.memory_space<vmem>>, vector<2x32xf32>
    tpu.vector_store %arg14[%c14_126, %c0_127], %462 {strides = array<i32>} : memref<16x32xf32, #tpu.memory_space<vmem>>, vector<2x32xf32>,
    %c0_128 = arith.constant 0 : index
    %c0_129 = arith.constant 0 : index
    %489 = vector.load %arg15[%c0_128, %c0_129] : memref<16x32xf32, #tpu.memory_space<vmem>>, vector<2x32xf32>
    tpu.vector_store %arg15[%c0_128, %c0_129], %487 {strides = array<i32>} : memref<16x32xf32, #tpu.memory_space<vmem>>, vector<2x32xf32>,
    %c0_130 = arith.constant 0 : index
    %c0_131 = arith.constant 0 : index
    %490 = vector.load %arg14[%c0_130, %c0_131] : memref<16x32xf32, #tpu.memory_space<vmem>>, vector<16x32xf32>
    %c0_132 = arith.constant 0 : index
    %c0_133 = arith.constant 0 : index
    %491 = vector.load %arg5[%c0_132, %c0_133] : memref<64x256xf32, #tpu.memory_space<vmem>>, vector<32x256xf32>
    %cst_134 = arith.constant dense<0.000000e+00> : vector<16x256xf32>
    %492 = tpu.matmul %490, %491, %cst_134 {dimension_numbers = #tpu.dot_dimension_numbers<[1], [0], [0], [1], [0, 0, 1, 1], [], []>} : vector<16x32xf32>, vector<32x256xf32>, vector<16x256xf32> -> vector<16x256xf32>
    %c0_135 = arith.constant 0 : index
    %c0_136 = arith.constant 0 : index
    %493 = vector.load %arg15[%c0_135, %c0_136] : memref<16x32xf32, #tpu.memory_space<vmem>>, vector<16x32xf32>
    %c32 = arith.constant 32 : index
    %c0_137 = arith.constant 0 : index
    %494 = vector.load %arg5[%c32, %c0_137] : memref<64x256xf32, #tpu.memory_space<vmem>>, vector<32x256xf32>
    %cst_138 = arith.constant dense<0.000000e+00> : vector<16x256xf32>
    %495 = tpu.matmul %493, %494, %cst_138 {dimension_numbers = #tpu.dot_dimension_numbers<[1], [0], [0], [1], [0, 0, 1, 1], [], []>} : vector<16x32xf32>, vector<32x256xf32>, vector<16x256xf32> -> vector<16x256xf32>
    %496 = arith.addf %492, %495 : vector<16x256xf32>
    %c0_139 = arith.constant 0 : index
    %c0_140 = arith.constant 0 : index
    %497 = vector.load %arg8[%c0_139, %c0_140] : memref<1x256xf32, #tpu.memory_space<vmem>>, vector<1x256xf32>
    %498 = vector.broadcast %497 : vector<1x256xf32> to vector<16x256xf32>
    %499 = arith.addf %496, %498 : vector<16x256xf32>
    %cst_141 = arith.constant 0.000000e+00 : f32
    %500 = vector.broadcast %cst_141 : f32 to vector<2x32xf32>
    %cst_142 = arith.constant 0.000000e+00 : f32
    %501 = vector.broadcast %cst_142 : f32 to vector<2x32xf32>
    %cst_143 = arith.constant 0.000000e+00 : f32
    %502 = vector.broadcast %cst_143 : f32 to vector<2x32xf32>
    %cst_144 = arith.constant 0.000000e+00 : f32
    %503 = vector.broadcast %cst_144 : f32 to vector<2x32xf32>
    %504 = vector.extract_strided_slice %499 {offsets = [0, 0], sizes = [2, 128], strides = [1, 1]} : vector<16x256xf32> to vector<2x128xf32>
    %c0_145 = arith.constant 0 : index
    %c0_146 = arith.constant 0 : index
    %505 = vector.load %arg6[%c0_145, %c0_146] : memref<32x128xf32, #tpu.memory_space<vmem>>, vector<32x128xf32>
    %cst_147 = arith.constant dense<0.000000e+00> : vector<2x128xf32>
    %506 = tpu.matmul %500, %505, %cst_147 {dimension_numbers = #tpu.dot_dimension_numbers<[1], [0], [0], [1], [0, 0, 1, 1], [], []>} : vector<2x32xf32>, vector<32x128xf32>, vector<2x128xf32> -> vector<2x128xf32>
    %507 = arith.addf %504, %506 : vector<2x128xf32>
    %508 = vector.extract_strided_slice %499 {offsets = [14, 128], sizes = [2, 128], strides = [1, 1]} : vector<16x256xf32> to vector<2x128xf32>
    %c0_148 = arith.constant 0 : index
    %c0_149 = arith.constant 0 : index
    %509 = vector.load %arg7[%c0_148, %c0_149] : memref<32x128xf32, #tpu.memory_space<vmem>>, vector<32x128xf32>
    %cst_150 = arith.constant dense<0.000000e+00> : vector<2x128xf32>
    %510 = tpu.matmul %502, %509, %cst_150 {dimension_numbers = #tpu.dot_dimension_numbers<[1], [0], [0], [1], [0, 0, 1, 1], [], []>} : vector<2x32xf32>, vector<32x128xf32>, vector<2x128xf32> -> vector<2x128xf32>
    %511 = arith.addf %508, %510 : vector<2x128xf32>
    %512 = vector.extract_strided_slice %507 {offsets = [0, 0], sizes = [2, 32], strides = [1, 1]} : vector<2x128xf32> to vector<2x32xf32>
    %513 = arith.negf %512 : vector<2x32xf32>
    %514 = math.exp %513 : vector<2x32xf32>
    %cst_151 = arith.constant 1.000000e+00 : f32
    %515 = vector.broadcast %cst_151 : f32 to vector<2x32xf32>
    %516 = arith.addf %515, %514 : vector<2x32xf32>
    %517 = arith.divf %515, %516 : vector<2x32xf32>
    %518 = vector.extract_strided_slice %507 {offsets = [0, 32], sizes = [2, 32], strides = [1, 1]} : vector<2x128xf32> to vector<2x32xf32>
    %519 = arith.negf %518 : vector<2x32xf32>
    %520 = math.exp %519 : vector<2x32xf32>
    %cst_152 = arith.constant 1.000000e+00 : f32
    %521 = vector.broadcast %cst_152 : f32 to vector<2x32xf32>
    %522 = arith.addf %521, %520 : vector<2x32xf32>
    %523 = arith.divf %521, %522 : vector<2x32xf32>
    %524 = vector.extract_strided_slice %507 {offsets = [0, 64], sizes = [2, 32], strides = [1, 1]} : vector<2x128xf32> to vector<2x32xf32>
    %525 = math.tanh %524 : vector<2x32xf32>
    %526 = vector.extract_strided_slice %507 {offsets = [0, 96], sizes = [2, 32], strides = [1, 1]} : vector<2x128xf32> to vector<2x32xf32>
    %527 = arith.negf %526 : vector<2x32xf32>
    %528 = math.exp %527 : vector<2x32xf32>
    %cst_153 = arith.constant 1.000000e+00 : f32
    %529 = vector.broadcast %cst_153 : f32 to vector<2x32xf32>
    %530 = arith.addf %529, %528 : vector<2x32xf32>
    %531 = arith.divf %529, %530 : vector<2x32xf32>
    %532 = arith.mulf %523, %501 : vector<2x32xf32>
    %533 = arith.mulf %517, %525 : vector<2x32xf32>
    %534 = arith.addf %532, %533 : vector<2x32xf32>
    %535 = math.tanh %534 : vector<2x32xf32>
    %536 = arith.mulf %531, %535 : vector<2x32xf32>
    %537 = vector.extract_strided_slice %511 {offsets = [0, 0], sizes = [2, 32], strides = [1, 1]} : vector<2x128xf32> to vector<2x32xf32>
    %538 = arith.negf %537 : vector<2x32xf32>
    %539 = math.exp %538 : vector<2x32xf32>
    %cst_154 = arith.constant 1.000000e+00 : f32
    %540 = vector.broadcast %cst_154 : f32 to vector<2x32xf32>
    %541 = arith.addf %540, %539 : vector<2x32xf32>
    %542 = arith.divf %540, %541 : vector<2x32xf32>
    %543 = vector.extract_strided_slice %511 {offsets = [0, 32], sizes = [2, 32], strides = [1, 1]} : vector<2x128xf32> to vector<2x32xf32>
    %544 = arith.negf %543 : vector<2x32xf32>
    %545 = math.exp %544 : vector<2x32xf32>
    %cst_155 = arith.constant 1.000000e+00 : f32
    %546 = vector.broadcast %cst_155 : f32 to vector<2x32xf32>
    %547 = arith.addf %546, %545 : vector<2x32xf32>
    %548 = arith.divf %546, %547 : vector<2x32xf32>
    %549 = vector.extract_strided_slice %511 {offsets = [0, 64], sizes = [2, 32], strides = [1, 1]} : vector<2x128xf32> to vector<2x32xf32>
    %550 = math.tanh %549 : vector<2x32xf32>
    %551 = vector.extract_strided_slice %511 {offsets = [0, 96], sizes = [2, 32], strides = [1, 1]} : vector<2x128xf32> to vector<2x32xf32>
    %552 = arith.negf %551 : vector<2x32xf32>
    %553 = math.exp %552 : vector<2x32xf32>
    %cst_156 = arith.constant 1.000000e+00 : f32
    %554 = vector.broadcast %cst_156 : f32 to vector<2x32xf32>
    %555 = arith.addf %554, %553 : vector<2x32xf32>
    %556 = arith.divf %554, %555 : vector<2x32xf32>
    %557 = arith.mulf %548, %503 : vector<2x32xf32>
    %558 = arith.mulf %542, %550 : vector<2x32xf32>
    %559 = arith.addf %557, %558 : vector<2x32xf32>
    %560 = math.tanh %559 : vector<2x32xf32>
    %561 = arith.mulf %556, %560 : vector<2x32xf32>
    %562 = vector.extract_strided_slice %499 {offsets = [2, 0], sizes = [2, 128], strides = [1, 1]} : vector<16x256xf32> to vector<2x128xf32>
    %c0_157 = arith.constant 0 : index
    %c0_158 = arith.constant 0 : index
    %563 = vector.load %arg6[%c0_157, %c0_158] : memref<32x128xf32, #tpu.memory_space<vmem>>, vector<32x128xf32>
    %cst_159 = arith.constant dense<0.000000e+00> : vector<2x128xf32>
    %564 = tpu.matmul %536, %563, %cst_159 {dimension_numbers = #tpu.dot_dimension_numbers<[1], [0], [0], [1], [0, 0, 1, 1], [], []>} : vector<2x32xf32>, vector<32x128xf32>, vector<2x128xf32> -> vector<2x128xf32>
    %565 = arith.addf %562, %564 : vector<2x128xf32>
    %566 = vector.extract_strided_slice %499 {offsets = [12, 128], sizes = [2, 128], strides = [1, 1]} : vector<16x256xf32> to vector<2x128xf32>
    %c0_160 = arith.constant 0 : index
    %c0_161 = arith.constant 0 : index
    %567 = vector.load %arg7[%c0_160, %c0_161] : memref<32x128xf32, #tpu.memory_space<vmem>>, vector<32x128xf32>
    %cst_162 = arith.constant dense<0.000000e+00> : vector<2x128xf32>
    %568 = tpu.matmul %561, %567, %cst_162 {dimension_numbers = #tpu.dot_dimension_numbers<[1], [0], [0], [1], [0, 0, 1, 1], [], []>} : vector<2x32xf32>, vector<32x128xf32>, vector<2x128xf32> -> vector<2x128xf32>
    %569 = arith.addf %566, %568 : vector<2x128xf32>
    %570 = vector.extract_strided_slice %565 {offsets = [0, 0], sizes = [2, 32], strides = [1, 1]} : vector<2x128xf32> to vector<2x32xf32>
    %571 = arith.negf %570 : vector<2x32xf32>
    %572 = math.exp %571 : vector<2x32xf32>
    %cst_163 = arith.constant 1.000000e+00 : f32
    %573 = vector.broadcast %cst_163 : f32 to vector<2x32xf32>
    %574 = arith.addf %573, %572 : vector<2x32xf32>
    %575 = arith.divf %573, %574 : vector<2x32xf32>
    %576 = vector.extract_strided_slice %565 {offsets = [0, 32], sizes = [2, 32], strides = [1, 1]} : vector<2x128xf32> to vector<2x32xf32>
    %577 = arith.negf %576 : vector<2x32xf32>
    %578 = math.exp %577 : vector<2x32xf32>
    %cst_164 = arith.constant 1.000000e+00 : f32
    %579 = vector.broadcast %cst_164 : f32 to vector<2x32xf32>
    %580 = arith.addf %579, %578 : vector<2x32xf32>
    %581 = arith.divf %579, %580 : vector<2x32xf32>
    %582 = vector.extract_strided_slice %565 {offsets = [0, 64], sizes = [2, 32], strides = [1, 1]} : vector<2x128xf32> to vector<2x32xf32>
    %583 = math.tanh %582 : vector<2x32xf32>
    %584 = vector.extract_strided_slice %565 {offsets = [0, 96], sizes = [2, 32], strides = [1, 1]} : vector<2x128xf32> to vector<2x32xf32>
    %585 = arith.negf %584 : vector<2x32xf32>
    %586 = math.exp %585 : vector<2x32xf32>
    %cst_165 = arith.constant 1.000000e+00 : f32
    %587 = vector.broadcast %cst_165 : f32 to vector<2x32xf32>
    %588 = arith.addf %587, %586 : vector<2x32xf32>
    %589 = arith.divf %587, %588 : vector<2x32xf32>
    %590 = arith.mulf %581, %534 : vector<2x32xf32>
    %591 = arith.mulf %575, %583 : vector<2x32xf32>
    %592 = arith.addf %590, %591 : vector<2x32xf32>
    %593 = math.tanh %592 : vector<2x32xf32>
    %594 = arith.mulf %589, %593 : vector<2x32xf32>
    %595 = vector.extract_strided_slice %569 {offsets = [0, 0], sizes = [2, 32], strides = [1, 1]} : vector<2x128xf32> to vector<2x32xf32>
    %596 = arith.negf %595 : vector<2x32xf32>
    %597 = math.exp %596 : vector<2x32xf32>
    %cst_166 = arith.constant 1.000000e+00 : f32
    %598 = vector.broadcast %cst_166 : f32 to vector<2x32xf32>
    %599 = arith.addf %598, %597 : vector<2x32xf32>
    %600 = arith.divf %598, %599 : vector<2x32xf32>
    %601 = vector.extract_strided_slice %569 {offsets = [0, 32], sizes = [2, 32], strides = [1, 1]} : vector<2x128xf32> to vector<2x32xf32>
    %602 = arith.negf %601 : vector<2x32xf32>
    %603 = math.exp %602 : vector<2x32xf32>
    %cst_167 = arith.constant 1.000000e+00 : f32
    %604 = vector.broadcast %cst_167 : f32 to vector<2x32xf32>
    %605 = arith.addf %604, %603 : vector<2x32xf32>
    %606 = arith.divf %604, %605 : vector<2x32xf32>
    %607 = vector.extract_strided_slice %569 {offsets = [0, 64], sizes = [2, 32], strides = [1, 1]} : vector<2x128xf32> to vector<2x32xf32>
    %608 = math.tanh %607 : vector<2x32xf32>
    %609 = vector.extract_strided_slice %569 {offsets = [0, 96], sizes = [2, 32], strides = [1, 1]} : vector<2x128xf32> to vector<2x32xf32>
    %610 = arith.negf %609 : vector<2x32xf32>
    %611 = math.exp %610 : vector<2x32xf32>
    %cst_168 = arith.constant 1.000000e+00 : f32
    %612 = vector.broadcast %cst_168 : f32 to vector<2x32xf32>
    %613 = arith.addf %612, %611 : vector<2x32xf32>
    %614 = arith.divf %612, %613 : vector<2x32xf32>
    %615 = arith.mulf %606, %559 : vector<2x32xf32>
    %616 = arith.mulf %600, %608 : vector<2x32xf32>
    %617 = arith.addf %615, %616 : vector<2x32xf32>
    %618 = math.tanh %617 : vector<2x32xf32>
    %619 = arith.mulf %614, %618 : vector<2x32xf32>
    %620 = vector.extract_strided_slice %499 {offsets = [4, 0], sizes = [2, 128], strides = [1, 1]} : vector<16x256xf32> to vector<2x128xf32>
    %c0_169 = arith.constant 0 : index
    %c0_170 = arith.constant 0 : index
    %621 = vector.load %arg6[%c0_169, %c0_170] : memref<32x128xf32, #tpu.memory_space<vmem>>, vector<32x128xf32>
    %cst_171 = arith.constant dense<0.000000e+00> : vector<2x128xf32>
    %622 = tpu.matmul %594, %621, %cst_171 {dimension_numbers = #tpu.dot_dimension_numbers<[1], [0], [0], [1], [0, 0, 1, 1], [], []>} : vector<2x32xf32>, vector<32x128xf32>, vector<2x128xf32> -> vector<2x128xf32>
    %623 = arith.addf %620, %622 : vector<2x128xf32>
    %624 = vector.extract_strided_slice %499 {offsets = [10, 128], sizes = [2, 128], strides = [1, 1]} : vector<16x256xf32> to vector<2x128xf32>
    %c0_172 = arith.constant 0 : index
    %c0_173 = arith.constant 0 : index
    %625 = vector.load %arg7[%c0_172, %c0_173] : memref<32x128xf32, #tpu.memory_space<vmem>>, vector<32x128xf32>
    %cst_174 = arith.constant dense<0.000000e+00> : vector<2x128xf32>
    %626 = tpu.matmul %619, %625, %cst_174 {dimension_numbers = #tpu.dot_dimension_numbers<[1], [0], [0], [1], [0, 0, 1, 1], [], []>} : vector<2x32xf32>, vector<32x128xf32>, vector<2x128xf32> -> vector<2x128xf32>
    %627 = arith.addf %624, %626 : vector<2x128xf32>
    %628 = vector.extract_strided_slice %623 {offsets = [0, 0], sizes = [2, 32], strides = [1, 1]} : vector<2x128xf32> to vector<2x32xf32>
    %629 = arith.negf %628 : vector<2x32xf32>
    %630 = math.exp %629 : vector<2x32xf32>
    %cst_175 = arith.constant 1.000000e+00 : f32
    %631 = vector.broadcast %cst_175 : f32 to vector<2x32xf32>
    %632 = arith.addf %631, %630 : vector<2x32xf32>
    %633 = arith.divf %631, %632 : vector<2x32xf32>
    %634 = vector.extract_strided_slice %623 {offsets = [0, 32], sizes = [2, 32], strides = [1, 1]} : vector<2x128xf32> to vector<2x32xf32>
    %635 = arith.negf %634 : vector<2x32xf32>
    %636 = math.exp %635 : vector<2x32xf32>
    %cst_176 = arith.constant 1.000000e+00 : f32
    %637 = vector.broadcast %cst_176 : f32 to vector<2x32xf32>
    %638 = arith.addf %637, %636 : vector<2x32xf32>
    %639 = arith.divf %637, %638 : vector<2x32xf32>
    %640 = vector.extract_strided_slice %623 {offsets = [0, 64], sizes = [2, 32], strides = [1, 1]} : vector<2x128xf32> to vector<2x32xf32>
    %641 = math.tanh %640 : vector<2x32xf32>
    %642 = vector.extract_strided_slice %623 {offsets = [0, 96], sizes = [2, 32], strides = [1, 1]} : vector<2x128xf32> to vector<2x32xf32>
    %643 = arith.negf %642 : vector<2x32xf32>
    %644 = math.exp %643 : vector<2x32xf32>
    %cst_177 = arith.constant 1.000000e+00 : f32
    %645 = vector.broadcast %cst_177 : f32 to vector<2x32xf32>
    %646 = arith.addf %645, %644 : vector<2x32xf32>
    %647 = arith.divf %645, %646 : vector<2x32xf32>
    %648 = arith.mulf %639, %592 : vector<2x32xf32>
    %649 = arith.mulf %633, %641 : vector<2x32xf32>
    %650 = arith.addf %648, %649 : vector<2x32xf32>
    %651 = math.tanh %650 : vector<2x32xf32>
    %652 = arith.mulf %647, %651 : vector<2x32xf32>
    %653 = vector.extract_strided_slice %627 {offsets = [0, 0], sizes = [2, 32], strides = [1, 1]} : vector<2x128xf32> to vector<2x32xf32>
    %654 = arith.negf %653 : vector<2x32xf32>
    %655 = math.exp %654 : vector<2x32xf32>
    %cst_178 = arith.constant 1.000000e+00 : f32
    %656 = vector.broadcast %cst_178 : f32 to vector<2x32xf32>
    %657 = arith.addf %656, %655 : vector<2x32xf32>
    %658 = arith.divf %656, %657 : vector<2x32xf32>
    %659 = vector.extract_strided_slice %627 {offsets = [0, 32], sizes = [2, 32], strides = [1, 1]} : vector<2x128xf32> to vector<2x32xf32>
    %660 = arith.negf %659 : vector<2x32xf32>
    %661 = math.exp %660 : vector<2x32xf32>
    %cst_179 = arith.constant 1.000000e+00 : f32
    %662 = vector.broadcast %cst_179 : f32 to vector<2x32xf32>
    %663 = arith.addf %662, %661 : vector<2x32xf32>
    %664 = arith.divf %662, %663 : vector<2x32xf32>
    %665 = vector.extract_strided_slice %627 {offsets = [0, 64], sizes = [2, 32], strides = [1, 1]} : vector<2x128xf32> to vector<2x32xf32>
    %666 = math.tanh %665 : vector<2x32xf32>
    %667 = vector.extract_strided_slice %627 {offsets = [0, 96], sizes = [2, 32], strides = [1, 1]} : vector<2x128xf32> to vector<2x32xf32>
    %668 = arith.negf %667 : vector<2x32xf32>
    %669 = math.exp %668 : vector<2x32xf32>
    %cst_180 = arith.constant 1.000000e+00 : f32
    %670 = vector.broadcast %cst_180 : f32 to vector<2x32xf32>
    %671 = arith.addf %670, %669 : vector<2x32xf32>
    %672 = arith.divf %670, %671 : vector<2x32xf32>
    %673 = arith.mulf %664, %617 : vector<2x32xf32>
    %674 = arith.mulf %658, %666 : vector<2x32xf32>
    %675 = arith.addf %673, %674 : vector<2x32xf32>
    %676 = math.tanh %675 : vector<2x32xf32>
    %677 = arith.mulf %672, %676 : vector<2x32xf32>
    %678 = vector.extract_strided_slice %499 {offsets = [6, 0], sizes = [2, 128], strides = [1, 1]} : vector<16x256xf32> to vector<2x128xf32>
    %c0_181 = arith.constant 0 : index
    %c0_182 = arith.constant 0 : index
    %679 = vector.load %arg6[%c0_181, %c0_182] : memref<32x128xf32, #tpu.memory_space<vmem>>, vector<32x128xf32>
    %cst_183 = arith.constant dense<0.000000e+00> : vector<2x128xf32>
    %680 = tpu.matmul %652, %679, %cst_183 {dimension_numbers = #tpu.dot_dimension_numbers<[1], [0], [0], [1], [0, 0, 1, 1], [], []>} : vector<2x32xf32>, vector<32x128xf32>, vector<2x128xf32> -> vector<2x128xf32>
    %681 = arith.addf %678, %680 : vector<2x128xf32>
    %682 = vector.extract_strided_slice %499 {offsets = [8, 128], sizes = [2, 128], strides = [1, 1]} : vector<16x256xf32> to vector<2x128xf32>
    %c0_184 = arith.constant 0 : index
    %c0_185 = arith.constant 0 : index
    %683 = vector.load %arg7[%c0_184, %c0_185] : memref<32x128xf32, #tpu.memory_space<vmem>>, vector<32x128xf32>
    %cst_186 = arith.constant dense<0.000000e+00> : vector<2x128xf32>
    %684 = tpu.matmul %677, %683, %cst_186 {dimension_numbers = #tpu.dot_dimension_numbers<[1], [0], [0], [1], [0, 0, 1, 1], [], []>} : vector<2x32xf32>, vector<32x128xf32>, vector<2x128xf32> -> vector<2x128xf32>
    %685 = arith.addf %682, %684 : vector<2x128xf32>
    %686 = vector.extract_strided_slice %681 {offsets = [0, 0], sizes = [2, 32], strides = [1, 1]} : vector<2x128xf32> to vector<2x32xf32>
    %687 = arith.negf %686 : vector<2x32xf32>
    %688 = math.exp %687 : vector<2x32xf32>
    %cst_187 = arith.constant 1.000000e+00 : f32
    %689 = vector.broadcast %cst_187 : f32 to vector<2x32xf32>
    %690 = arith.addf %689, %688 : vector<2x32xf32>
    %691 = arith.divf %689, %690 : vector<2x32xf32>
    %692 = vector.extract_strided_slice %681 {offsets = [0, 32], sizes = [2, 32], strides = [1, 1]} : vector<2x128xf32> to vector<2x32xf32>
    %693 = arith.negf %692 : vector<2x32xf32>
    %694 = math.exp %693 : vector<2x32xf32>
    %cst_188 = arith.constant 1.000000e+00 : f32
    %695 = vector.broadcast %cst_188 : f32 to vector<2x32xf32>
    %696 = arith.addf %695, %694 : vector<2x32xf32>
    %697 = arith.divf %695, %696 : vector<2x32xf32>
    %698 = vector.extract_strided_slice %681 {offsets = [0, 64], sizes = [2, 32], strides = [1, 1]} : vector<2x128xf32> to vector<2x32xf32>
    %699 = math.tanh %698 : vector<2x32xf32>
    %700 = vector.extract_strided_slice %681 {offsets = [0, 96], sizes = [2, 32], strides = [1, 1]} : vector<2x128xf32> to vector<2x32xf32>
    %701 = arith.negf %700 : vector<2x32xf32>
    %702 = math.exp %701 : vector<2x32xf32>
    %cst_189 = arith.constant 1.000000e+00 : f32
    %703 = vector.broadcast %cst_189 : f32 to vector<2x32xf32>
    %704 = arith.addf %703, %702 : vector<2x32xf32>
    %705 = arith.divf %703, %704 : vector<2x32xf32>
    %706 = arith.mulf %697, %650 : vector<2x32xf32>
    %707 = arith.mulf %691, %699 : vector<2x32xf32>
    %708 = arith.addf %706, %707 : vector<2x32xf32>
    %709 = math.tanh %708 : vector<2x32xf32>
    %710 = arith.mulf %705, %709 : vector<2x32xf32>
    %711 = vector.extract_strided_slice %685 {offsets = [0, 0], sizes = [2, 32], strides = [1, 1]} : vector<2x128xf32> to vector<2x32xf32>
    %712 = arith.negf %711 : vector<2x32xf32>
    %713 = math.exp %712 : vector<2x32xf32>
    %cst_190 = arith.constant 1.000000e+00 : f32
    %714 = vector.broadcast %cst_190 : f32 to vector<2x32xf32>
    %715 = arith.addf %714, %713 : vector<2x32xf32>
    %716 = arith.divf %714, %715 : vector<2x32xf32>
    %717 = vector.extract_strided_slice %685 {offsets = [0, 32], sizes = [2, 32], strides = [1, 1]} : vector<2x128xf32> to vector<2x32xf32>
    %718 = arith.negf %717 : vector<2x32xf32>
    %719 = math.exp %718 : vector<2x32xf32>
    %cst_191 = arith.constant 1.000000e+00 : f32
    %720 = vector.broadcast %cst_191 : f32 to vector<2x32xf32>
    %721 = arith.addf %720, %719 : vector<2x32xf32>
    %722 = arith.divf %720, %721 : vector<2x32xf32>
    %723 = vector.extract_strided_slice %685 {offsets = [0, 64], sizes = [2, 32], strides = [1, 1]} : vector<2x128xf32> to vector<2x32xf32>
    %724 = math.tanh %723 : vector<2x32xf32>
    %725 = vector.extract_strided_slice %685 {offsets = [0, 96], sizes = [2, 32], strides = [1, 1]} : vector<2x128xf32> to vector<2x32xf32>
    %726 = arith.negf %725 : vector<2x32xf32>
    %727 = math.exp %726 : vector<2x32xf32>
    %cst_192 = arith.constant 1.000000e+00 : f32
    %728 = vector.broadcast %cst_192 : f32 to vector<2x32xf32>
    %729 = arith.addf %728, %727 : vector<2x32xf32>
    %730 = arith.divf %728, %729 : vector<2x32xf32>
    %731 = arith.mulf %722, %675 : vector<2x32xf32>
    %732 = arith.mulf %716, %724 : vector<2x32xf32>
    %733 = arith.addf %731, %732 : vector<2x32xf32>
    %734 = math.tanh %733 : vector<2x32xf32>
    %735 = arith.mulf %730, %734 : vector<2x32xf32>
    %736 = vector.extract_strided_slice %499 {offsets = [8, 0], sizes = [2, 128], strides = [1, 1]} : vector<16x256xf32> to vector<2x128xf32>
    %c0_193 = arith.constant 0 : index
    %c0_194 = arith.constant 0 : index
    %737 = vector.load %arg6[%c0_193, %c0_194] : memref<32x128xf32, #tpu.memory_space<vmem>>, vector<32x128xf32>
    %cst_195 = arith.constant dense<0.000000e+00> : vector<2x128xf32>
    %738 = tpu.matmul %710, %737, %cst_195 {dimension_numbers = #tpu.dot_dimension_numbers<[1], [0], [0], [1], [0, 0, 1, 1], [], []>} : vector<2x32xf32>, vector<32x128xf32>, vector<2x128xf32> -> vector<2x128xf32>
    %739 = arith.addf %736, %738 : vector<2x128xf32>
    %740 = vector.extract_strided_slice %499 {offsets = [6, 128], sizes = [2, 128], strides = [1, 1]} : vector<16x256xf32> to vector<2x128xf32>
    %c0_196 = arith.constant 0 : index
    %c0_197 = arith.constant 0 : index
    %741 = vector.load %arg7[%c0_196, %c0_197] : memref<32x128xf32, #tpu.memory_space<vmem>>, vector<32x128xf32>
    %cst_198 = arith.constant dense<0.000000e+00> : vector<2x128xf32>
    %742 = tpu.matmul %735, %741, %cst_198 {dimension_numbers = #tpu.dot_dimension_numbers<[1], [0], [0], [1], [0, 0, 1, 1], [], []>} : vector<2x32xf32>, vector<32x128xf32>, vector<2x128xf32> -> vector<2x128xf32>
    %743 = arith.addf %740, %742 : vector<2x128xf32>
    %744 = vector.extract_strided_slice %739 {offsets = [0, 0], sizes = [2, 32], strides = [1, 1]} : vector<2x128xf32> to vector<2x32xf32>
    %745 = arith.negf %744 : vector<2x32xf32>
    %746 = math.exp %745 : vector<2x32xf32>
    %cst_199 = arith.constant 1.000000e+00 : f32
    %747 = vector.broadcast %cst_199 : f32 to vector<2x32xf32>
    %748 = arith.addf %747, %746 : vector<2x32xf32>
    %749 = arith.divf %747, %748 : vector<2x32xf32>
    %750 = vector.extract_strided_slice %739 {offsets = [0, 32], sizes = [2, 32], strides = [1, 1]} : vector<2x128xf32> to vector<2x32xf32>
    %751 = arith.negf %750 : vector<2x32xf32>
    %752 = math.exp %751 : vector<2x32xf32>
    %cst_200 = arith.constant 1.000000e+00 : f32
    %753 = vector.broadcast %cst_200 : f32 to vector<2x32xf32>
    %754 = arith.addf %753, %752 : vector<2x32xf32>
    %755 = arith.divf %753, %754 : vector<2x32xf32>
    %756 = vector.extract_strided_slice %739 {offsets = [0, 64], sizes = [2, 32], strides = [1, 1]} : vector<2x128xf32> to vector<2x32xf32>
    %757 = math.tanh %756 : vector<2x32xf32>
    %758 = vector.extract_strided_slice %739 {offsets = [0, 96], sizes = [2, 32], strides = [1, 1]} : vector<2x128xf32> to vector<2x32xf32>
    %759 = arith.negf %758 : vector<2x32xf32>
    %760 = math.exp %759 : vector<2x32xf32>
    %cst_201 = arith.constant 1.000000e+00 : f32
    %761 = vector.broadcast %cst_201 : f32 to vector<2x32xf32>
    %762 = arith.addf %761, %760 : vector<2x32xf32>
    %763 = arith.divf %761, %762 : vector<2x32xf32>
    %764 = arith.mulf %755, %708 : vector<2x32xf32>
    %765 = arith.mulf %749, %757 : vector<2x32xf32>
    %766 = arith.addf %764, %765 : vector<2x32xf32>
    %767 = math.tanh %766 : vector<2x32xf32>
    %768 = arith.mulf %763, %767 : vector<2x32xf32>
    %769 = vector.extract_strided_slice %743 {offsets = [0, 0], sizes = [2, 32], strides = [1, 1]} : vector<2x128xf32> to vector<2x32xf32>
    %770 = arith.negf %769 : vector<2x32xf32>
    %771 = math.exp %770 : vector<2x32xf32>
    %cst_202 = arith.constant 1.000000e+00 : f32
    %772 = vector.broadcast %cst_202 : f32 to vector<2x32xf32>
    %773 = arith.addf %772, %771 : vector<2x32xf32>
    %774 = arith.divf %772, %773 : vector<2x32xf32>
    %775 = vector.extract_strided_slice %743 {offsets = [0, 32], sizes = [2, 32], strides = [1, 1]} : vector<2x128xf32> to vector<2x32xf32>
    %776 = arith.negf %775 : vector<2x32xf32>
    %777 = math.exp %776 : vector<2x32xf32>
    %cst_203 = arith.constant 1.000000e+00 : f32
    %778 = vector.broadcast %cst_203 : f32 to vector<2x32xf32>
    %779 = arith.addf %778, %777 : vector<2x32xf32>
    %780 = arith.divf %778, %779 : vector<2x32xf32>
    %781 = vector.extract_strided_slice %743 {offsets = [0, 64], sizes = [2, 32], strides = [1, 1]} : vector<2x128xf32> to vector<2x32xf32>
    %782 = math.tanh %781 : vector<2x32xf32>
    %783 = vector.extract_strided_slice %743 {offsets = [0, 96], sizes = [2, 32], strides = [1, 1]} : vector<2x128xf32> to vector<2x32xf32>
    %784 = arith.negf %783 : vector<2x32xf32>
    %785 = math.exp %784 : vector<2x32xf32>
    %cst_204 = arith.constant 1.000000e+00 : f32
    %786 = vector.broadcast %cst_204 : f32 to vector<2x32xf32>
    %787 = arith.addf %786, %785 : vector<2x32xf32>
    %788 = arith.divf %786, %787 : vector<2x32xf32>
    %789 = arith.mulf %780, %733 : vector<2x32xf32>
    %790 = arith.mulf %774, %782 : vector<2x32xf32>
    %791 = arith.addf %789, %790 : vector<2x32xf32>
    %792 = math.tanh %791 : vector<2x32xf32>
    %793 = arith.mulf %788, %792 : vector<2x32xf32>
    %794 = vector.extract_strided_slice %499 {offsets = [10, 0], sizes = [2, 128], strides = [1, 1]} : vector<16x256xf32> to vector<2x128xf32>
    %c0_205 = arith.constant 0 : index
    %c0_206 = arith.constant 0 : index
    %795 = vector.load %arg6[%c0_205, %c0_206] : memref<32x128xf32, #tpu.memory_space<vmem>>, vector<32x128xf32>
    %cst_207 = arith.constant dense<0.000000e+00> : vector<2x128xf32>
    %796 = tpu.matmul %768, %795, %cst_207 {dimension_numbers = #tpu.dot_dimension_numbers<[1], [0], [0], [1], [0, 0, 1, 1], [], []>} : vector<2x32xf32>, vector<32x128xf32>, vector<2x128xf32> -> vector<2x128xf32>
    %797 = arith.addf %794, %796 : vector<2x128xf32>
    %798 = vector.extract_strided_slice %499 {offsets = [4, 128], sizes = [2, 128], strides = [1, 1]} : vector<16x256xf32> to vector<2x128xf32>
    %c0_208 = arith.constant 0 : index
    %c0_209 = arith.constant 0 : index
    %799 = vector.load %arg7[%c0_208, %c0_209] : memref<32x128xf32, #tpu.memory_space<vmem>>, vector<32x128xf32>
    %cst_210 = arith.constant dense<0.000000e+00> : vector<2x128xf32>
    %800 = tpu.matmul %793, %799, %cst_210 {dimension_numbers = #tpu.dot_dimension_numbers<[1], [0], [0], [1], [0, 0, 1, 1], [], []>} : vector<2x32xf32>, vector<32x128xf32>, vector<2x128xf32> -> vector<2x128xf32>
    %801 = arith.addf %798, %800 : vector<2x128xf32>
    %802 = vector.extract_strided_slice %797 {offsets = [0, 0], sizes = [2, 32], strides = [1, 1]} : vector<2x128xf32> to vector<2x32xf32>
    %803 = arith.negf %802 : vector<2x32xf32>
    %804 = math.exp %803 : vector<2x32xf32>
    %cst_211 = arith.constant 1.000000e+00 : f32
    %805 = vector.broadcast %cst_211 : f32 to vector<2x32xf32>
    %806 = arith.addf %805, %804 : vector<2x32xf32>
    %807 = arith.divf %805, %806 : vector<2x32xf32>
    %808 = vector.extract_strided_slice %797 {offsets = [0, 32], sizes = [2, 32], strides = [1, 1]} : vector<2x128xf32> to vector<2x32xf32>
    %809 = arith.negf %808 : vector<2x32xf32>
    %810 = math.exp %809 : vector<2x32xf32>
    %cst_212 = arith.constant 1.000000e+00 : f32
    %811 = vector.broadcast %cst_212 : f32 to vector<2x32xf32>
    %812 = arith.addf %811, %810 : vector<2x32xf32>
    %813 = arith.divf %811, %812 : vector<2x32xf32>
    %814 = vector.extract_strided_slice %797 {offsets = [0, 64], sizes = [2, 32], strides = [1, 1]} : vector<2x128xf32> to vector<2x32xf32>
    %815 = math.tanh %814 : vector<2x32xf32>
    %816 = vector.extract_strided_slice %797 {offsets = [0, 96], sizes = [2, 32], strides = [1, 1]} : vector<2x128xf32> to vector<2x32xf32>
    %817 = arith.negf %816 : vector<2x32xf32>
    %818 = math.exp %817 : vector<2x32xf32>
    %cst_213 = arith.constant 1.000000e+00 : f32
    %819 = vector.broadcast %cst_213 : f32 to vector<2x32xf32>
    %820 = arith.addf %819, %818 : vector<2x32xf32>
    %821 = arith.divf %819, %820 : vector<2x32xf32>
    %822 = arith.mulf %813, %766 : vector<2x32xf32>
    %823 = arith.mulf %807, %815 : vector<2x32xf32>
    %824 = arith.addf %822, %823 : vector<2x32xf32>
    %825 = math.tanh %824 : vector<2x32xf32>
    %826 = arith.mulf %821, %825 : vector<2x32xf32>
    %827 = vector.extract_strided_slice %801 {offsets = [0, 0], sizes = [2, 32], strides = [1, 1]} : vector<2x128xf32> to vector<2x32xf32>
    %828 = arith.negf %827 : vector<2x32xf32>
    %829 = math.exp %828 : vector<2x32xf32>
    %cst_214 = arith.constant 1.000000e+00 : f32
    %830 = vector.broadcast %cst_214 : f32 to vector<2x32xf32>
    %831 = arith.addf %830, %829 : vector<2x32xf32>
    %832 = arith.divf %830, %831 : vector<2x32xf32>
    %833 = vector.extract_strided_slice %801 {offsets = [0, 32], sizes = [2, 32], strides = [1, 1]} : vector<2x128xf32> to vector<2x32xf32>
    %834 = arith.negf %833 : vector<2x32xf32>
    %835 = math.exp %834 : vector<2x32xf32>
    %cst_215 = arith.constant 1.000000e+00 : f32
    %836 = vector.broadcast %cst_215 : f32 to vector<2x32xf32>
    %837 = arith.addf %836, %835 : vector<2x32xf32>
    %838 = arith.divf %836, %837 : vector<2x32xf32>
    %839 = vector.extract_strided_slice %801 {offsets = [0, 64], sizes = [2, 32], strides = [1, 1]} : vector<2x128xf32> to vector<2x32xf32>
    %840 = math.tanh %839 : vector<2x32xf32>
    %841 = vector.extract_strided_slice %801 {offsets = [0, 96], sizes = [2, 32], strides = [1, 1]} : vector<2x128xf32> to vector<2x32xf32>
    %842 = arith.negf %841 : vector<2x32xf32>
    %843 = math.exp %842 : vector<2x32xf32>
    %cst_216 = arith.constant 1.000000e+00 : f32
    %844 = vector.broadcast %cst_216 : f32 to vector<2x32xf32>
    %845 = arith.addf %844, %843 : vector<2x32xf32>
    %846 = arith.divf %844, %845 : vector<2x32xf32>
    %847 = arith.mulf %838, %791 : vector<2x32xf32>
    %848 = arith.mulf %832, %840 : vector<2x32xf32>
    %849 = arith.addf %847, %848 : vector<2x32xf32>
    %850 = math.tanh %849 : vector<2x32xf32>
    %851 = arith.mulf %846, %850 : vector<2x32xf32>
    %852 = vector.extract_strided_slice %499 {offsets = [12, 0], sizes = [2, 128], strides = [1, 1]} : vector<16x256xf32> to vector<2x128xf32>
    %c0_217 = arith.constant 0 : index
    %c0_218 = arith.constant 0 : index
    %853 = vector.load %arg6[%c0_217, %c0_218] : memref<32x128xf32, #tpu.memory_space<vmem>>, vector<32x128xf32>
    %cst_219 = arith.constant dense<0.000000e+00> : vector<2x128xf32>
    %854 = tpu.matmul %826, %853, %cst_219 {dimension_numbers = #tpu.dot_dimension_numbers<[1], [0], [0], [1], [0, 0, 1, 1], [], []>} : vector<2x32xf32>, vector<32x128xf32>, vector<2x128xf32> -> vector<2x128xf32>
    %855 = arith.addf %852, %854 : vector<2x128xf32>
    %856 = vector.extract_strided_slice %499 {offsets = [2, 128], sizes = [2, 128], strides = [1, 1]} : vector<16x256xf32> to vector<2x128xf32>
    %c0_220 = arith.constant 0 : index
    %c0_221 = arith.constant 0 : index
    %857 = vector.load %arg7[%c0_220, %c0_221] : memref<32x128xf32, #tpu.memory_space<vmem>>, vector<32x128xf32>
    %cst_222 = arith.constant dense<0.000000e+00> : vector<2x128xf32>
    %858 = tpu.matmul %851, %857, %cst_222 {dimension_numbers = #tpu.dot_dimension_numbers<[1], [0], [0], [1], [0, 0, 1, 1], [], []>} : vector<2x32xf32>, vector<32x128xf32>, vector<2x128xf32> -> vector<2x128xf32>
    %859 = arith.addf %856, %858 : vector<2x128xf32>
    %860 = vector.extract_strided_slice %855 {offsets = [0, 0], sizes = [2, 32], strides = [1, 1]} : vector<2x128xf32> to vector<2x32xf32>
    %861 = arith.negf %860 : vector<2x32xf32>
    %862 = math.exp %861 : vector<2x32xf32>
    %cst_223 = arith.constant 1.000000e+00 : f32
    %863 = vector.broadcast %cst_223 : f32 to vector<2x32xf32>
    %864 = arith.addf %863, %862 : vector<2x32xf32>
    %865 = arith.divf %863, %864 : vector<2x32xf32>
    %866 = vector.extract_strided_slice %855 {offsets = [0, 32], sizes = [2, 32], strides = [1, 1]} : vector<2x128xf32> to vector<2x32xf32>
    %867 = arith.negf %866 : vector<2x32xf32>
    %868 = math.exp %867 : vector<2x32xf32>
    %cst_224 = arith.constant 1.000000e+00 : f32
    %869 = vector.broadcast %cst_224 : f32 to vector<2x32xf32>
    %870 = arith.addf %869, %868 : vector<2x32xf32>
    %871 = arith.divf %869, %870 : vector<2x32xf32>
    %872 = vector.extract_strided_slice %855 {offsets = [0, 64], sizes = [2, 32], strides = [1, 1]} : vector<2x128xf32> to vector<2x32xf32>
    %873 = math.tanh %872 : vector<2x32xf32>
    %874 = vector.extract_strided_slice %855 {offsets = [0, 96], sizes = [2, 32], strides = [1, 1]} : vector<2x128xf32> to vector<2x32xf32>
    %875 = arith.negf %874 : vector<2x32xf32>
    %876 = math.exp %875 : vector<2x32xf32>
    %cst_225 = arith.constant 1.000000e+00 : f32
    %877 = vector.broadcast %cst_225 : f32 to vector<2x32xf32>
    %878 = arith.addf %877, %876 : vector<2x32xf32>
    %879 = arith.divf %877, %878 : vector<2x32xf32>
    %880 = arith.mulf %871, %824 : vector<2x32xf32>
    %881 = arith.mulf %865, %873 : vector<2x32xf32>
    %882 = arith.addf %880, %881 : vector<2x32xf32>
    %883 = math.tanh %882 : vector<2x32xf32>
    %884 = arith.mulf %879, %883 : vector<2x32xf32>
    %885 = vector.extract_strided_slice %859 {offsets = [0, 0], sizes = [2, 32], strides = [1, 1]} : vector<2x128xf32> to vector<2x32xf32>
    %886 = arith.negf %885 : vector<2x32xf32>
    %887 = math.exp %886 : vector<2x32xf32>
    %cst_226 = arith.constant 1.000000e+00 : f32
    %888 = vector.broadcast %cst_226 : f32 to vector<2x32xf32>
    %889 = arith.addf %888, %887 : vector<2x32xf32>
    %890 = arith.divf %888, %889 : vector<2x32xf32>
    %891 = vector.extract_strided_slice %859 {offsets = [0, 32], sizes = [2, 32], strides = [1, 1]} : vector<2x128xf32> to vector<2x32xf32>
    %892 = arith.negf %891 : vector<2x32xf32>
    %893 = math.exp %892 : vector<2x32xf32>
    %cst_227 = arith.constant 1.000000e+00 : f32
    %894 = vector.broadcast %cst_227 : f32 to vector<2x32xf32>
    %895 = arith.addf %894, %893 : vector<2x32xf32>
    %896 = arith.divf %894, %895 : vector<2x32xf32>
    %897 = vector.extract_strided_slice %859 {offsets = [0, 64], sizes = [2, 32], strides = [1, 1]} : vector<2x128xf32> to vector<2x32xf32>
    %898 = math.tanh %897 : vector<2x32xf32>
    %899 = vector.extract_strided_slice %859 {offsets = [0, 96], sizes = [2, 32], strides = [1, 1]} : vector<2x128xf32> to vector<2x32xf32>
    %900 = arith.negf %899 : vector<2x32xf32>
    %901 = math.exp %900 : vector<2x32xf32>
    %cst_228 = arith.constant 1.000000e+00 : f32
    %902 = vector.broadcast %cst_228 : f32 to vector<2x32xf32>
    %903 = arith.addf %902, %901 : vector<2x32xf32>
    %904 = arith.divf %902, %903 : vector<2x32xf32>
    %905 = arith.mulf %896, %849 : vector<2x32xf32>
    %906 = arith.mulf %890, %898 : vector<2x32xf32>
    %907 = arith.addf %905, %906 : vector<2x32xf32>
    %908 = math.tanh %907 : vector<2x32xf32>
    %909 = arith.mulf %904, %908 : vector<2x32xf32>
    %910 = vector.extract_strided_slice %499 {offsets = [14, 0], sizes = [2, 128], strides = [1, 1]} : vector<16x256xf32> to vector<2x128xf32>
    %c0_229 = arith.constant 0 : index
    %c0_230 = arith.constant 0 : index
    %911 = vector.load %arg6[%c0_229, %c0_230] : memref<32x128xf32, #tpu.memory_space<vmem>>, vector<32x128xf32>
    %cst_231 = arith.constant dense<0.000000e+00> : vector<2x128xf32>
    %912 = tpu.matmul %884, %911, %cst_231 {dimension_numbers = #tpu.dot_dimension_numbers<[1], [0], [0], [1], [0, 0, 1, 1], [], []>} : vector<2x32xf32>, vector<32x128xf32>, vector<2x128xf32> -> vector<2x128xf32>
    %913 = arith.addf %910, %912 : vector<2x128xf32>
    %914 = vector.extract_strided_slice %499 {offsets = [0, 128], sizes = [2, 128], strides = [1, 1]} : vector<16x256xf32> to vector<2x128xf32>
    %c0_232 = arith.constant 0 : index
    %c0_233 = arith.constant 0 : index
    %915 = vector.load %arg7[%c0_232, %c0_233] : memref<32x128xf32, #tpu.memory_space<vmem>>, vector<32x128xf32>
    %cst_234 = arith.constant dense<0.000000e+00> : vector<2x128xf32>
    %916 = tpu.matmul %909, %915, %cst_234 {dimension_numbers = #tpu.dot_dimension_numbers<[1], [0], [0], [1], [0, 0, 1, 1], [], []>} : vector<2x32xf32>, vector<32x128xf32>, vector<2x128xf32> -> vector<2x128xf32>
    %917 = arith.addf %914, %916 : vector<2x128xf32>
    %918 = vector.extract_strided_slice %913 {offsets = [0, 0], sizes = [2, 32], strides = [1, 1]} : vector<2x128xf32> to vector<2x32xf32>
    %919 = arith.negf %918 : vector<2x32xf32>
    %920 = math.exp %919 : vector<2x32xf32>
    %cst_235 = arith.constant 1.000000e+00 : f32
    %921 = vector.broadcast %cst_235 : f32 to vector<2x32xf32>
    %922 = arith.addf %921, %920 : vector<2x32xf32>
    %923 = arith.divf %921, %922 : vector<2x32xf32>
    %924 = vector.extract_strided_slice %913 {offsets = [0, 32], sizes = [2, 32], strides = [1, 1]} : vector<2x128xf32> to vector<2x32xf32>
    %925 = arith.negf %924 : vector<2x32xf32>
    %926 = math.exp %925 : vector<2x32xf32>
    %cst_236 = arith.constant 1.000000e+00 : f32
    %927 = vector.broadcast %cst_236 : f32 to vector<2x32xf32>
    %928 = arith.addf %927, %926 : vector<2x32xf32>
    %929 = arith.divf %927, %928 : vector<2x32xf32>
    %930 = vector.extract_strided_slice %913 {offsets = [0, 64], sizes = [2, 32], strides = [1, 1]} : vector<2x128xf32> to vector<2x32xf32>
    %931 = math.tanh %930 : vector<2x32xf32>
    %932 = vector.extract_strided_slice %913 {offsets = [0, 96], sizes = [2, 32], strides = [1, 1]} : vector<2x128xf32> to vector<2x32xf32>
    %933 = arith.negf %932 : vector<2x32xf32>
    %934 = math.exp %933 : vector<2x32xf32>
    %cst_237 = arith.constant 1.000000e+00 : f32
    %935 = vector.broadcast %cst_237 : f32 to vector<2x32xf32>
    %936 = arith.addf %935, %934 : vector<2x32xf32>
    %937 = arith.divf %935, %936 : vector<2x32xf32>
    %938 = arith.mulf %929, %882 : vector<2x32xf32>
    %939 = arith.mulf %923, %931 : vector<2x32xf32>
    %940 = arith.addf %938, %939 : vector<2x32xf32>
    %941 = math.tanh %940 : vector<2x32xf32>
    %942 = arith.mulf %937, %941 : vector<2x32xf32>
    %943 = vector.extract_strided_slice %917 {offsets = [0, 0], sizes = [2, 32], strides = [1, 1]} : vector<2x128xf32> to vector<2x32xf32>
    %944 = arith.negf %943 : vector<2x32xf32>
    %945 = math.exp %944 : vector<2x32xf32>
    %cst_238 = arith.constant 1.000000e+00 : f32
    %946 = vector.broadcast %cst_238 : f32 to vector<2x32xf32>
    %947 = arith.addf %946, %945 : vector<2x32xf32>
    %948 = arith.divf %946, %947 : vector<2x32xf32>
    %949 = vector.extract_strided_slice %917 {offsets = [0, 32], sizes = [2, 32], strides = [1, 1]} : vector<2x128xf32> to vector<2x32xf32>
    %950 = arith.negf %949 : vector<2x32xf32>
    %951 = math.exp %950 : vector<2x32xf32>
    %cst_239 = arith.constant 1.000000e+00 : f32
    %952 = vector.broadcast %cst_239 : f32 to vector<2x32xf32>
    %953 = arith.addf %952, %951 : vector<2x32xf32>
    %954 = arith.divf %952, %953 : vector<2x32xf32>
    %955 = vector.extract_strided_slice %917 {offsets = [0, 64], sizes = [2, 32], strides = [1, 1]} : vector<2x128xf32> to vector<2x32xf32>
    %956 = math.tanh %955 : vector<2x32xf32>
    %957 = vector.extract_strided_slice %917 {offsets = [0, 96], sizes = [2, 32], strides = [1, 1]} : vector<2x128xf32> to vector<2x32xf32>
    %958 = arith.negf %957 : vector<2x32xf32>
    %959 = math.exp %958 : vector<2x32xf32>
    %cst_240 = arith.constant 1.000000e+00 : f32
    %960 = vector.broadcast %cst_240 : f32 to vector<2x32xf32>
    %961 = arith.addf %960, %959 : vector<2x32xf32>
    %962 = arith.divf %960, %961 : vector<2x32xf32>
    %963 = arith.mulf %954, %907 : vector<2x32xf32>
    %964 = arith.mulf %948, %956 : vector<2x32xf32>
    %965 = arith.addf %963, %964 : vector<2x32xf32>
    %966 = math.tanh %965 : vector<2x32xf32>
    %967 = arith.mulf %962, %966 : vector<2x32xf32>
    %c0_241 = arith.constant 0 : index
    %c0_242 = arith.constant 0 : index
    %968 = vector.load %arg9[%c0_241, %c0_242] : memref<64x64xf32, #tpu.memory_space<vmem>>, vector<32x64xf32>
    %cst_243 = arith.constant dense<0.000000e+00> : vector<2x64xf32>
    %969 = tpu.matmul %942, %968, %cst_243 {dimension_numbers = #tpu.dot_dimension_numbers<[1], [0], [0], [1], [0, 0, 1, 1], [], []>} : vector<2x32xf32>, vector<32x64xf32>, vector<2x64xf32> -> vector<2x64xf32>
    %c32_244 = arith.constant 32 : index
    %c0_245 = arith.constant 0 : index
    %970 = vector.load %arg9[%c32_244, %c0_245] : memref<64x64xf32, #tpu.memory_space<vmem>>, vector<32x64xf32>
    %cst_246 = arith.constant dense<0.000000e+00> : vector<2x64xf32>
    %971 = tpu.matmul %967, %970, %cst_246 {dimension_numbers = #tpu.dot_dimension_numbers<[1], [0], [0], [1], [0, 0, 1, 1], [], []>} : vector<2x32xf32>, vector<32x64xf32>, vector<2x64xf32> -> vector<2x64xf32>
    %972 = arith.addf %969, %971 : vector<2x64xf32>
    %c0_247 = arith.constant 0 : index
    %c0_248 = arith.constant 0 : index
    %973 = vector.load %arg10[%c0_247, %c0_248] : memref<1x64xf32, #tpu.memory_space<vmem>>, vector<1x64xf32>
    %974 = vector.broadcast %973 : vector<1x64xf32> to vector<2x64xf32>
    %975 = arith.addf %972, %974 : vector<2x64xf32>
    %cst_249 = arith.constant 0.000000e+00 : f32
    %976 = vector.broadcast %cst_249 : f32 to vector<2x64xf32>
    %977 = arith.maximumf %975, %976 : vector<2x64xf32>
    %c0_250 = arith.constant 0 : index
    %c0_251 = arith.constant 0 : index
    %978 = vector.load %arg11[%c0_250, %c0_251] : memref<64x128xf32, #tpu.memory_space<vmem>>, vector<64x128xf32>
    %cst_252 = arith.constant dense<0.000000e+00> : vector<2x128xf32>
    %979 = tpu.matmul %977, %978, %cst_252 {dimension_numbers = #tpu.dot_dimension_numbers<[1], [0], [0], [1], [0, 0, 1, 1], [], []>} : vector<2x64xf32>, vector<64x128xf32>, vector<2x128xf32> -> vector<2x128xf32>
    %c0_253 = arith.constant 0 : index
    %c0_254 = arith.constant 0 : index
    %980 = vector.load %arg12[%c0_253, %c0_254] : memref<1x128xf32, #tpu.memory_space<vmem>>, vector<1x128xf32>
    %981 = vector.broadcast %980 : vector<1x128xf32> to vector<2x128xf32>
    %982 = arith.addf %979, %981 : vector<2x128xf32>
    %c0_255 = arith.constant 0 : index
    %c0_256 = arith.constant 0 : index
    %983 = vector.load %arg13[%c0_255, %c0_256] : memref<2x128xf32, #tpu.memory_space<vmem>>, vector<2x128xf32>
    tpu.vector_store %arg13[%c0_255, %c0_256], %982 {strides = array<i32>} : memref<2x128xf32, #tpu.memory_space<vmem>>, vector<2x128xf32>,
    return
  }
}

</mosaic_0001>

<llo_original>
// kernel: forward.1
$region0: #{forward.1}
  #allocation0 [shape = 'u32[]', space=smem, size = 0x4, offset = 0x4, fixed_abs, tag = 'smem constant byte address 0x4 - core index']
  #allocation1 [shape = 'u32[144,128]{1,0:T(1,128)}', space=vmem, size = 0x12000, scoped, tag = 'internal scratch']
  #allocation2 [shape = 'f32[16,32]{1,0:T(8,128)}', space=vmem, size = 0x2000, scoped, tag = 'scratch operand']
  #allocation3 [shape = 'f32[16,32]{1,0:T(8,128)}', space=vmem, size = 0x2000, scoped, tag = 'scratch operand']
  %s0 = inlined_call_operand.vmem [shape: f32[16,32], index: 0, kind: input, shape index: {}]
  %s1 = inlined_call_operand.vmem [shape: f32[32,256], index: 1, kind: input, shape index: {}]
  %s2 = inlined_call_operand.hbm [shape: f32[32,128], index: 2, kind: input, shape index: {}]
  %s3 = inlined_call_operand.hbm [shape: f32[32,128], index: 3, kind: input, shape index: {}]
  %s4 = inlined_call_operand.vmem [shape: f32[1,256], index: 4, kind: input, shape index: {}]
  %s5 = inlined_call_operand.vmem [shape: f32[64,256], index: 5, kind: input, shape index: {}]
  %s6 = inlined_call_operand.hbm [shape: f32[32,128], index: 6, kind: input, shape index: {}]
  %s7 = inlined_call_operand.hbm [shape: f32[32,128], index: 7, kind: input, shape index: {}]
  %s8 = inlined_call_operand.vmem [shape: f32[1,256], index: 8, kind: input, shape index: {}]
  %s9 = inlined_call_operand.vmem [shape: f32[64,64], index: 9, kind: input, shape index: {}]
  %s10 = inlined_call_operand.vmem [shape: f32[1,64], index: 10, kind: input, shape index: {}]
  %s11 = inlined_call_operand.vmem [shape: f32[64,128], index: 11, kind: input, shape index: {}]
  %s12 = inlined_call_operand.vmem [shape: f32[1,128], index: 12, kind: input, shape index: {}]
  %s13 = inlined_call_operand.hbm [shape: f32[2,128], index: 13, kind: output, shape index: {}]
  %s14 = sld [smem:[#allocation0]]
  $region78: #{forward.1} parent=0
    _
  %s16 = ssub.s32 1, %s14
  %s17 = scalar_select 0, %s16, %s14
  $region1: #{forward.1} parent=0
    #allocation4 [shape = 'u8[16384]{0}', space=vmem, size = 0x4000, scoped, tag = 'input window, operand 2, single buffered']
    #allocation5 [shape = 's32[1]{0}', space=sflag, size = 0x4, scoped, tag = 'scoped memory for forward.1']
    #allocation6 [shape = 's32[1]{0}', space=sflag, size = 0x4, scoped, tag = 'scoped memory for forward.1']
    #allocation7 [shape = 'u8[16384]{0}', space=vmem, size = 0x4000, scoped, tag = 'input window, operand 3, single buffered']
    #allocation8 [shape = 's32[1]{0}', space=sflag, size = 0x4, scoped, tag = 'scoped memory for forward.1']
    #allocation9 [shape = 'u8[16384]{0}', space=vmem, size = 0x4000, scoped, tag = 'input window, operand 6, single buffered']
    #allocation10 [shape = 'u8[16384]{0}', space=vmem, size = 0x4000, scoped, tag = 'input window, operand 7, single buffered']
    #allocation11 [shape = 's32[1]{0}', space=sflag, size = 0x4, scoped, tag = 'scoped memory for forward.1']
    #allocation12 [shape = 'u8[1024]{0}', space=vmem, size = 0x400, scoped, tag = 'output window, operand 0, single buffered']
    %18 = vsyncpa [#allocation5], 0
    %19 = vsyncpa [#allocation8], 0
    %20 = vsyncpa [#allocation11], 0
    %21 = vsyncpa [#allocation6], 0
    // Predicated region
    $region2: #{forward.1} parent=1 // pred_check
      _
    $region3: #{forward.1} parent=1 // pred_check_branch
      %23 = sbr.rel (0) target = $region5
    $region4: #{forward.1} parent=1 // pred_region
      _
    $region5: #{forward.1} parent=1 // pred_fallthru
      _
    // Predicated region
    $region6: #{forward.1} parent=1 // pred_check
      _
    $region7: #{forward.1} parent=1 // pred_check_branch
      %25 = sbr.rel (0) target = $region9
    $region8: #{forward.1} parent=1 // pred_region
      _
    $region9: #{forward.1} parent=1 // pred_fallthru
      _
    // Predicated region
    $region10: #{forward.1} parent=1 // pred_check
      _
    $region11: #{forward.1} parent=1 // pred_check_branch
      %27 = sbr.rel (0) target = $region13
    $region12: #{forward.1} parent=1 // pred_region
      %s29 = ssub.s32 512, 512
      %30 = vsyncadd [#allocation5], %s29
      %s31 = sshll.u32 [#allocation4], 4
      %s32 = int_to_ptr.vmem [resolvable:$true] %s31
      %37 = dma.hbm_to_vmem [thread:$0]  %s2, 512, %s32, [#allocation5], 128, 128, 8
    $region13: #{forward.1} parent=1 // pred_fallthru
      _
    // Predicated region
    $region14: #{forward.1} parent=1 // pred_check
      _
    $region15: #{forward.1} parent=1 // pred_check_branch
      %39 = sbr.rel (0) target = $region17
    $region16: #{forward.1} parent=1 // pred_region
      %s41 = ssub.s32 512, 512
      %42 = vsyncadd [#allocation8], %s41
      %s43 = sshll.u32 [#allocation7], 4
      %s44 = int_to_ptr.vmem [resolvable:$true] %s43
      %49 = dma.hbm_to_vmem [thread:$0]  %s3, 512, %s44, [#allocation8], 128, 128, 8
    $region17: #{forward.1} parent=1 // pred_fallthru
      _
    // Predicated region
    $region18: #{forward.1} parent=1 // pred_check
      _
    $region19: #{forward.1} parent=1 // pred_check_branch
      %51 = sbr.rel (0) target = $region21
    $region20: #{forward.1} parent=1 // pred_region
      _
    $region21: #{forward.1} parent=1 // pred_fallthru
      _
    // Predicated region
    $region22: #{forward.1} parent=1 // pred_check
      _
    $region23: #{forward.1} parent=1 // pred_check_branch
      %53 = sbr.rel (0) target = $region25
    $region24: #{forward.1} parent=1 // pred_region
      _
    $region25: #{forward.1} parent=1 // pred_fallthru
      _
    // Predicated region
    $region26: #{forward.1} parent=1 // pred_check
      _
    $region27: #{forward.1} parent=1 // pred_check_branch
      %55 = sbr.rel (0) target = $region29
    $region28: #{forward.1} parent=1 // pred_region
      %s57 = ssub.s32 512, 512
      %58 = vsyncadd [#allocation8], %s57
      %s59 = sshll.u32 [#allocation9], 4
      %s60 = int_to_ptr.vmem [resolvable:$true] %s59
      %65 = dma.hbm_to_vmem [thread:$0]  %s6, 512, %s60, [#allocation8], 128, 128, 8
    $region29: #{forward.1} parent=1 // pred_fallthru
      _
    // Predicated region
    $region30: #{forward.1} parent=1 // pred_check
      _
    $region31: #{forward.1} parent=1 // pred_check_branch
      %67 = sbr.rel (0) target = $region33
    $region32: #{forward.1} parent=1 // pred_region
      %s69 = ssub.s32 512, 512
      %70 = vsyncadd [#allocation11], %s69
      %s71 = sshll.u32 [#allocation10], 4
      %s72 = int_to_ptr.vmem [resolvable:$true] %s71
      %77 = dma.hbm_to_vmem [thread:$0]  %s7, 512, %s72, [#allocation11], 128, 128, 8
    $region33: #{forward.1} parent=1 // pred_fallthru
      _
    // Predicated region
    $region34: #{forward.1} parent=1 // pred_check
      _
    $region35: #{forward.1} parent=1 // pred_check_branch
      %79 = sbr.rel (0) target = $region37
    $region36: #{forward.1} parent=1 // pred_region
      _
    $region37: #{forward.1} parent=1 // pred_fallthru
      _
    // Predicated region
    $region38: #{forward.1} parent=1 // pred_check
      _
    $region39: #{forward.1} parent=1 // pred_check_branch
      %81 = sbr.rel (0) target = $region41
    $region40: #{forward.1} parent=1 // pred_region
      _
    $region41: #{forward.1} parent=1 // pred_fallthru
      _
    // Predicated region
    $region42: #{forward.1} parent=1 // pred_check
      _
    $region43: #{forward.1} parent=1 // pred_check_branch
      %83 = sbr.rel (0) target = $region45
    $region44: #{forward.1} parent=1 // pred_region
      _
    $region45: #{forward.1} parent=1 // pred_fallthru
      _
    // Predicated region
    $region46: #{forward.1} parent=1 // pred_check
      _
    $region47: #{forward.1} parent=1 // pred_check_branch
      %85 = sbr.rel (0) target = $region49
    $region48: #{forward.1} parent=1 // pred_region
      _
    $region49: #{forward.1} parent=1 // pred_fallthru
      _
    // Predicated region
    $region50: #{forward.1} parent=1 // pred_check
      _
    $region51: #{forward.1} parent=1 // pred_check_branch
      %87 = sbr.rel (0) target = $region53
    $region52: #{forward.1} parent=1 // pred_region
      _
    $region53: #{forward.1} parent=1 // pred_fallthru
      _
    // Predicated region
    $region54: #{forward.1} parent=1 // pred_check
      _
    $region55: #{forward.1} parent=1 // pred_check_branch
      %89 = sbr.rel (0) target = $region57
    $region56: #{forward.1} parent=1 // pred_region
      %90 = dma.done [#allocation5], 512
    $region57: #{forward.1} parent=1 // pred_fallthru
      _
    // Predicated region
    $region58: #{forward.1} parent=1 // pred_check
      _
    $region59: #{forward.1} parent=1 // pred_check_branch
      %92 = sbr.rel (0) target = $region61
    $region60: #{forward.1} parent=1 // pred_region
      %93 = dma.done [#allocation8], 512
    $region61: #{forward.1} parent=1 // pred_fallthru
      _
    // Predicated region
    $region62: #{forward.1} parent=1 // pred_check
      _
    $region63: #{forward.1} parent=1 // pred_check_branch
      %95 = sbr.rel (0) target = $region65
    $region64: #{forward.1} parent=1 // pred_region
      %96 = dma.done [#allocation8], 512
    $region65: #{forward.1} parent=1 // pred_fallthru
      _
    // Predicated region
    $region66: #{forward.1} parent=1 // pred_check
      _
    $region67: #{forward.1} parent=1 // pred_check_branch
      %98 = sbr.rel (0) target = $region69
    $region68: #{forward.1} parent=1 // pred_region
      %99 = dma.done [#allocation11], 512
    $region69: #{forward.1} parent=1 // pred_fallthru
      _
    %v100 = vld [vmem:[%s0] sm:$0xff]
    %v101 = vld [vmem:[%s0 + $0x8] sm:$0xff]
    %v102 = vld [vmem:[%s1] sm:$0xff]
    %v103 = vld [vmem:[%s1 + $0x8] sm:$0xff]
    %v104 = vld [vmem:[%s1 + $0x10] sm:$0xff]
    %v105 = vld [vmem:[%s1 + $0x18] sm:$0xff]
    %v106 = vld [vmem:[%s1 + $0x20] sm:$0xff]
    %v107 = vld [vmem:[%s1 + $0x28] sm:$0xff]
    %v108 = vld [vmem:[%s1 + $0x30] sm:$0xff]
    %v109 = vld [vmem:[%s1 + $0x38] sm:$0xff]
    %v110 = vld [vmem:[%s4] sm:$0x3]
    %v112 = vlaneseq
    %v113 = vshrl.u32 %v112, 7
    %v114 = vsub.s32 0, %v113
    %v115 = vrot.slane %v110, %v114
    %v116 = vlaneseq
    %v117 = vshrl.u32 %v116, 7
    %v118 = vsub.s32 1, %v117
    %v119 = vrot.slane %v110, %v118
    %vm122 = vcmask 261120
    %v124 = vsel %vm122, %v100, 0
    %v127 = vsel %vm122, %v101, 0
    %129 = vmatprep.subr.mxu0 %v103
    %130 = vmatpush1.msra.mxu0 %v102
    %131 = vmatprep.subr.mxu0 %v105
    %132 = vmatpush1.msra.mxu0 %v104
    %133 = vmatprep.subr.mxu0 %v107
    %134 = vmatpush1.msra.mxu0 %v106
    %135 = vmatprep.subr.mxu0 %v109
    %136 = vmatpush1.msra.mxu0 %v108
    %137 = vmatprep.subr.mxu0 0.0
    %138 = vmatpush1.msra.mxu0 0.0
    %139 = vmatprep.subr.mxu0 0.0
    %140 = vmatpush1.msra.mxu0 0.0
    %141 = vmatprep.subr.mxu0 0.0
    %142 = vmatpush1.msra.mxu0 0.0
    %143 = vmatprep.subr.mxu0 0.0
    %144 = vmatpush1.msra.mxu0 0.0
    %145 = vmatprep.subr.mxu0 0.0
    %146 = vmatpush1.msra.mxu0 0.0
    %147 = vmatprep.subr.mxu0 0.0
    %148 = vmatpush1.msra.mxu0 0.0
    %149 = vmatprep.subr.mxu0 0.0
    %150 = vmatpush1.msra.mxu0 0.0
    %151 = vmatprep.subr.mxu0 0.0
    %152 = vmatpush1.msra.mxu0 0.0
    %153 = vmatprep.subr.mxu0 0.0
    %154 = vmatpush1.msra.mxu0 0.0
    %155 = vmatprep.subr.mxu0 0.0
    %156 = vmatpush1.msra.mxu0 0.0
    %157 = vmatprep.subr.mxu0 0.0
    %158 = vmatpush1.msra.mxu0 0.0
    %159 = vmatprep.subr.mxu0 0.0
    %160 = vmatpush1.msra.mxu0 0.0
    %161 = vmatprep.subr.mxu0 0.0
    %162 = vmatpush1.msra.mxu0 0.0
    %163 = vmatprep.subr.mxu0 0.0
    %164 = vmatpush1.msra.mxu0 0.0
    %165 = vmatprep.subr.mxu0 0.0
    %166 = vmatpush1.msra.mxu0 0.0
    %167 = vmatprep.subr.mxu0 0.0
    %168 = vmatpush1.msra.mxu0 0.0
    %169 = vmatprep.subr.mxu0 0.0
    %170 = vmatpush1.msra.mxu0 0.0
    %171 = vmatprep.subr.mxu0 0.0
    %172 = vmatpush1.msra.mxu0 0.0
    %173 = vmatprep.subr.mxu0 0.0
    %174 = vmatpush1.msra.mxu0 0.0
    %175 = vmatprep.subr.mxu0 0.0
    %176 = vmatpush1.msra.mxu0 0.0
    %177 = vmatprep.subr.mxu0 0.0
    %178 = vmatpush1.msra.mxu0 0.0
    %179 = vmatprep.subr.mxu0 0.0
    %180 = vmatpush1.msra.mxu0 0.0
    %181 = vmatprep.subr.mxu0 0.0
    %182 = vmatpush1.msra.mxu0 0.0
    %183 = vmatprep.subr.mxu0 0.0
    %184 = vmatpush1.msra.mxu0 0.0
    %185 = vmatprep.subr.mxu0 0.0
    %186 = vmatpush1.msra.mxu0 0.0
    %187 = vmatprep.subr.mxu0 0.0
    %188 = vmatpush1.msra.mxu0 0.0
    %189 = vmatprep.subr.mxu0 0.0
    %190 = vmatpush1.msra.mxu0 0.0
    %191 = vmatprep.subr.mxu0 0.0
    %192 = vmatpush1.msra.mxu0 0.0
    %193 = vmatprep.mubr.f32.mxu0 0.0
    %194 = vmatmul.mubr.f32.gmra.mrb[0].mxu0 %v124
    %v195 = vpop.f32.mrb[0].mxu0
    %v196 = vadd.f32 %v115, %v195
    %v197 = vpop.f32.mrb[0].mxu0
    %v198 = vadd.f32 %v119, %v197
    %199 = vmatprep.mubr.f32.mxu0 0.0
    %200 = vmatmul.mubr.f32.gmra.mrb[0].mxu0 %v127
    %v201 = vpop.f32.mrb[0].mxu0
    %v202 = vadd.f32 %v115, %v201
    %v203 = vpop.f32.mrb[0].mxu0
    %v204 = vadd.f32 %v119, %v203
    %205 = vdwg.mxu0
    %v206 = vld [vmem:[#allocation4] sm:$0xff]
    %v207 = vld [vmem:[#allocation4 + $0x8] sm:$0xff]
    %v208 = vld [vmem:[#allocation4 + $0x10] sm:$0xff]
    %v209 = vld [vmem:[#allocation4 + $0x18] sm:$0xff]
    %v211 = vsel %vm122, 0.0, 0
    %213 = vmatprep.subr.mxu0 0.0
    %214 = vmatpush1.msra.mxu0 %v206
    %215 = vmatprep.subr.mxu0 0.0
    %216 = vmatpush1.msra.mxu0 %v207
    %217 = vmatprep.subr.mxu0 0.0
    %218 = vmatpush1.msra.mxu0 %v208
    %219 = vmatprep.subr.mxu0 0.0
    %220 = vmatpush1.msra.mxu0 %v209
    %221 = vmatprep.subr.mxu0 0.0
    %222 = vmatpush1.msra.mxu0 0.0
    %223 = vmatprep.subr.mxu0 0.0
    %224 = vmatpush1.msra.mxu0 0.0
    %225 = vmatprep.subr.mxu0 0.0
    %226 = vmatpush1.msra.mxu0 0.0
    %227 = vmatprep.subr.mxu0 0.0
    %228 = vmatpush1.msra.mxu0 0.0
    %229 = vmatprep.subr.mxu0 0.0
    %230 = vmatpush1.msra.mxu0 0.0
    %231 = vmatprep.subr.mxu0 0.0
    %232 = vmatpush1.msra.mxu0 0.0
    %233 = vmatprep.subr.mxu0 0.0
    %234 = vmatpush1.msra.mxu0 0.0
    %235 = vmatprep.subr.mxu0 0.0
    %236 = vmatpush1.msra.mxu0 0.0
    %237 = vmatprep.subr.mxu0 0.0
    %238 = vmatpush1.msra.mxu0 0.0
    %239 = vmatprep.subr.mxu0 0.0
    %240 = vmatpush1.msra.mxu0 0.0
    %241 = vmatprep.subr.mxu0 0.0
    %242 = vmatpush1.msra.mxu0 0.0
    %243 = vmatprep.subr.mxu0 0.0
    %244 = vmatpush1.msra.mxu0 0.0
    %245 = vmatprep.subr.mxu0 0.0
    %246 = vmatpush1.msra.mxu0 0.0
    %247 = vmatprep.subr.mxu0 0.0
    %248 = vmatpush1.msra.mxu0 0.0
    %249 = vmatprep.subr.mxu0 0.0
    %250 = vmatpush1.msra.mxu0 0.0
    %251 = vmatprep.subr.mxu0 0.0
    %252 = vmatpush1.msra.mxu0 0.0
    %253 = vmatprep.subr.mxu0 0.0
    %254 = vmatpush1.msra.mxu0 0.0
    %255 = vmatprep.subr.mxu0 0.0
    %256 = vmatpush1.msra.mxu0 0.0
    %257 = vmatprep.subr.mxu0 0.0
    %258 = vmatpush1.msra.mxu0 0.0
    %259 = vmatprep.subr.mxu0 0.0
    %260 = vmatpush1.msra.mxu0 0.0
    %261 = vmatprep.subr.mxu0 0.0
    %262 = vmatpush1.msra.mxu0 0.0
    %263 = vmatprep.subr.mxu0 0.0
    %264 = vmatpush1.msra.mxu0 0.0
    %265 = vmatprep.subr.mxu0 0.0
    %266 = vmatpush1.msra.mxu0 0.0
    %267 = vmatprep.subr.mxu0 0.0
    %268 = vmatpush1.msra.mxu0 0.0
    %269 = vmatprep.subr.mxu0 0.0
    %270 = vmatpush1.msra.mxu0 0.0
    %271 = vmatprep.subr.mxu0 0.0
    %272 = vmatpush1.msra.mxu0 0.0
    %273 = vmatprep.subr.mxu0 0.0
    %274 = vmatpush1.msra.mxu0 0.0
    %275 = vmatprep.subr.mxu0 0.0
    %276 = vmatpush1.msra.mxu0 0.0
    %277 = vmatprep.mubr.f32.mxu0 0.0
    %278 = vmatmul.mubr.f32.gmra.mrb[0].mxu0 %v211
    %v279 = vpop.f32.mrb[0].mxu0
    %v280 = vadd.f32 0.0, %v279
    %v281 = vpop.f32.mrb[0].mxu0
    %282 = vdwg.mxu0
    %v283 = vadd.f32 %v196, %v280
    %v284 = vld [vmem:[#allocation7] sm:$0xff]
    %v285 = vld [vmem:[#allocation7 + $0x8] sm:$0xff]
    %v286 = vld [vmem:[#allocation7 + $0x10] sm:$0xff]
    %v287 = vld [vmem:[#allocation7 + $0x18] sm:$0xff]
    %288 = vmatprep.subr.mxu0 0.0
    %289 = vmatpush1.msra.mxu0 %v284
    %290 = vmatprep.subr.mxu0 0.0
    %291 = vmatpush1.msra.mxu0 %v285
    %292 = vmatprep.subr.mxu0 0.0
    %293 = vmatpush1.msra.mxu0 %v286
    %294 = vmatprep.subr.mxu0 0.0
    %295 = vmatpush1.msra.mxu0 %v287
    %296 = vmatprep.subr.mxu0 0.0
    %297 = vmatpush1.msra.mxu0 0.0
    %298 = vmatprep.subr.mxu0 0.0
    %299 = vmatpush1.msra.mxu0 0.0
    %300 = vmatprep.subr.mxu0 0.0
    %301 = vmatpush1.msra.mxu0 0.0
    %302 = vmatprep.subr.mxu0 0.0
    %303 = vmatpush1.msra.mxu0 0.0
    %304 = vmatprep.subr.mxu0 0.0
    %305 = vmatpush1.msra.mxu0 0.0
    %306 = vmatprep.subr.mxu0 0.0
    %307 = vmatpush1.msra.mxu0 0.0
    %308 = vmatprep.subr.mxu0 0.0
    %309 = vmatpush1.msra.mxu0 0.0
    %310 = vmatprep.subr.mxu0 0.0
    %311 = vmatpush1.msra.mxu0 0.0
    %312 = vmatprep.subr.mxu0 0.0
    %313 = vmatpush1.msra.mxu0 0.0
    %314 = vmatprep.subr.mxu0 0.0
    %315 = vmatpush1.msra.mxu0 0.0
    %316 = vmatprep.subr.mxu0 0.0
    %317 = vmatpush1.msra.mxu0 0.0
    %318 = vmatprep.subr.mxu0 0.0
    %319 = vmatpush1.msra.mxu0 0.0
    %320 = vmatprep.subr.mxu0 0.0
    %321 = vmatpush1.msra.mxu0 0.0
    %322 = vmatprep.subr.mxu0 0.0
    %323 = vmatpush1.msra.mxu0 0.0
    %324 = vmatprep.subr.mxu0 0.0
    %325 = vmatpush1.msra.mxu0 0.0
    %326 = vmatprep.subr.mxu0 0.0
    %327 = vmatpush1.msra.mxu0 0.0
    %328 = vmatprep.subr.mxu0 0.0
    %329 = vmatpush1.msra.mxu0 0.0
    %330 = vmatprep.subr.mxu0 0.0
    %331 = vmatpush1.msra.mxu0 0.0
    %332 = vmatprep.subr.mxu0 0.0
    %333 = vmatpush1.msra.mxu0 0.0
    %334 = vmatprep.subr.mxu0 0.0
    %335 = vmatpush1.msra.mxu0 0.0
    %336 = vmatprep.subr.mxu0 0.0
    %337 = vmatpush1.msra.mxu0 0.0
    %338 = vmatprep.subr.mxu0 0.0
    %339 = vmatpush1.msra.mxu0 0.0
    %340 = vmatprep.subr.mxu0 0.0
    %341 = vmatpush1.msra.mxu0 0.0
    %342 = vmatprep.subr.mxu0 0.0
    %343 = vmatpush1.msra.mxu0 0.0
    %344 = vmatprep.subr.mxu0 0.0
    %345 = vmatpush1.msra.mxu0 0.0
    %346 = vmatprep.subr.mxu0 0.0
    %347 = vmatpush1.msra.mxu0 0.0
    %348 = vmatprep.subr.mxu0 0.0
    %349 = vmatpush1.msra.mxu0 0.0
    %350 = vmatprep.subr.mxu0 0.0
    %351 = vmatpush1.msra.mxu0 0.0
    %352 = vmatprep.mubr.f32.mxu0 0.0
    %353 = vmatmul.mubr.f32.gmra.mrb[0].mxu0 %v211
    %v354 = vpop.f32.mrb[0].mxu0
    %v355 = vadd.f32 0.0, %v354
    %v356 = vpop.f32.mrb[0].mxu0
    %357 = vdwg.mxu0
    %v359 = vrot.slane %v355, 2
    %v361 = vadd.f32 %v204, %v359
    %v362 = vxor.u32 %v283, 2147483648
    %v363 = vmul.f32 %v362, 1.442695
    %v364 = vpow.pop %v363
    %v365 = vadd.f32 %v364, 1.0
    %v366 = vrcp.pop %v365
    %v367 = vmul.f32 1.0, %v366
    %v368 = vtanh.pop %v283
    %v369 = vmul.f32 %v367, 0.0
    %371 = vrot.lane.b32.xlu0 %v368, 64
    %v372 = vpop.permute.xlu0 %371
    %v374 = vmul.f32 %v367, %v372
    %376 = vrot.lane.b32.xlu0 %v374, 32
    %v377 = vpop.permute.xlu0 %376
    %v379 = vadd.f32 %v369, %v377
    %v380 = vtanh.pop %v379
    %382 = vrot.lane.b32.xlu0 %v380, 64
    %v383 = vpop.permute.xlu0 %382
    %v385 = vmul.f32 %v367, %v383
    %v386 = vxor.u32 %v361, 2147483648
    %v387 = vmul.f32 %v386, 1.442695
    %v388 = vpow.pop %v387
    %v389 = vadd.f32 %v388, 1.0
    %v390 = vrcp.pop %v389
    %v391 = vmul.f32 1.0, %v390
    %v392 = vtanh.pop %v361
    %v393 = vmul.f32 %v391, 0.0
    %395 = vrot.lane.b32.xlu0 %v392, 64
    %v396 = vpop.permute.xlu0 %395
    %v398 = vmul.f32 %v391, %v396
    %400 = vrot.lane.b32.xlu0 %v398, 32
    %v401 = vpop.permute.xlu0 %400
    %v403 = vadd.f32 %v393, %v401
    %v404 = vtanh.pop %v403
    %406 = vrot.lane.b32.xlu0 %v404, 64
    %v407 = vpop.permute.xlu0 %406
    %v409 = vmul.f32 %v391, %v407
    %411 = vrot.lane.b32.xlu0 %v385, 32
    %v412 = vpop.permute.xlu0 %411
    %vm414 = vcmask 254976
    %415 = vst.msk [vmem:[#allocation2] sm:$0x3] %vm414, %v412
    %417 = vrot.lane.b32.xlu0 %v409, 32
    %v418 = vpop.permute.xlu0 %417
    %vm420 = vcmask 261126
    %421 = vst.msk [vmem:[#allocation3 + $0x8] sm:$0xc0] %vm420, %v418
    %v422 = vld [vmem:[#allocation4] sm:$0xff]
    %v423 = vld [vmem:[#allocation4 + $0x8] sm:$0xff]
    %v424 = vld [vmem:[#allocation4 + $0x10] sm:$0xff]
    %v425 = vld [vmem:[#allocation4 + $0x18] sm:$0xff]
    %v426 = vsel %vm122, %v412, 0
    %428 = vmatprep.subr.mxu0 0.0
    %429 = vmatpush1.msra.mxu0 %v422
    %430 = vmatprep.subr.mxu0 0.0
    %431 = vmatpush1.msra.mxu0 %v423
    %432 = vmatprep.subr.mxu0 0.0
    %433 = vmatpush1.msra.mxu0 %v424
    %434 = vmatprep.subr.mxu0 0.0
    %435 = vmatpush1.msra.mxu0 %v425
    %436 = vmatprep.subr.mxu0 0.0
    %437 = vmatpush1.msra.mxu0 0.0
    %438 = vmatprep.subr.mxu0 0.0
    %439 = vmatpush1.msra.mxu0 0.0
    %440 = vmatprep.subr.mxu0 0.0
    %441 = vmatpush1.msra.mxu0 0.0
    %442 = vmatprep.subr.mxu0 0.0
    %443 = vmatpush1.msra.mxu0 0.0
    %444 = vmatprep.subr.mxu0 0.0
    %445 = vmatpush1.msra.mxu0 0.0
    %446 = vmatprep.subr.mxu0 0.0
    %447 = vmatpush1.msra.mxu0 0.0
    %448 = vmatprep.subr.mxu0 0.0
    %449 = vmatpush1.msra.mxu0 0.0
    %450 = vmatprep.subr.mxu0 0.0
    %451 = vmatpush1.msra.mxu0 0.0
    %452 = vmatprep.subr.mxu0 0.0
    %453 = vmatpush1.msra.mxu0 0.0
    %454 = vmatprep.subr.mxu0 0.0
    %455 = vmatpush1.msra.mxu0 0.0
    %456 = vmatprep.subr.mxu0 0.0
    %457 = vmatpush1.msra.mxu0 0.0
    %458 = vmatprep.subr.mxu0 0.0
    %459 = vmatpush1.msra.mxu0 0.0
    %460 = vmatprep.subr.mxu0 0.0
    %461 = vmatpush1.msra.mxu0 0.0
    %462 = vmatprep.subr.mxu0 0.0
    %463 = vmatpush1.msra.mxu0 0.0
    %464 = vmatprep.subr.mxu0 0.0
    %465 = vmatpush1.msra.mxu0 0.0
    %466 = vmatprep.subr.mxu0 0.0
    %467 = vmatpush1.msra.mxu0 0.0
    %468 = vmatprep.subr.mxu0 0.0
    %469 = vmatpush1.msra.mxu0 0.0
    %470 = vmatprep.subr.mxu0 0.0
    %471 = vmatpush1.msra.mxu0 0.0
    %472 = vmatprep.subr.mxu0 0.0
    %473 = vmatpush1.msra.mxu0 0.0
    %474 = vmatprep.subr.mxu0 0.0
    %475 = vmatpush1.msra.mxu0 0.0
    %476 = vmatprep.subr.mxu0 0.0
    %477 = vmatpush1.msra.mxu0 0.0
    %478 = vmatprep.subr.mxu0 0.0
    %479 = vmatpush1.msra.mxu0 0.0
    %480 = vmatprep.subr.mxu0 0.0
    %481 = vmatpush1.msra.mxu0 0.0
    %482 = vmatprep.subr.mxu0 0.0
    %483 = vmatpush1.msra.mxu0 0.0
    %484 = vmatprep.subr.mxu0 0.0
    %485 = vmatpush1.msra.mxu0 0.0
    %486 = vmatprep.subr.mxu0 0.0
    %487 = vmatpush1.msra.mxu0 0.0
    %488 = vmatprep.subr.mxu0 0.0
    %489 = vmatpush1.msra.mxu0 0.0
    %490 = vmatprep.subr.mxu0 0.0
    %491 = vmatpush1.msra.mxu0 0.0
    %492 = vmatprep.mubr.f32.mxu0 0.0
    %493 = vmatmul.mubr.f32.gmra.mrb[0].mxu0 %v426
    %v494 = vpop.f32.mrb[0].mxu0
    %v495 = vadd.f32 0.0, %v494
    %v496 = vpop.f32.mrb[0].mxu0
    %497 = vdwg.mxu0
    %v499 = vrot.slane %v495, 6
    %v501 = vadd.f32 %v196, %v499
    %v502 = vld [vmem:[#allocation7] sm:$0xff]
    %v503 = vld [vmem:[#allocation7 + $0x8] sm:$0xff]
    %v504 = vld [vmem:[#allocation7 + $0x10] sm:$0xff]
    %v505 = vld [vmem:[#allocation7 + $0x18] sm:$0xff]
    %v506 = vrot.slane %v409, 6
    %507 = vrot.lane.b32.xlu0 %v506, 32
    %v508 = vpop.permute.xlu0 %507
    %v509 = vsel %vm122, %v508, 0
    %511 = vmatprep.subr.mxu0 0.0
    %512 = vmatpush1.msra.mxu0 %v502
    %513 = vmatprep.subr.mxu0 0.0
    %514 = vmatpush1.msra.mxu0 %v503
    %515 = vmatprep.subr.mxu0 0.0
    %516 = vmatpush1.msra.mxu0 %v504
    %517 = vmatprep.subr.mxu0 0.0
    %518 = vmatpush1.msra.mxu0 %v505
    %519 = vmatprep.subr.mxu0 0.0
    %520 = vmatpush1.msra.mxu0 0.0
    %521 = vmatprep.subr.mxu0 0.0
    %522 = vmatpush1.msra.mxu0 0.0
    %523 = vmatprep.subr.mxu0 0.0
    %524 = vmatpush1.msra.mxu0 0.0
    %525 = vmatprep.subr.mxu0 0.0
    %526 = vmatpush1.msra.mxu0 0.0
    %527 = vmatprep.subr.mxu0 0.0
    %528 = vmatpush1.msra.mxu0 0.0
    %529 = vmatprep.subr.mxu0 0.0
    %530 = vmatpush1.msra.mxu0 0.0
    %531 = vmatprep.subr.mxu0 0.0
    %532 = vmatpush1.msra.mxu0 0.0
    %533 = vmatprep.subr.mxu0 0.0
    %534 = vmatpush1.msra.mxu0 0.0
    %535 = vmatprep.subr.mxu0 0.0
    %536 = vmatpush1.msra.mxu0 0.0
    %537 = vmatprep.subr.mxu0 0.0
    %538 = vmatpush1.msra.mxu0 0.0
    %539 = vmatprep.subr.mxu0 0.0
    %540 = vmatpush1.msra.mxu0 0.0
    %541 = vmatprep.subr.mxu0 0.0
    %542 = vmatpush1.msra.mxu0 0.0
    %543 = vmatprep.subr.mxu0 0.0
    %544 = vmatpush1.msra.mxu0 0.0
    %545 = vmatprep.subr.mxu0 0.0
    %546 = vmatpush1.msra.mxu0 0.0
    %547 = vmatprep.subr.mxu0 0.0
    %548 = vmatpush1.msra.mxu0 0.0
    %549 = vmatprep.subr.mxu0 0.0
    %550 = vmatpush1.msra.mxu0 0.0
    %551 = vmatprep.subr.mxu0 0.0
    %552 = vmatpush1.msra.mxu0 0.0
    %553 = vmatprep.subr.mxu0 0.0
    %554 = vmatpush1.msra.mxu0 0.0
    %555 = vmatprep.subr.mxu0 0.0
    %556 = vmatpush1.msra.mxu0 0.0
    %557 = vmatprep.subr.mxu0 0.0
    %558 = vmatpush1.msra.mxu0 0.0
    %559 = vmatprep.subr.mxu0 0.0
    %560 = vmatpush1.msra.mxu0 0.0
    %561 = vmatprep.subr.mxu0 0.0
    %562 = vmatpush1.msra.mxu0 0.0
    %563 = vmatprep.subr.mxu0 0.0
    %564 = vmatpush1.msra.mxu0 0.0
    %565 = vmatprep.subr.mxu0 0.0
    %566 = vmatpush1.msra.mxu0 0.0
    %567 = vmatprep.subr.mxu0 0.0
    %568 = vmatpush1.msra.mxu0 0.0
    %569 = vmatprep.subr.mxu0 0.0
    %570 = vmatpush1.msra.mxu0 0.0
    %571 = vmatprep.subr.mxu0 0.0
    %572 = vmatpush1.msra.mxu0 0.0
    %573 = vmatprep.subr.mxu0 0.0
    %574 = vmatpush1.msra.mxu0 0.0
    %575 = vmatprep.mubr.f32.mxu0 0.0
    %576 = vmatmul.mubr.f32.gmra.mrb[0].mxu0 %v509
    %v577 = vpop.f32.mrb[0].mxu0
    %v578 = vadd.f32 0.0, %v577
    %v579 = vpop.f32.mrb[0].mxu0
    %580 = vdwg.mxu0
    %v582 = vrot.slane %v578, 4
    %v584 = vadd.f32 %v204, %v582
    %v585 = vxor.u32 %v501, 2147483648
    %v586 = vmul.f32 %v585, 1.442695
    %v587 = vpow.pop %v586
    %v588 = vadd.f32 %v587, 1.0
    %v589 = vrcp.pop %v588
    %v590 = vmul.f32 1.0, %v589
    %v591 = vtanh.pop %v501
    %v593 = vrot.slane %v379, 6
    %v595 = vmul.f32 %v590, %v593
    %597 = vrot.lane.b32.xlu0 %v591, 64
    %v598 = vpop.permute.xlu0 %597
    %v600 = vmul.f32 %v590, %v598
    %602 = vrot.lane.b32.xlu0 %v600, 32
    %v603 = vpop.permute.xlu0 %602
    %v605 = vadd.f32 %v595, %v603
    %v606 = vtanh.pop %v605
    %608 = vrot.lane.b32.xlu0 %v606, 64
    %v609 = vpop.permute.xlu0 %608
    %v611 = vmul.f32 %v590, %v609
    %v612 = vxor.u32 %v584, 2147483648
    %v613 = vmul.f32 %v612, 1.442695
    %v614 = vpow.pop %v613
    %v615 = vadd.f32 %v614, 1.0
    %v616 = vrcp.pop %v615
    %v617 = vmul.f32 1.0, %v616
    %v618 = vtanh.pop %v584
    %v620 = vrot.slane %v403, 2
    %v622 = vmul.f32 %v617, %v620
    %624 = vrot.lane.b32.xlu0 %v618, 64
    %v625 = vpop.permute.xlu0 %624
    %v627 = vmul.f32 %v617, %v625
    %629 = vrot.lane.b32.xlu0 %v627, 32
    %v630 = vpop.permute.xlu0 %629
    %v632 = vadd.f32 %v622, %v630
    %v633 = vtanh.pop %v632
    %635 = vrot.lane.b32.xlu0 %v633, 64
    %v636 = vpop.permute.xlu0 %635
    %v638 = vmul.f32 %v617, %v636
    %640 = vrot.lane.b32.xlu0 %v611, 32
    %v641 = vpop.permute.xlu0 %640
    %vm643 = vcmask 257026
    %644 = vst.msk [vmem:[#allocation2] sm:$0xc] %vm643, %v641
    %646 = vrot.lane.b32.xlu0 %v638, 32
    %v647 = vpop.permute.xlu0 %646
    %vm649 = vcmask 259076
    %650 = vst.msk [vmem:[#allocation3 + $0x8] sm:$0x30] %vm649, %v647
    %v651 = vld [vmem:[#allocation4] sm:$0xff]
    %v652 = vld [vmem:[#allocation4 + $0x8] sm:$0xff]
    %v653 = vld [vmem:[#allocation4 + $0x10] sm:$0xff]
    %v654 = vld [vmem:[#allocation4 + $0x18] sm:$0xff]
    %v655 = vrot.slane %v611, 2
    %656 = vrot.lane.b32.xlu0 %v655, 32
    %v657 = vpop.permute.xlu0 %656
    %v658 = vsel %vm122, %v657, 0
    %660 = vmatprep.subr.mxu0 0.0
    %661 = vmatpush1.msra.mxu0 %v651
    %662 = vmatprep.subr.mxu0 0.0
    %663 = vmatpush1.msra.mxu0 %v652
    %664 = vmatprep.subr.mxu0 0.0
    %665 = vmatpush1.msra.mxu0 %v653
    %666 = vmatprep.subr.mxu0 0.0
    %667 = vmatpush1.msra.mxu0 %v654
    %668 = vmatprep.subr.mxu0 0.0
    %669 = vmatpush1.msra.mxu0 0.0
    %670 = vmatprep.subr.mxu0 0.0
    %671 = vmatpush1.msra.mxu0 0.0
    %672 = vmatprep.subr.mxu0 0.0
    %673 = vmatpush1.msra.mxu0 0.0
    %674 = vmatprep.subr.mxu0 0.0
    %675 = vmatpush1.msra.mxu0 0.0
    %676 = vmatprep.subr.mxu0 0.0
    %677 = vmatpush1.msra.mxu0 0.0
    %678 = vmatprep.subr.mxu0 0.0
    %679 = vmatpush1.msra.mxu0 0.0
    %680 = vmatprep.subr.mxu0 0.0
    %681 = vmatpush1.msra.mxu0 0.0
    %682 = vmatprep.subr.mxu0 0.0
    %683 = vmatpush1.msra.mxu0 0.0
    %684 = vmatprep.subr.mxu0 0.0
    %685 = vmatpush1.msra.mxu0 0.0
    %686 = vmatprep.subr.mxu0 0.0
    %687 = vmatpush1.msra.mxu0 0.0
    %688 = vmatprep.subr.mxu0 0.0
    %689 = vmatpush1.msra.mxu0 0.0
    %690 = vmatprep.subr.mxu0 0.0
    %691 = vmatpush1.msra.mxu0 0.0
    %692 = vmatprep.subr.mxu0 0.0
    %693 = vmatpush1.msra.mxu0 0.0
    %694 = vmatprep.subr.mxu0 0.0
    %695 = vmatpush1.msra.mxu0 0.0
    %696 = vmatprep.subr.mxu0 0.0
    %697 = vmatpush1.msra.mxu0 0.0
    %698 = vmatprep.subr.mxu0 0.0
    %699 = vmatpush1.msra.mxu0 0.0
    %700 = vmatprep.subr.mxu0 0.0
    %701 = vmatpush1.msra.mxu0 0.0
    %702 = vmatprep.subr.mxu0 0.0
    %703 = vmatpush1.msra.mxu0 0.0
    %704 = vmatprep.subr.mxu0 0.0
    %705 = vmatpush1.msra.mxu0 0.0
    %706 = vmatprep.subr.mxu0 0.0
    %707 = vmatpush1.msra.mxu0 0.0
    %708 = vmatprep.subr.mxu0 0.0
    %709 = vmatpush1.msra.mxu0 0.0
    %710 = vmatprep.subr.mxu0 0.0
    %711 = vmatpush1.msra.mxu0 0.0
    %712 = vmatprep.subr.mxu0 0.0
    %713 = vmatpush1.msra.mxu0 0.0
    %714 = vmatprep.subr.mxu0 0.0
    %715 = vmatpush1.msra.mxu0 0.0
    %716 = vmatprep.subr.mxu0 0.0
    %717 = vmatpush1.msra.mxu0 0.0
    %718 = vmatprep.subr.mxu0 0.0
    %719 = vmatpush1.msra.mxu0 0.0
    %720 = vmatprep.subr.mxu0 0.0
    %721 = vmatpush1.msra.mxu0 0.0
    %722 = vmatprep.subr.mxu0 0.0
    %723 = vmatpush1.msra.mxu0 0.0
    %724 = vmatprep.mubr.f32.mxu0 0.0
    %725 = vmatmul.mubr.f32.gmra.mrb[0].mxu0 %v658
    %v726 = vpop.f32.mrb[0].mxu0
    %v727 = vadd.f32 0.0, %v726
    %v728 = vpop.f32.mrb[0].mxu0
    %729 = vdwg.mxu0
    %v731 = vrot.slane %v727, 4
    %v733 = vadd.f32 %v196, %v731
    %v734 = vld [vmem:[#allocation7] sm:$0xff]
    %v735 = vld [vmem:[#allocation7 + $0x8] sm:$0xff]
    %v736 = vld [vmem:[#allocation7 + $0x10] sm:$0xff]
    %v737 = vld [vmem:[#allocation7 + $0x18] sm:$0xff]
    %v738 = vrot.slane %v638, 4
    %739 = vrot.lane.b32.xlu0 %v738, 32
    %v740 = vpop.permute.xlu0 %739
    %v741 = vsel %vm122, %v740, 0
    %743 = vmatprep.subr.mxu0 0.0
    %744 = vmatpush1.msra.mxu0 %v734
    %745 = vmatprep.subr.mxu0 0.0
    %746 = vmatpush1.msra.mxu0 %v735
    %747 = vmatprep.subr.mxu0 0.0
    %748 = vmatpush1.msra.mxu0 %v736
    %749 = vmatprep.subr.mxu0 0.0
    %750 = vmatpush1.msra.mxu0 %v737
    %751 = vmatprep.subr.mxu0 0.0
    %752 = vmatpush1.msra.mxu0 0.0
    %753 = vmatprep.subr.mxu0 0.0
    %754 = vmatpush1.msra.mxu0 0.0
    %755 = vmatprep.subr.mxu0 0.0
    %756 = vmatpush1.msra.mxu0 0.0
    %757 = vmatprep.subr.mxu0 0.0
    %758 = vmatpush1.msra.mxu0 0.0
    %759 = vmatprep.subr.mxu0 0.0
    %760 = vmatpush1.msra.mxu0 0.0
    %761 = vmatprep.subr.mxu0 0.0
    %762 = vmatpush1.msra.mxu0 0.0
    %763 = vmatprep.subr.mxu0 0.0
    %764 = vmatpush1.msra.mxu0 0.0
    %765 = vmatprep.subr.mxu0 0.0
    %766 = vmatpush1.msra.mxu0 0.0
    %767 = vmatprep.subr.mxu0 0.0
    %768 = vmatpush1.msra.mxu0 0.0
    %769 = vmatprep.subr.mxu0 0.0
    %770 = vmatpush1.msra.mxu0 0.0
    %771 = vmatprep.subr.mxu0 0.0
    %772 = vmatpush1.msra.mxu0 0.0
    %773 = vmatprep.subr.mxu0 0.0
    %774 = vmatpush1.msra.mxu0 0.0
    %775 = vmatprep.subr.mxu0 0.0
    %776 = vmatpush1.msra.mxu0 0.0
    %777 = vmatprep.subr.mxu0 0.0
    %778 = vmatpush1.msra.mxu0 0.0
    %779 = vmatprep.subr.mxu0 0.0
    %780 = vmatpush1.msra.mxu0 0.0
    %781 = vmatprep.subr.mxu0 0.0
    %782 = vmatpush1.msra.mxu0 0.0
    %783 = vmatprep.subr.mxu0 0.0
    %784 = vmatpush1.msra.mxu0 0.0
    %785 = vmatprep.subr.mxu0 0.0
    %786 = vmatpush1.msra.mxu0 0.0
    %787 = vmatprep.subr.mxu0 0.0
    %788 = vmatpush1.msra.mxu0 0.0
    %789 = vmatprep.subr.mxu0 0.0
    %790 = vmatpush1.msra.mxu0 0.0
    %791 = vmatprep.subr.mxu0 0.0
    %792 = vmatpush1.msra.mxu0 0.0
    %793 = vmatprep.subr.mxu0 0.0
    %794 = vmatpush1.msra.mxu0 0.0
    %795 = vmatprep.subr.mxu0 0.0
    %796 = vmatpush1.msra.mxu0 0.0
    %797 = vmatprep.subr.mxu0 0.0
    %798 = vmatpush1.msra.mxu0 0.0
    %799 = vmatprep.subr.mxu0 0.0
    %800 = vmatpush1.msra.mxu0 0.0
    %801 = vmatprep.subr.mxu0 0.0
    %802 = vmatpush1.msra.mxu0 0.0
    %803 = vmatprep.subr.mxu0 0.0
    %804 = vmatpush1.msra.mxu0 0.0
    %805 = vmatprep.subr.mxu0 0.0
    %806 = vmatpush1.msra.mxu0 0.0
    %807 = vmatprep.mubr.f32.mxu0 0.0
    %808 = vmatmul.mubr.f32.gmra.mrb[0].mxu0 %v741
    %v809 = vpop.f32.mrb[0].mxu0
    %v810 = vadd.f32 0.0, %v809
    %v811 = vpop.f32.mrb[0].mxu0
    %812 = vdwg.mxu0
    %v814 = vrot.slane %v810, 6
    %v816 = vadd.f32 %v204, %v814
    %v817 = vxor.u32 %v733, 2147483648
    %v818 = vmul.f32 %v817, 1.442695
    %v819 = vpow.pop %v818
    %v820 = vadd.f32 %v819, 1.0
    %v821 = vrcp.pop %v820
    %v822 = vmul.f32 1.0, %v821
    %v823 = vtanh.pop %v733
    %v825 = vrot.slane %v605, 6
    %v827 = vmul.f32 %v822, %v825
    %829 = vrot.lane.b32.xlu0 %v823, 64
    %v830 = vpop.permute.xlu0 %829
    %v832 = vmul.f32 %v822, %v830
    %834 = vrot.lane.b32.xlu0 %v832, 32
    %v835 = vpop.permute.xlu0 %834
    %v837 = vadd.f32 %v827, %v835
    %v838 = vtanh.pop %v837
    %840 = vrot.lane.b32.xlu0 %v838, 64
    %v841 = vpop.permute.xlu0 %840
    %v843 = vmul.f32 %v822, %v841
    %v844 = vxor.u32 %v816, 2147483648
    %v845 = vmul.f32 %v844, 1.442695
    %v846 = vpow.pop %v845
    %v847 = vadd.f32 %v846, 1.0
    %v848 = vrcp.pop %v847
    %v849 = vmul.f32 1.0, %v848
    %v850 = vtanh.pop %v816
    %v852 = vrot.slane %v632, 2
    %v854 = vmul.f32 %v849, %v852
    %856 = vrot.lane.b32.xlu0 %v850, 64
    %v857 = vpop.permute.xlu0 %856
    %v859 = vmul.f32 %v849, %v857
    %861 = vrot.lane.b32.xlu0 %v859, 32
    %v862 = vpop.permute.xlu0 %861
    %v864 = vadd.f32 %v854, %v862
    %v865 = vtanh.pop %v864
    %867 = vrot.lane.b32.xlu0 %v865, 64
    %v868 = vpop.permute.xlu0 %867
    %v870 = vmul.f32 %v849, %v868
    %872 = vrot.lane.b32.xlu0 %v843, 32
    %v873 = vpop.permute.xlu0 %872
    %875 = vst.msk [vmem:[#allocation2] sm:$0x30] %vm649, %v873
    %877 = vrot.lane.b32.xlu0 %v870, 32
    %v878 = vpop.permute.xlu0 %877
    %880 = vst.msk [vmem:[#allocation3 + $0x8] sm:$0xc] %vm643, %v878
    %v881 = vld [vmem:[#allocation4] sm:$0xff]
    %v882 = vld [vmem:[#allocation4 + $0x8] sm:$0xff]
    %v883 = vld [vmem:[#allocation4 + $0x10] sm:$0xff]
    %v884 = vld [vmem:[#allocation4 + $0x18] sm:$0xff]
    %v885 = vrot.slane %v843, 4
    %886 = vrot.lane.b32.xlu0 %v885, 32
    %v887 = vpop.permute.xlu0 %886
    %v888 = vsel %vm122, %v887, 0
    %890 = vmatprep.subr.mxu0 0.0
    %891 = vmatpush1.msra.mxu0 %v881
    %892 = vmatprep.subr.mxu0 0.0
    %893 = vmatpush1.msra.mxu0 %v882
    %894 = vmatprep.subr.mxu0 0.0
    %895 = vmatpush1.msra.mxu0 %v883
    %896 = vmatprep.subr.mxu0 0.0
    %897 = vmatpush1.msra.mxu0 %v884
    %898 = vmatprep.subr.mxu0 0.0
    %899 = vmatpush1.msra.mxu0 0.0
    %900 = vmatprep.subr.mxu0 0.0
    %901 = vmatpush1.msra.mxu0 0.0
    %902 = vmatprep.subr.mxu0 0.0
    %903 = vmatpush1.msra.mxu0 0.0
    %904 = vmatprep.subr.mxu0 0.0
    %905 = vmatpush1.msra.mxu0 0.0
    %906 = vmatprep.subr.mxu0 0.0
    %907 = vmatpush1.msra.mxu0 0.0
    %908 = vmatprep.subr.mxu0 0.0
    %909 = vmatpush1.msra.mxu0 0.0
    %910 = vmatprep.subr.mxu0 0.0
    %911 = vmatpush1.msra.mxu0 0.0
    %912 = vmatprep.subr.mxu0 0.0
    %913 = vmatpush1.msra.mxu0 0.0
    %914 = vmatprep.subr.mxu0 0.0
    %915 = vmatpush1.msra.mxu0 0.0
    %916 = vmatprep.subr.mxu0 0.0
    %917 = vmatpush1.msra.mxu0 0.0
    %918 = vmatprep.subr.mxu0 0.0
    %919 = vmatpush1.msra.mxu0 0.0
    %920 = vmatprep.subr.mxu0 0.0
    %921 = vmatpush1.msra.mxu0 0.0
    %922 = vmatprep.subr.mxu0 0.0
    %923 = vmatpush1.msra.mxu0 0.0
    %924 = vmatprep.subr.mxu0 0.0
    %925 = vmatpush1.msra.mxu0 0.0
    %926 = vmatprep.subr.mxu0 0.0
    %927 = vmatpush1.msra.mxu0 0.0
    %928 = vmatprep.subr.mxu0 0.0
    %929 = vmatpush1.msra.mxu0 0.0
    %930 = vmatprep.subr.mxu0 0.0
    %931 = vmatpush1.msra.mxu0 0.0
    %932 = vmatprep.subr.mxu0 0.0
    %933 = vmatpush1.msra.mxu0 0.0
    %934 = vmatprep.subr.mxu0 0.0
    %935 = vmatpush1.msra.mxu0 0.0
    %936 = vmatprep.subr.mxu0 0.0
    %937 = vmatpush1.msra.mxu0 0.0
    %938 = vmatprep.subr.mxu0 0.0
    %939 = vmatpush1.msra.mxu0 0.0
    %940 = vmatprep.subr.mxu0 0.0
    %941 = vmatpush1.msra.mxu0 0.0
    %942 = vmatprep.subr.mxu0 0.0
    %943 = vmatpush1.msra.mxu0 0.0
    %944 = vmatprep.subr.mxu0 0.0
    %945 = vmatpush1.msra.mxu0 0.0
    %946 = vmatprep.subr.mxu0 0.0
    %947 = vmatpush1.msra.mxu0 0.0
    %948 = vmatprep.subr.mxu0 0.0
    %949 = vmatpush1.msra.mxu0 0.0
    %950 = vmatprep.subr.mxu0 0.0
    %951 = vmatpush1.msra.mxu0 0.0
    %952 = vmatprep.subr.mxu0 0.0
    %953 = vmatpush1.msra.mxu0 0.0
    %954 = vmatprep.mubr.f32.mxu0 0.0
    %955 = vmatmul.mubr.f32.gmra.mrb[0].mxu0 %v888
    %v956 = vpop.f32.mrb[0].mxu0
    %v957 = vadd.f32 0.0, %v956
    %v958 = vpop.f32.mrb[0].mxu0
    %959 = vdwg.mxu0
    %v961 = vrot.slane %v957, 2
    %v963 = vadd.f32 %v196, %v961
    %v964 = vld [vmem:[#allocation7] sm:$0xff]
    %v965 = vld [vmem:[#allocation7 + $0x8] sm:$0xff]
    %v966 = vld [vmem:[#allocation7 + $0x10] sm:$0xff]
    %v967 = vld [vmem:[#allocation7 + $0x18] sm:$0xff]
    %v968 = vrot.slane %v870, 2
    %969 = vrot.lane.b32.xlu0 %v968, 32
    %v970 = vpop.permute.xlu0 %969
    %v971 = vsel %vm122, %v970, 0
    %973 = vmatprep.subr.mxu0 0.0
    %974 = vmatpush1.msra.mxu0 %v964
    %975 = vmatprep.subr.mxu0 0.0
    %976 = vmatpush1.msra.mxu0 %v965
    %977 = vmatprep.subr.mxu0 0.0
    %978 = vmatpush1.msra.mxu0 %v966
    %979 = vmatprep.subr.mxu0 0.0
    %980 = vmatpush1.msra.mxu0 %v967
    %981 = vmatprep.subr.mxu0 0.0
    %982 = vmatpush1.msra.mxu0 0.0
    %983 = vmatprep.subr.mxu0 0.0
    %984 = vmatpush1.msra.mxu0 0.0
    %985 = vmatprep.subr.mxu0 0.0
    %986 = vmatpush1.msra.mxu0 0.0
    %987 = vmatprep.subr.mxu0 0.0
    %988 = vmatpush1.msra.mxu0 0.0
    %989 = vmatprep.subr.mxu0 0.0
    %990 = vmatpush1.msra.mxu0 0.0
    %991 = vmatprep.subr.mxu0 0.0
    %992 = vmatpush1.msra.mxu0 0.0
    %993 = vmatprep.subr.mxu0 0.0
    %994 = vmatpush1.msra.mxu0 0.0
    %995 = vmatprep.subr.mxu0 0.0
    %996 = vmatpush1.msra.mxu0 0.0
    %997 = vmatprep.subr.mxu0 0.0
    %998 = vmatpush1.msra.mxu0 0.0
    %999 = vmatprep.subr.mxu0 0.0
    %1000 = vmatpush1.msra.mxu0 0.0
    %1001 = vmatprep.subr.mxu0 0.0
    %1002 = vmatpush1.msra.mxu0 0.0
    %1003 = vmatprep.subr.mxu0 0.0
    %1004 = vmatpush1.msra.mxu0 0.0
    %1005 = vmatprep.subr.mxu0 0.0
    %1006 = vmatpush1.msra.mxu0 0.0
    %1007 = vmatprep.subr.mxu0 0.0
    %1008 = vmatpush1.msra.mxu0 0.0
    %1009 = vmatprep.subr.mxu0 0.0
    %1010 = vmatpush1.msra.mxu0 0.0
    %1011 = vmatprep.subr.mxu0 0.0
    %1012 = vmatpush1.msra.mxu0 0.0
    %1013 = vmatprep.subr.mxu0 0.0
    %1014 = vmatpush1.msra.mxu0 0.0
    %1015 = vmatprep.subr.mxu0 0.0
    %1016 = vmatpush1.msra.mxu0 0.0
    %1017 = vmatprep.subr.mxu0 0.0
    %1018 = vmatpush1.msra.mxu0 0.0
    %1019 = vmatprep.subr.mxu0 0.0
    %1020 = vmatpush1.msra.mxu0 0.0
    %1021 = vmatprep.subr.mxu0 0.0
    %1022 = vmatpush1.msra.mxu0 0.0
    %1023 = vmatprep.subr.mxu0 0.0
    %1024 = vmatpush1.msra.mxu0 0.0
    %1025 = vmatprep.subr.mxu0 0.0
    %1026 = vmatpush1.msra.mxu0 0.0
    %1027 = vmatprep.subr.mxu0 0.0
    %1028 = vmatpush1.msra.mxu0 0.0
    %1029 = vmatprep.subr.mxu0 0.0
    %1030 = vmatpush1.msra.mxu0 0.0
    %1031 = vmatprep.subr.mxu0 0.0
    %1032 = vmatpush1.msra.mxu0 0.0
    %1033 = vmatprep.subr.mxu0 0.0
    %1034 = vmatpush1.msra.mxu0 0.0
    %1035 = vmatprep.subr.mxu0 0.0
    %1036 = vmatpush1.msra.mxu0 0.0
    %1037 = vmatprep.mubr.f32.mxu0 0.0
    %1038 = vmatmul.mubr.f32.gmra.mrb[0].mxu0 %v971
    %v1039 = vpop.f32.mrb[0].mxu0
    %v1040 = vadd.f32 0.0, %v1039
    %v1041 = vpop.f32.mrb[0].mxu0
    %1042 = vdwg.mxu0
    %v1043 = vadd.f32 %v204, %v1040
    %v1044 = vxor.u32 %v963, 2147483648
    %v1045 = vmul.f32 %v1044, 1.442695
    %v1046 = vpow.pop %v1045
    %v1047 = vadd.f32 %v1046, 1.0
    %v1048 = vrcp.pop %v1047
    %v1049 = vmul.f32 1.0, %v1048
    %v1050 = vtanh.pop %v963
    %v1052 = vrot.slane %v837, 6
    %v1054 = vmul.f32 %v1049, %v1052
    %1056 = vrot.lane.b32.xlu0 %v1050, 64
    %v1057 = vpop.permute.xlu0 %1056
    %v1059 = vmul.f32 %v1049, %v1057
    %1061 = vrot.lane.b32.xlu0 %v1059, 32
    %v1062 = vpop.permute.xlu0 %1061
    %v1064 = vadd.f32 %v1054, %v1062
    %v1065 = vtanh.pop %v1064
    %1067 = vrot.lane.b32.xlu0 %v1065, 64
    %v1068 = vpop.permute.xlu0 %1067
    %v1070 = vmul.f32 %v1049, %v1068
    %v1071 = vxor.u32 %v1043, 2147483648
    %v1072 = vmul.f32 %v1071, 1.442695
    %v1073 = vpow.pop %v1072
    %v1074 = vadd.f32 %v1073, 1.0
    %v1075 = vrcp.pop %v1074
    %v1076 = vmul.f32 1.0, %v1075
    %v1077 = vtanh.pop %v1043
    %v1079 = vrot.slane %v864, 2
    %v1081 = vmul.f32 %v1076, %v1079
    %1083 = vrot.lane.b32.xlu0 %v1077, 64
    %v1084 = vpop.permute.xlu0 %1083
    %v1086 = vmul.f32 %v1076, %v1084
    %1088 = vrot.lane.b32.xlu0 %v1086, 32
    %v1089 = vpop.permute.xlu0 %1088
    %v1091 = vadd.f32 %v1081, %v1089
    %v1092 = vtanh.pop %v1091
    %1094 = vrot.lane.b32.xlu0 %v1092, 64
    %v1095 = vpop.permute.xlu0 %1094
    %v1097 = vmul.f32 %v1076, %v1095
    %1099 = vrot.lane.b32.xlu0 %v1070, 32
    %v1100 = vpop.permute.xlu0 %1099
    %1102 = vst.msk [vmem:[#allocation2] sm:$0xc0] %vm420, %v1100
    %1104 = vrot.lane.b32.xlu0 %v1097, 32
    %v1105 = vpop.permute.xlu0 %1104
    %1107 = vst.msk [vmem:[#allocation3 + $0x8] sm:$0x3] %vm414, %v1105
    %v1108 = vld [vmem:[#allocation4] sm:$0xff]
    %v1109 = vld [vmem:[#allocation4 + $0x8] sm:$0xff]
    %v1110 = vld [vmem:[#allocation4 + $0x10] sm:$0xff]
    %v1111 = vld [vmem:[#allocation4 + $0x18] sm:$0xff]
    %v1112 = vrot.slane %v1070, 6
    %1113 = vrot.lane.b32.xlu0 %v1112, 32
    %v1114 = vpop.permute.xlu0 %1113
    %v1115 = vsel %vm122, %v1114, 0
    %1117 = vmatprep.subr.mxu0 0.0
    %1118 = vmatpush1.msra.mxu0 %v1108
    %1119 = vmatprep.subr.mxu0 0.0
    %1120 = vmatpush1.msra.mxu0 %v1109
    %1121 = vmatprep.subr.mxu0 0.0
    %1122 = vmatpush1.msra.mxu0 %v1110
    %1123 = vmatprep.subr.mxu0 0.0
    %1124 = vmatpush1.msra.mxu0 %v1111
    %1125 = vmatprep.subr.mxu0 0.0
    %1126 = vmatpush1.msra.mxu0 0.0
    %1127 = vmatprep.subr.mxu0 0.0
    %1128 = vmatpush1.msra.mxu0 0.0
    %1129 = vmatprep.subr.mxu0 0.0
    %1130 = vmatpush1.msra.mxu0 0.0
    %1131 = vmatprep.subr.mxu0 0.0
    %1132 = vmatpush1.msra.mxu0 0.0
    %1133 = vmatprep.subr.mxu0 0.0
    %1134 = vmatpush1.msra.mxu0 0.0
    %1135 = vmatprep.subr.mxu0 0.0
    %1136 = vmatpush1.msra.mxu0 0.0
    %1137 = vmatprep.subr.mxu0 0.0
    %1138 = vmatpush1.msra.mxu0 0.0
    %1139 = vmatprep.subr.mxu0 0.0
    %1140 = vmatpush1.msra.mxu0 0.0
    %1141 = vmatprep.subr.mxu0 0.0
    %1142 = vmatpush1.msra.mxu0 0.0
    %1143 = vmatprep.subr.mxu0 0.0
    %1144 = vmatpush1.msra.mxu0 0.0
    %1145 = vmatprep.subr.mxu0 0.0
    %1146 = vmatpush1.msra.mxu0 0.0
    %1147 = vmatprep.subr.mxu0 0.0
    %1148 = vmatpush1.msra.mxu0 0.0
    %1149 = vmatprep.subr.mxu0 0.0
    %1150 = vmatpush1.msra.mxu0 0.0
    %1151 = vmatprep.subr.mxu0 0.0
    %1152 = vmatpush1.msra.mxu0 0.0
    %1153 = vmatprep.subr.mxu0 0.0
    %1154 = vmatpush1.msra.mxu0 0.0
    %1155 = vmatprep.subr.mxu0 0.0
    %1156 = vmatpush1.msra.mxu0 0.0
    %1157 = vmatprep.subr.mxu0 0.0
    %1158 = vmatpush1.msra.mxu0 0.0
    %1159 = vmatprep.subr.mxu0 0.0
    %1160 = vmatpush1.msra.mxu0 0.0
    %1161 = vmatprep.subr.mxu0 0.0
    %1162 = vmatpush1.msra.mxu0 0.0
    %1163 = vmatprep.subr.mxu0 0.0
    %1164 = vmatpush1.msra.mxu0 0.0
    %1165 = vmatprep.subr.mxu0 0.0
    %1166 = vmatpush1.msra.mxu0 0.0
    %1167 = vmatprep.subr.mxu0 0.0
    %1168 = vmatpush1.msra.mxu0 0.0
    %1169 = vmatprep.subr.mxu0 0.0
    %1170 = vmatpush1.msra.mxu0 0.0
    %1171 = vmatprep.subr.mxu0 0.0
    %1172 = vmatpush1.msra.mxu0 0.0
    %1173 = vmatprep.subr.mxu0 0.0
    %1174 = vmatpush1.msra.mxu0 0.0
    %1175 = vmatprep.subr.mxu0 0.0
    %1176 = vmatpush1.msra.mxu0 0.0
    %1177 = vmatprep.subr.mxu0 0.0
    %1178 = vmatpush1.msra.mxu0 0.0
    %1179 = vmatprep.subr.mxu0 0.0
    %1180 = vmatpush1.msra.mxu0 0.0
    %1181 = vmatprep.mubr.f32.mxu0 0.0
    %1182 = vmatmul.mubr.f32.gmra.mrb[0].mxu0 %v1115
    %v1183 = vpop.f32.mrb[0].mxu0
    %v1184 = vadd.f32 0.0, %v1183
    %v1185 = vpop.f32.mrb[0].mxu0
    %1186 = vdwg.mxu0
    %v1187 = vadd.f32 %v202, %v1184
    %v1188 = vld [vmem:[#allocation7] sm:$0xff]
    %v1189 = vld [vmem:[#allocation7 + $0x8] sm:$0xff]
    %v1190 = vld [vmem:[#allocation7 + $0x10] sm:$0xff]
    %v1191 = vld [vmem:[#allocation7 + $0x18] sm:$0xff]
    %v1192 = vsel %vm122, %v1105, 0
    %1194 = vmatprep.subr.mxu0 0.0
    %1195 = vmatpush1.msra.mxu0 %v1188
    %1196 = vmatprep.subr.mxu0 0.0
    %1197 = vmatpush1.msra.mxu0 %v1189
    %1198 = vmatprep.subr.mxu0 0.0
    %1199 = vmatpush1.msra.mxu0 %v1190
    %1200 = vmatprep.subr.mxu0 0.0
    %1201 = vmatpush1.msra.mxu0 %v1191
    %1202 = vmatprep.subr.mxu0 0.0
    %1203 = vmatpush1.msra.mxu0 0.0
    %1204 = vmatprep.subr.mxu0 0.0
    %1205 = vmatpush1.msra.mxu0 0.0
    %1206 = vmatprep.subr.mxu0 0.0
    %1207 = vmatpush1.msra.mxu0 0.0
    %1208 = vmatprep.subr.mxu0 0.0
    %1209 = vmatpush1.msra.mxu0 0.0
    %1210 = vmatprep.subr.mxu0 0.0
    %1211 = vmatpush1.msra.mxu0 0.0
    %1212 = vmatprep.subr.mxu0 0.0
    %1213 = vmatpush1.msra.mxu0 0.0
    %1214 = vmatprep.subr.mxu0 0.0
    %1215 = vmatpush1.msra.mxu0 0.0
    %1216 = vmatprep.subr.mxu0 0.0
    %1217 = vmatpush1.msra.mxu0 0.0
    %1218 = vmatprep.subr.mxu0 0.0
    %1219 = vmatpush1.msra.mxu0 0.0
    %1220 = vmatprep.subr.mxu0 0.0
    %1221 = vmatpush1.msra.mxu0 0.0
    %1222 = vmatprep.subr.mxu0 0.0
    %1223 = vmatpush1.msra.mxu0 0.0
    %1224 = vmatprep.subr.mxu0 0.0
    %1225 = vmatpush1.msra.mxu0 0.0
    %1226 = vmatprep.subr.mxu0 0.0
    %1227 = vmatpush1.msra.mxu0 0.0
    %1228 = vmatprep.subr.mxu0 0.0
    %1229 = vmatpush1.msra.mxu0 0.0
    %1230 = vmatprep.subr.mxu0 0.0
    %1231 = vmatpush1.msra.mxu0 0.0
    %1232 = vmatprep.subr.mxu0 0.0
    %1233 = vmatpush1.msra.mxu0 0.0
    %1234 = vmatprep.subr.mxu0 0.0
    %1235 = vmatpush1.msra.mxu0 0.0
    %1236 = vmatprep.subr.mxu0 0.0
    %1237 = vmatpush1.msra.mxu0 0.0
    %1238 = vmatprep.subr.mxu0 0.0
    %1239 = vmatpush1.msra.mxu0 0.0
    %1240 = vmatprep.subr.mxu0 0.0
    %1241 = vmatpush1.msra.mxu0 0.0
    %1242 = vmatprep.subr.mxu0 0.0
    %1243 = vmatpush1.msra.mxu0 0.0
    %1244 = vmatprep.subr.mxu0 0.0
    %1245 = vmatpush1.msra.mxu0 0.0
    %1246 = vmatprep.subr.mxu0 0.0
    %1247 = vmatpush1.msra.mxu0 0.0
    %1248 = vmatprep.subr.mxu0 0.0
    %1249 = vmatpush1.msra.mxu0 0.0
    %1250 = vmatprep.subr.mxu0 0.0
    %1251 = vmatpush1.msra.mxu0 0.0
    %1252 = vmatprep.subr.mxu0 0.0
    %1253 = vmatpush1.msra.mxu0 0.0
    %1254 = vmatprep.subr.mxu0 0.0
    %1255 = vmatpush1.msra.mxu0 0.0
    %1256 = vmatprep.subr.mxu0 0.0
    %1257 = vmatpush1.msra.mxu0 0.0
    %1258 = vmatprep.mubr.f32.mxu0 0.0
    %1259 = vmatmul.mubr.f32.gmra.mrb[0].mxu0 %v1192
    %v1260 = vpop.f32.mrb[0].mxu0
    %v1261 = vadd.f32 0.0, %v1260
    %v1262 = vpop.f32.mrb[0].mxu0
    %1263 = vdwg.mxu0
    %v1265 = vrot.slane %v1261, 2
    %v1267 = vadd.f32 %v198, %v1265
    %v1268 = vxor.u32 %v1187, 2147483648
    %v1269 = vmul.f32 %v1268, 1.442695
    %v1270 = vpow.pop %v1269
    %v1271 = vadd.f32 %v1270, 1.0
    %v1272 = vrcp.pop %v1271
    %v1273 = vmul.f32 1.0, %v1272
    %v1274 = vtanh.pop %v1187
    %v1276 = vrot.slane %v1064, 6
    %v1278 = vmul.f32 %v1273, %v1276
    %1280 = vrot.lane.b32.xlu0 %v1274, 64
    %v1281 = vpop.permute.xlu0 %1280
    %v1283 = vmul.f32 %v1273, %v1281
    %1285 = vrot.lane.b32.xlu0 %v1283, 32
    %v1286 = vpop.permute.xlu0 %1285
    %v1288 = vadd.f32 %v1278, %v1286
    %v1289 = vtanh.pop %v1288
    %1291 = vrot.lane.b32.xlu0 %v1289, 64
    %v1292 = vpop.permute.xlu0 %1291
    %v1294 = vmul.f32 %v1273, %v1292
    %v1295 = vxor.u32 %v1267, 2147483648
    %v1296 = vmul.f32 %v1295, 1.442695
    %v1297 = vpow.pop %v1296
    %v1298 = vadd.f32 %v1297, 1.0
    %v1299 = vrcp.pop %v1298
    %v1300 = vmul.f32 1.0, %v1299
    %v1301 = vtanh.pop %v1267
    %v1303 = vrot.slane %v1091, 2
    %v1305 = vmul.f32 %v1300, %v1303
    %1307 = vrot.lane.b32.xlu0 %v1301, 64
    %v1308 = vpop.permute.xlu0 %1307
    %v1310 = vmul.f32 %v1300, %v1308
    %1312 = vrot.lane.b32.xlu0 %v1310, 32
    %v1313 = vpop.permute.xlu0 %1312
    %v1315 = vadd.f32 %v1305, %v1313
    %v1316 = vtanh.pop %v1315
    %1318 = vrot.lane.b32.xlu0 %v1316, 64
    %v1319 = vpop.permute.xlu0 %1318
    %v1321 = vmul.f32 %v1300, %v1319
    %1323 = vrot.lane.b32.xlu0 %v1294, 32
    %v1324 = vpop.permute.xlu0 %1323
    %1326 = vst.msk [vmem:[#allocation2 + $0x8] sm:$0x3] %vm414, %v1324
    %1328 = vrot.lane.b32.xlu0 %v1321, 32
    %v1329 = vpop.permute.xlu0 %1328
    %1331 = vst.msk [vmem:[#allocation3] sm:$0xc0] %vm420, %v1329
    %v1332 = vld [vmem:[#allocation4] sm:$0xff]
    %v1333 = vld [vmem:[#allocation4 + $0x8] sm:$0xff]
    %v1334 = vld [vmem:[#allocation4 + $0x10] sm:$0xff]
    %v1335 = vld [vmem:[#allocation4 + $0x18] sm:$0xff]
    %v1336 = vsel %vm122, %v1324, 0
    %1338 = vmatprep.subr.mxu0 0.0
    %1339 = vmatpush1.msra.mxu0 %v1332
    %1340 = vmatprep.subr.mxu0 0.0
    %1341 = vmatpush1.msra.mxu0 %v1333
    %1342 = vmatprep.subr.mxu0 0.0
    %1343 = vmatpush1.msra.mxu0 %v1334
    %1344 = vmatprep.subr.mxu0 0.0
    %1345 = vmatpush1.msra.mxu0 %v1335
    %1346 = vmatprep.subr.mxu0 0.0
    %1347 = vmatpush1.msra.mxu0 0.0
    %1348 = vmatprep.subr.mxu0 0.0
    %1349 = vmatpush1.msra.mxu0 0.0
    %1350 = vmatprep.subr.mxu0 0.0
    %1351 = vmatpush1.msra.mxu0 0.0
    %1352 = vmatprep.subr.mxu0 0.0
    %1353 = vmatpush1.msra.mxu0 0.0
    %1354 = vmatprep.subr.mxu0 0.0
    %1355 = vmatpush1.msra.mxu0 0.0
    %1356 = vmatprep.subr.mxu0 0.0
    %1357 = vmatpush1.msra.mxu0 0.0
    %1358 = vmatprep.subr.mxu0 0.0
    %1359 = vmatpush1.msra.mxu0 0.0
    %1360 = vmatprep.subr.mxu0 0.0
    %1361 = vmatpush1.msra.mxu0 0.0
    %1362 = vmatprep.subr.mxu0 0.0
    %1363 = vmatpush1.msra.mxu0 0.0
    %1364 = vmatprep.subr.mxu0 0.0
    %1365 = vmatpush1.msra.mxu0 0.0
    %1366 = vmatprep.subr.mxu0 0.0
    %1367 = vmatpush1.msra.mxu0 0.0
    %1368 = vmatprep.subr.mxu0 0.0
    %1369 = vmatpush1.msra.mxu0 0.0
    %1370 = vmatprep.subr.mxu0 0.0
    %1371 = vmatpush1.msra.mxu0 0.0
    %1372 = vmatprep.subr.mxu0 0.0
    %1373 = vmatpush1.msra.mxu0 0.0
    %1374 = vmatprep.subr.mxu0 0.0
    %1375 = vmatpush1.msra.mxu0 0.0
    %1376 = vmatprep.subr.mxu0 0.0
    %1377 = vmatpush1.msra.mxu0 0.0
    %1378 = vmatprep.subr.mxu0 0.0
    %1379 = vmatpush1.msra.mxu0 0.0
    %1380 = vmatprep.subr.mxu0 0.0
    %1381 = vmatpush1.msra.mxu0 0.0
    %1382 = vmatprep.subr.mxu0 0.0
    %1383 = vmatpush1.msra.mxu0 0.0
    %1384 = vmatprep.subr.mxu0 0.0
    %1385 = vmatpush1.msra.mxu0 0.0
    %1386 = vmatprep.subr.mxu0 0.0
    %1387 = vmatpush1.msra.mxu0 0.0
    %1388 = vmatprep.subr.mxu0 0.0
    %1389 = vmatpush1.msra.mxu0 0.0
    %1390 = vmatprep.subr.mxu0 0.0
    %1391 = vmatpush1.msra.mxu0 0.0
    %1392 = vmatprep.subr.mxu0 0.0
    %1393 = vmatpush1.msra.mxu0 0.0
    %1394 = vmatprep.subr.mxu0 0.0
    %1395 = vmatpush1.msra.mxu0 0.0
    %1396 = vmatprep.subr.mxu0 0.0
    %1397 = vmatpush1.msra.mxu0 0.0
    %1398 = vmatprep.subr.mxu0 0.0
    %1399 = vmatpush1.msra.mxu0 0.0
    %1400 = vmatprep.subr.mxu0 0.0
    %1401 = vmatpush1.msra.mxu0 0.0
    %1402 = vmatprep.mubr.f32.mxu0 0.0
    %1403 = vmatmul.mubr.f32.gmra.mrb[0].mxu0 %v1336
    %v1404 = vpop.f32.mrb[0].mxu0
    %v1405 = vadd.f32 0.0, %v1404
    %v1406 = vpop.f32.mrb[0].mxu0
    %1407 = vdwg.mxu0
    %v1409 = vrot.slane %v1405, 6
    %v1411 = vadd.f32 %v202, %v1409
    %v1412 = vld [vmem:[#allocation7] sm:$0xff]
    %v1413 = vld [vmem:[#allocation7 + $0x8] sm:$0xff]
    %v1414 = vld [vmem:[#allocation7 + $0x10] sm:$0xff]
    %v1415 = vld [vmem:[#allocation7 + $0x18] sm:$0xff]
    %v1416 = vrot.slane %v1321, 6
    %1417 = vrot.lane.b32.xlu0 %v1416, 32
    %v1418 = vpop.permute.xlu0 %1417
    %v1419 = vsel %vm122, %v1418, 0
    %1421 = vmatprep.subr.mxu0 0.0
    %1422 = vmatpush1.msra.mxu0 %v1412
    %1423 = vmatprep.subr.mxu0 0.0
    %1424 = vmatpush1.msra.mxu0 %v1413
    %1425 = vmatprep.subr.mxu0 0.0
    %1426 = vmatpush1.msra.mxu0 %v1414
    %1427 = vmatprep.subr.mxu0 0.0
    %1428 = vmatpush1.msra.mxu0 %v1415
    %1429 = vmatprep.subr.mxu0 0.0
    %1430 = vmatpush1.msra.mxu0 0.0
    %1431 = vmatprep.subr.mxu0 0.0
    %1432 = vmatpush1.msra.mxu0 0.0
    %1433 = vmatprep.subr.mxu0 0.0
    %1434 = vmatpush1.msra.mxu0 0.0
    %1435 = vmatprep.subr.mxu0 0.0
    %1436 = vmatpush1.msra.mxu0 0.0
    %1437 = vmatprep.subr.mxu0 0.0
    %1438 = vmatpush1.msra.mxu0 0.0
    %1439 = vmatprep.subr.mxu0 0.0
    %1440 = vmatpush1.msra.mxu0 0.0
    %1441 = vmatprep.subr.mxu0 0.0
    %1442 = vmatpush1.msra.mxu0 0.0
    %1443 = vmatprep.subr.mxu0 0.0
    %1444 = vmatpush1.msra.mxu0 0.0
    %1445 = vmatprep.subr.mxu0 0.0
    %1446 = vmatpush1.msra.mxu0 0.0
    %1447 = vmatprep.subr.mxu0 0.0
    %1448 = vmatpush1.msra.mxu0 0.0
    %1449 = vmatprep.subr.mxu0 0.0
    %1450 = vmatpush1.msra.mxu0 0.0
    %1451 = vmatprep.subr.mxu0 0.0
    %1452 = vmatpush1.msra.mxu0 0.0
    %1453 = vmatprep.subr.mxu0 0.0
    %1454 = vmatpush1.msra.mxu0 0.0
    %1455 = vmatprep.subr.mxu0 0.0
    %1456 = vmatpush1.msra.mxu0 0.0
    %1457 = vmatprep.subr.mxu0 0.0
    %1458 = vmatpush1.msra.mxu0 0.0
    %1459 = vmatprep.subr.mxu0 0.0
    %1460 = vmatpush1.msra.mxu0 0.0
    %1461 = vmatprep.subr.mxu0 0.0
    %1462 = vmatpush1.msra.mxu0 0.0
    %1463 = vmatprep.subr.mxu0 0.0
    %1464 = vmatpush1.msra.mxu0 0.0
    %1465 = vmatprep.subr.mxu0 0.0
    %1466 = vmatpush1.msra.mxu0 0.0
    %1467 = vmatprep.subr.mxu0 0.0
    %1468 = vmatpush1.msra.mxu0 0.0
    %1469 = vmatprep.subr.mxu0 0.0
    %1470 = vmatpush1.msra.mxu0 0.0
    %1471 = vmatprep.subr.mxu0 0.0
    %1472 = vmatpush1.msra.mxu0 0.0
    %1473 = vmatprep.subr.mxu0 0.0
    %1474 = vmatpush1.msra.mxu0 0.0
    %1475 = vmatprep.subr.mxu0 0.0
    %1476 = vmatpush1.msra.mxu0 0.0
    %1477 = vmatprep.subr.mxu0 0.0
    %1478 = vmatpush1.msra.mxu0 0.0
    %1479 = vmatprep.subr.mxu0 0.0
    %1480 = vmatpush1.msra.mxu0 0.0
    %1481 = vmatprep.subr.mxu0 0.0
    %1482 = vmatpush1.msra.mxu0 0.0
    %1483 = vmatprep.subr.mxu0 0.0
    %1484 = vmatpush1.msra.mxu0 0.0
    %1485 = vmatprep.mubr.f32.mxu0 0.0
    %1486 = vmatmul.mubr.f32.gmra.mrb[0].mxu0 %v1419
    %v1487 = vpop.f32.mrb[0].mxu0
    %v1488 = vadd.f32 0.0, %v1487
    %v1489 = vpop.f32.mrb[0].mxu0
    %1490 = vdwg.mxu0
    %v1492 = vrot.slane %v1488, 4
    %v1494 = vadd.f32 %v198, %v1492
    %v1495 = vxor.u32 %v1411, 2147483648
    %v1496 = vmul.f32 %v1495, 1.442695
    %v1497 = vpow.pop %v1496
    %v1498 = vadd.f32 %v1497, 1.0
    %v1499 = vrcp.pop %v1498
    %v1500 = vmul.f32 1.0, %v1499
    %v1501 = vtanh.pop %v1411
    %v1503 = vrot.slane %v1288, 6
    %v1505 = vmul.f32 %v1500, %v1503
    %1507 = vrot.lane.b32.xlu0 %v1501, 64
    %v1508 = vpop.permute.xlu0 %1507
    %v1510 = vmul.f32 %v1500, %v1508
    %1512 = vrot.lane.b32.xlu0 %v1510, 32
    %v1513 = vpop.permute.xlu0 %1512
    %v1515 = vadd.f32 %v1505, %v1513
    %v1516 = vtanh.pop %v1515
    %1518 = vrot.lane.b32.xlu0 %v1516, 64
    %v1519 = vpop.permute.xlu0 %1518
    %v1521 = vmul.f32 %v1500, %v1519
    %v1522 = vxor.u32 %v1494, 2147483648
    %v1523 = vmul.f32 %v1522, 1.442695
    %v1524 = vpow.pop %v1523
    %v1525 = vadd.f32 %v1524, 1.0
    %v1526 = vrcp.pop %v1525
    %v1527 = vmul.f32 1.0, %v1526
    %v1528 = vtanh.pop %v1494
    %v1530 = vrot.slane %v1315, 2
    %v1532 = vmul.f32 %v1527, %v1530
    %1534 = vrot.lane.b32.xlu0 %v1528, 64
    %v1535 = vpop.permute.xlu0 %1534
    %v1537 = vmul.f32 %v1527, %v1535
    %1539 = vrot.lane.b32.xlu0 %v1537, 32
    %v1540 = vpop.permute.xlu0 %1539
    %v1542 = vadd.f32 %v1532, %v1540
    %v1543 = vtanh.pop %v1542
    %1545 = vrot.lane.b32.xlu0 %v1543, 64
    %v1546 = vpop.permute.xlu0 %1545
    %v1548 = vmul.f32 %v1527, %v1546
    %1550 = vrot.lane.b32.xlu0 %v1521, 32
    %v1551 = vpop.permute.xlu0 %1550
    %1553 = vst.msk [vmem:[#allocation2 + $0x8] sm:$0xc] %vm643, %v1551
    %1555 = vrot.lane.b32.xlu0 %v1548, 32
    %v1556 = vpop.permute.xlu0 %1555
    %1558 = vst.msk [vmem:[#allocation3] sm:$0x30] %vm649, %v1556
    %v1559 = vld [vmem:[#allocation4] sm:$0xff]
    %v1560 = vld [vmem:[#allocation4 + $0x8] sm:$0xff]
    %v1561 = vld [vmem:[#allocation4 + $0x10] sm:$0xff]
    %v1562 = vld [vmem:[#allocation4 + $0x18] sm:$0xff]
    %v1563 = vrot.slane %v1521, 2
    %1564 = vrot.lane.b32.xlu0 %v1563, 32
    %v1565 = vpop.permute.xlu0 %1564
    %v1566 = vsel %vm122, %v1565, 0
    %1568 = vmatprep.subr.mxu0 0.0
    %1569 = vmatpush1.msra.mxu0 %v1559
    %1570 = vmatprep.subr.mxu0 0.0
    %1571 = vmatpush1.msra.mxu0 %v1560
    %1572 = vmatprep.subr.mxu0 0.0
    %1573 = vmatpush1.msra.mxu0 %v1561
    %1574 = vmatprep.subr.mxu0 0.0
    %1575 = vmatpush1.msra.mxu0 %v1562
    %1576 = vmatprep.subr.mxu0 0.0
    %1577 = vmatpush1.msra.mxu0 0.0
    %1578 = vmatprep.subr.mxu0 0.0
    %1579 = vmatpush1.msra.mxu0 0.0
    %1580 = vmatprep.subr.mxu0 0.0
    %1581 = vmatpush1.msra.mxu0 0.0
    %1582 = vmatprep.subr.mxu0 0.0
    %1583 = vmatpush1.msra.mxu0 0.0
    %1584 = vmatprep.subr.mxu0 0.0
    %1585 = vmatpush1.msra.mxu0 0.0
    %1586 = vmatprep.subr.mxu0 0.0
    %1587 = vmatpush1.msra.mxu0 0.0
    %1588 = vmatprep.subr.mxu0 0.0
    %1589 = vmatpush1.msra.mxu0 0.0
    %1590 = vmatprep.subr.mxu0 0.0
    %1591 = vmatpush1.msra.mxu0 0.0
    %1592 = vmatprep.subr.mxu0 0.0
    %1593 = vmatpush1.msra.mxu0 0.0
    %1594 = vmatprep.subr.mxu0 0.0
    %1595 = vmatpush1.msra.mxu0 0.0
    %1596 = vmatprep.subr.mxu0 0.0
    %1597 = vmatpush1.msra.mxu0 0.0
    %1598 = vmatprep.subr.mxu0 0.0
    %1599 = vmatpush1.msra.mxu0 0.0
    %1600 = vmatprep.subr.mxu0 0.0
    %1601 = vmatpush1.msra.mxu0 0.0
    %1602 = vmatprep.subr.mxu0 0.0
    %1603 = vmatpush1.msra.mxu0 0.0
    %1604 = vmatprep.subr.mxu0 0.0
    %1605 = vmatpush1.msra.mxu0 0.0
    %1606 = vmatprep.subr.mxu0 0.0
    %1607 = vmatpush1.msra.mxu0 0.0
    %1608 = vmatprep.subr.mxu0 0.0
    %1609 = vmatpush1.msra.mxu0 0.0
    %1610 = vmatprep.subr.mxu0 0.0
    %1611 = vmatpush1.msra.mxu0 0.0
    %1612 = vmatprep.subr.mxu0 0.0
    %1613 = vmatpush1.msra.mxu0 0.0
    %1614 = vmatprep.subr.mxu0 0.0
    %1615 = vmatpush1.msra.mxu0 0.0
    %1616 = vmatprep.subr.mxu0 0.0
    %1617 = vmatpush1.msra.mxu0 0.0
    %1618 = vmatprep.subr.mxu0 0.0
    %1619 = vmatpush1.msra.mxu0 0.0
    %1620 = vmatprep.subr.mxu0 0.0
    %1621 = vmatpush1.msra.mxu0 0.0
    %1622 = vmatprep.subr.mxu0 0.0
    %1623 = vmatpush1.msra.mxu0 0.0
    %1624 = vmatprep.subr.mxu0 0.0
    %1625 = vmatpush1.msra.mxu0 0.0
    %1626 = vmatprep.subr.mxu0 0.0
    %1627 = vmatpush1.msra.mxu0 0.0
    %1628 = vmatprep.subr.mxu0 0.0
    %1629 = vmatpush1.msra.mxu0 0.0
    %1630 = vmatprep.subr.mxu0 0.0
    %1631 = vmatpush1.msra.mxu0 0.0
    %1632 = vmatprep.mubr.f32.mxu0 0.0
    %1633 = vmatmul.mubr.f32.gmra.mrb[0].mxu0 %v1566
    %v1634 = vpop.f32.mrb[0].mxu0
    %v1635 = vadd.f32 0.0, %v1634
    %v1636 = vpop.f32.mrb[0].mxu0
    %1637 = vdwg.mxu0
    %v1639 = vrot.slane %v1635, 4
    %v1641 = vadd.f32 %v202, %v1639
    %v1642 = vld [vmem:[#allocation7] sm:$0xff]
    %v1643 = vld [vmem:[#allocation7 + $0x8] sm:$0xff]
    %v1644 = vld [vmem:[#allocation7 + $0x10] sm:$0xff]
    %v1645 = vld [vmem:[#allocation7 + $0x18] sm:$0xff]
    %v1646 = vrot.slane %v1548, 4
    %1647 = vrot.lane.b32.xlu0 %v1646, 32
    %v1648 = vpop.permute.xlu0 %1647
    %v1649 = vsel %vm122, %v1648, 0
    %1651 = vmatprep.subr.mxu0 0.0
    %1652 = vmatpush1.msra.mxu0 %v1642
    %1653 = vmatprep.subr.mxu0 0.0
    %1654 = vmatpush1.msra.mxu0 %v1643
    %1655 = vmatprep.subr.mxu0 0.0
    %1656 = vmatpush1.msra.mxu0 %v1644
    %1657 = vmatprep.subr.mxu0 0.0
    %1658 = vmatpush1.msra.mxu0 %v1645
    %1659 = vmatprep.subr.mxu0 0.0
    %1660 = vmatpush1.msra.mxu0 0.0
    %1661 = vmatprep.subr.mxu0 0.0
    %1662 = vmatpush1.msra.mxu0 0.0
    %1663 = vmatprep.subr.mxu0 0.0
    %1664 = vmatpush1.msra.mxu0 0.0
    %1665 = vmatprep.subr.mxu0 0.0
    %1666 = vmatpush1.msra.mxu0 0.0
    %1667 = vmatprep.subr.mxu0 0.0
    %1668 = vmatpush1.msra.mxu0 0.0
    %1669 = vmatprep.subr.mxu0 0.0
    %1670 = vmatpush1.msra.mxu0 0.0
    %1671 = vmatprep.subr.mxu0 0.0
    %1672 = vmatpush1.msra.mxu0 0.0
    %1673 = vmatprep.subr.mxu0 0.0
    %1674 = vmatpush1.msra.mxu0 0.0
    %1675 = vmatprep.subr.mxu0 0.0
    %1676 = vmatpush1.msra.mxu0 0.0
    %1677 = vmatprep.subr.mxu0 0.0
    %1678 = vmatpush1.msra.mxu0 0.0
    %1679 = vmatprep.subr.mxu0 0.0
    %1680 = vmatpush1.msra.mxu0 0.0
    %1681 = vmatprep.subr.mxu0 0.0
    %1682 = vmatpush1.msra.mxu0 0.0
    %1683 = vmatprep.subr.mxu0 0.0
    %1684 = vmatpush1.msra.mxu0 0.0
    %1685 = vmatprep.subr.mxu0 0.0
    %1686 = vmatpush1.msra.mxu0 0.0
    %1687 = vmatprep.subr.mxu0 0.0
    %1688 = vmatpush1.msra.mxu0 0.0
    %1689 = vmatprep.subr.mxu0 0.0
    %1690 = vmatpush1.msra.mxu0 0.0
    %1691 = vmatprep.subr.mxu0 0.0
    %1692 = vmatpush1.msra.mxu0 0.0
    %1693 = vmatprep.subr.mxu0 0.0
    %1694 = vmatpush1.msra.mxu0 0.0
    %1695 = vmatprep.subr.mxu0 0.0
    %1696 = vmatpush1.msra.mxu0 0.0
    %1697 = vmatprep.subr.mxu0 0.0
    %1698 = vmatpush1.msra.mxu0 0.0
    %1699 = vmatprep.subr.mxu0 0.0
    %1700 = vmatpush1.msra.mxu0 0.0
    %1701 = vmatprep.subr.mxu0 0.0
    %1702 = vmatpush1.msra.mxu0 0.0
    %1703 = vmatprep.subr.mxu0 0.0
    %1704 = vmatpush1.msra.mxu0 0.0
    %1705 = vmatprep.subr.mxu0 0.0
    %1706 = vmatpush1.msra.mxu0 0.0
    %1707 = vmatprep.subr.mxu0 0.0
    %1708 = vmatpush1.msra.mxu0 0.0
    %1709 = vmatprep.subr.mxu0 0.0
    %1710 = vmatpush1.msra.mxu0 0.0
    %1711 = vmatprep.subr.mxu0 0.0
    %1712 = vmatpush1.msra.mxu0 0.0
    %1713 = vmatprep.subr.mxu0 0.0
    %1714 = vmatpush1.msra.mxu0 0.0
    %1715 = vmatprep.mubr.f32.mxu0 0.0
    %1716 = vmatmul.mubr.f32.gmra.mrb[0].mxu0 %v1649
    %v1717 = vpop.f32.mrb[0].mxu0
    %v1718 = vadd.f32 0.0, %v1717
    %v1719 = vpop.f32.mrb[0].mxu0
    %1720 = vdwg.mxu0
    %v1722 = vrot.slane %v1718, 6
    %v1724 = vadd.f32 %v198, %v1722
    %v1725 = vxor.u32 %v1641, 2147483648
    %v1726 = vmul.f32 %v1725, 1.442695
    %v1727 = vpow.pop %v1726
    %v1728 = vadd.f32 %v1727, 1.0
    %v1729 = vrcp.pop %v1728
    %v1730 = vmul.f32 1.0, %v1729
    %v1731 = vtanh.pop %v1641
    %v1733 = vrot.slane %v1515, 6
    %v1735 = vmul.f32 %v1730, %v1733
    %1737 = vrot.lane.b32.xlu0 %v1731, 64
    %v1738 = vpop.permute.xlu0 %1737
    %v1740 = vmul.f32 %v1730, %v1738
    %1742 = vrot.lane.b32.xlu0 %v1740, 32
    %v1743 = vpop.permute.xlu0 %1742
    %v1745 = vadd.f32 %v1735, %v1743
    %v1746 = vtanh.pop %v1745
    %1748 = vrot.lane.b32.xlu0 %v1746, 64
    %v1749 = vpop.permute.xlu0 %1748
    %v1751 = vmul.f32 %v1730, %v1749
    %v1752 = vxor.u32 %v1724, 2147483648
    %v1753 = vmul.f32 %v1752, 1.442695
    %v1754 = vpow.pop %v1753
    %v1755 = vadd.f32 %v1754, 1.0
    %v1756 = vrcp.pop %v1755
    %v1757 = vmul.f32 1.0, %v1756
    %v1758 = vtanh.pop %v1724
    %v1760 = vrot.slane %v1542, 2
    %v1762 = vmul.f32 %v1757, %v1760
    %1764 = vrot.lane.b32.xlu0 %v1758, 64
    %v1765 = vpop.permute.xlu0 %1764
    %v1767 = vmul.f32 %v1757, %v1765
    %1769 = vrot.lane.b32.xlu0 %v1767, 32
    %v1770 = vpop.permute.xlu0 %1769
    %v1772 = vadd.f32 %v1762, %v1770
    %v1773 = vtanh.pop %v1772
    %1775 = vrot.lane.b32.xlu0 %v1773, 64
    %v1776 = vpop.permute.xlu0 %1775
    %v1778 = vmul.f32 %v1757, %v1776
    %1780 = vrot.lane.b32.xlu0 %v1751, 32
    %v1781 = vpop.permute.xlu0 %1780
    %1783 = vst.msk [vmem:[#allocation2 + $0x8] sm:$0x30] %vm649, %v1781
    %1785 = vrot.lane.b32.xlu0 %v1778, 32
    %v1786 = vpop.permute.xlu0 %1785
    %1788 = vst.msk [vmem:[#allocation3] sm:$0xc] %vm643, %v1786
    %v1789 = vld [vmem:[#allocation4] sm:$0xff]
    %v1790 = vld [vmem:[#allocation4 + $0x8] sm:$0xff]
    %v1791 = vld [vmem:[#allocation4 + $0x10] sm:$0xff]
    %v1792 = vld [vmem:[#allocation4 + $0x18] sm:$0xff]
    %v1793 = vrot.slane %v1751, 4
    %1794 = vrot.lane.b32.xlu0 %v1793, 32
    %v1795 = vpop.permute.xlu0 %1794
    %v1796 = vsel %vm122, %v1795, 0
    %1798 = vmatprep.subr.mxu0 0.0
    %1799 = vmatpush1.msra.mxu0 %v1789
    %1800 = vmatprep.subr.mxu0 0.0
    %1801 = vmatpush1.msra.mxu0 %v1790
    %1802 = vmatprep.subr.mxu0 0.0
    %1803 = vmatpush1.msra.mxu0 %v1791
    %1804 = vmatprep.subr.mxu0 0.0
    %1805 = vmatpush1.msra.mxu0 %v1792
    %1806 = vmatprep.subr.mxu0 0.0
    %1807 = vmatpush1.msra.mxu0 0.0
    %1808 = vmatprep.subr.mxu0 0.0
    %1809 = vmatpush1.msra.mxu0 0.0
    %1810 = vmatprep.subr.mxu0 0.0
    %1811 = vmatpush1.msra.mxu0 0.0
    %1812 = vmatprep.subr.mxu0 0.0
    %1813 = vmatpush1.msra.mxu0 0.0
    %1814 = vmatprep.subr.mxu0 0.0
    %1815 = vmatpush1.msra.mxu0 0.0
    %1816 = vmatprep.subr.mxu0 0.0
    %1817 = vmatpush1.msra.mxu0 0.0
    %1818 = vmatprep.subr.mxu0 0.0
    %1819 = vmatpush1.msra.mxu0 0.0
    %1820 = vmatprep.subr.mxu0 0.0
    %1821 = vmatpush1.msra.mxu0 0.0
    %1822 = vmatprep.subr.mxu0 0.0
    %1823 = vmatpush1.msra.mxu0 0.0
    %1824 = vmatprep.subr.mxu0 0.0
    %1825 = vmatpush1.msra.mxu0 0.0
    %1826 = vmatprep.subr.mxu0 0.0
    %1827 = vmatpush1.msra.mxu0 0.0
    %1828 = vmatprep.subr.mxu0 0.0
    %1829 = vmatpush1.msra.mxu0 0.0
    %1830 = vmatprep.subr.mxu0 0.0
    %1831 = vmatpush1.msra.mxu0 0.0
    %1832 = vmatprep.subr.mxu0 0.0
    %1833 = vmatpush1.msra.mxu0 0.0
    %1834 = vmatprep.subr.mxu0 0.0
    %1835 = vmatpush1.msra.mxu0 0.0
    %1836 = vmatprep.subr.mxu0 0.0
    %1837 = vmatpush1.msra.mxu0 0.0
    %1838 = vmatprep.subr.mxu0 0.0
    %1839 = vmatpush1.msra.mxu0 0.0
    %1840 = vmatprep.subr.mxu0 0.0
    %1841 = vmatpush1.msra.mxu0 0.0
    %1842 = vmatprep.subr.mxu0 0.0
    %1843 = vmatpush1.msra.mxu0 0.0
    %1844 = vmatprep.subr.mxu0 0.0
    %1845 = vmatpush1.msra.mxu0 0.0
    %1846 = vmatprep.subr.mxu0 0.0
    %1847 = vmatpush1.msra.mxu0 0.0
    %1848 = vmatprep.subr.mxu0 0.0
    %1849 = vmatpush1.msra.mxu0 0.0
    %1850 = vmatprep.subr.mxu0 0.0
    %1851 = vmatpush1.msra.mxu0 0.0
    %1852 = vmatprep.subr.mxu0 0.0
    %1853 = vmatpush1.msra.mxu0 0.0
    %1854 = vmatprep.subr.mxu0 0.0
    %1855 = vmatpush1.msra.mxu0 0.0
    %1856 = vmatprep.subr.mxu0 0.0
    %1857 = vmatpush1.msra.mxu0 0.0
    %1858 = vmatprep.subr.mxu0 0.0
    %1859 = vmatpush1.msra.mxu0 0.0
    %1860 = vmatprep.subr.mxu0 0.0
    %1861 = vmatpush1.msra.mxu0 0.0
    %1862 = vmatprep.mubr.f32.mxu0 0.0
    %1863 = vmatmul.mubr.f32.gmra.mrb[0].mxu0 %v1796
    %v1864 = vpop.f32.mrb[0].mxu0
    %v1865 = vadd.f32 0.0, %v1864
    %v1866 = vpop.f32.mrb[0].mxu0
    %1867 = vdwg.mxu0
    %v1869 = vrot.slane %v1865, 2
    %v1871 = vadd.f32 %v202, %v1869
    %v1872 = vld [vmem:[#allocation7] sm:$0xff]
    %v1873 = vld [vmem:[#allocation7 + $0x8] sm:$0xff]
    %v1874 = vld [vmem:[#allocation7 + $0x10] sm:$0xff]
    %v1875 = vld [vmem:[#allocation7 + $0x18] sm:$0xff]
    %v1876 = vrot.slane %v1778, 2
    %1877 = vrot.lane.b32.xlu0 %v1876, 32
    %v1878 = vpop.permute.xlu0 %1877
    %v1879 = vsel %vm122, %v1878, 0
    %1881 = vmatprep.subr.mxu0 0.0
    %1882 = vmatpush1.msra.mxu0 %v1872
    %1883 = vmatprep.subr.mxu0 0.0
    %1884 = vmatpush1.msra.mxu0 %v1873
    %1885 = vmatprep.subr.mxu0 0.0
    %1886 = vmatpush1.msra.mxu0 %v1874
    %1887 = vmatprep.subr.mxu0 0.0
    %1888 = vmatpush1.msra.mxu0 %v1875
    %1889 = vmatprep.subr.mxu0 0.0
    %1890 = vmatpush1.msra.mxu0 0.0
    %1891 = vmatprep.subr.mxu0 0.0
    %1892 = vmatpush1.msra.mxu0 0.0
    %1893 = vmatprep.subr.mxu0 0.0
    %1894 = vmatpush1.msra.mxu0 0.0
    %1895 = vmatprep.subr.mxu0 0.0
    %1896 = vmatpush1.msra.mxu0 0.0
    %1897 = vmatprep.subr.mxu0 0.0
    %1898 = vmatpush1.msra.mxu0 0.0
    %1899 = vmatprep.subr.mxu0 0.0
    %1900 = vmatpush1.msra.mxu0 0.0
    %1901 = vmatprep.subr.mxu0 0.0
    %1902 = vmatpush1.msra.mxu0 0.0
    %1903 = vmatprep.subr.mxu0 0.0
    %1904 = vmatpush1.msra.mxu0 0.0
    %1905 = vmatprep.subr.mxu0 0.0
    %1906 = vmatpush1.msra.mxu0 0.0
    %1907 = vmatprep.subr.mxu0 0.0
    %1908 = vmatpush1.msra.mxu0 0.0
    %1909 = vmatprep.subr.mxu0 0.0
    %1910 = vmatpush1.msra.mxu0 0.0
    %1911 = vmatprep.subr.mxu0 0.0
    %1912 = vmatpush1.msra.mxu0 0.0
    %1913 = vmatprep.subr.mxu0 0.0
    %1914 = vmatpush1.msra.mxu0 0.0
    %1915 = vmatprep.subr.mxu0 0.0
    %1916 = vmatpush1.msra.mxu0 0.0
    %1917 = vmatprep.subr.mxu0 0.0
    %1918 = vmatpush1.msra.mxu0 0.0
    %1919 = vmatprep.subr.mxu0 0.0
    %1920 = vmatpush1.msra.mxu0 0.0
    %1921 = vmatprep.subr.mxu0 0.0
    %1922 = vmatpush1.msra.mxu0 0.0
    %1923 = vmatprep.subr.mxu0 0.0
    %1924 = vmatpush1.msra.mxu0 0.0
    %1925 = vmatprep.subr.mxu0 0.0
    %1926 = vmatpush1.msra.mxu0 0.0
    %1927 = vmatprep.subr.mxu0 0.0
    %1928 = vmatpush1.msra.mxu0 0.0
    %1929 = vmatprep.subr.mxu0 0.0
    %1930 = vmatpush1.msra.mxu0 0.0
    %1931 = vmatprep.subr.mxu0 0.0
    %1932 = vmatpush1.msra.mxu0 0.0
    %1933 = vmatprep.subr.mxu0 0.0
    %1934 = vmatpush1.msra.mxu0 0.0
    %1935 = vmatprep.subr.mxu0 0.0
    %1936 = vmatpush1.msra.mxu0 0.0
    %1937 = vmatprep.subr.mxu0 0.0
    %1938 = vmatpush1.msra.mxu0 0.0
    %1939 = vmatprep.subr.mxu0 0.0
    %1940 = vmatpush1.msra.mxu0 0.0
    %1941 = vmatprep.subr.mxu0 0.0
    %1942 = vmatpush1.msra.mxu0 0.0
    %1943 = vmatprep.subr.mxu0 0.0
    %1944 = vmatpush1.msra.mxu0 0.0
    %1945 = vmatprep.mubr.f32.mxu0 0.0
    %1946 = vmatmul.mubr.f32.gmra.mrb[0].mxu0 %v1879
    %v1947 = vpop.f32.mrb[0].mxu0
    %v1948 = vadd.f32 0.0, %v1947
    %v1949 = vpop.f32.mrb[0].mxu0
    %1950 = vdwg.mxu0
    %v1951 = vadd.f32 %v198, %v1948
    %v1952 = vxor.u32 %v1871, 2147483648
    %v1953 = vmul.f32 %v1952, 1.442695
    %v1954 = vpow.pop %v1953
    %v1955 = vadd.f32 %v1954, 1.0
    %v1956 = vrcp.pop %v1955
    %v1957 = vmul.f32 1.0, %v1956
    %v1958 = vtanh.pop %v1871
    %v1960 = vrot.slane %v1745, 6
    %v1962 = vmul.f32 %v1957, %v1960
    %1964 = vrot.lane.b32.xlu0 %v1958, 64
    %v1965 = vpop.permute.xlu0 %1964
    %v1967 = vmul.f32 %v1957, %v1965
    %1969 = vrot.lane.b32.xlu0 %v1967, 32
    %v1970 = vpop.permute.xlu0 %1969
    %v1972 = vadd.f32 %v1962, %v1970
    %v1973 = vtanh.pop %v1972
    %1975 = vrot.lane.b32.xlu0 %v1973, 64
    %v1976 = vpop.permute.xlu0 %1975
    %v1978 = vmul.f32 %v1957, %v1976
    %v1979 = vxor.u32 %v1951, 2147483648
    %v1980 = vmul.f32 %v1979, 1.442695
    %v1981 = vpow.pop %v1980
    %v1982 = vadd.f32 %v1981, 1.0
    %v1983 = vrcp.pop %v1982
    %v1984 = vmul.f32 1.0, %v1983
    %v1985 = vtanh.pop %v1951
    %v1987 = vrot.slane %v1772, 2
    %v1989 = vmul.f32 %v1984, %v1987
    %1991 = vrot.lane.b32.xlu0 %v1985, 64
    %v1992 = vpop.permute.xlu0 %1991
    %v1994 = vmul.f32 %v1984, %v1992
    %1996 = vrot.lane.b32.xlu0 %v1994, 32
    %v1997 = vpop.permute.xlu0 %1996
    %v1999 = vadd.f32 %v1989, %v1997
    %v2000 = vtanh.pop %v1999
    %2002 = vrot.lane.b32.xlu0 %v2000, 64
    %v2003 = vpop.permute.xlu0 %2002
    %v2005 = vmul.f32 %v1984, %v2003
    %2007 = vrot.lane.b32.xlu0 %v1978, 32
    %v2008 = vpop.permute.xlu0 %2007
    %2010 = vst.msk [vmem:[#allocation2 + $0x8] sm:$0xc0] %vm420, %v2008
    %2012 = vrot.lane.b32.xlu0 %v2005, 32
    %v2013 = vpop.permute.xlu0 %2012
    %2015 = vst.msk [vmem:[#allocation3] sm:$0x3] %vm414, %v2013
    %v2016 = vld [vmem:[#allocation2] sm:$0xff]
    %v2017 = vld [vmem:[#allocation2 + $0x8] sm:$0xff]
    %v2018 = vld [vmem:[%s5] sm:$0xff]
    %v2019 = vld [vmem:[%s5 + $0x8] sm:$0xff]
    %v2020 = vld [vmem:[%s5 + $0x10] sm:$0xff]
    %v2021 = vld [vmem:[%s5 + $0x18] sm:$0xff]
    %v2022 = vld [vmem:[%s5 + $0x20] sm:$0xff]
    %v2023 = vld [vmem:[%s5 + $0x28] sm:$0xff]
    %v2024 = vld [vmem:[%s5 + $0x30] sm:$0xff]
    %v2025 = vld [vmem:[%s5 + $0x38] sm:$0xff]
    %v2026 = vld [vmem:[#allocation3] sm:$0xff]
    %v2027 = vld [vmem:[#allocation3 + $0x8] sm:$0xff]
    %v2028 = vld [vmem:[%s5 + $0x40] sm:$0xff]
    %v2029 = vld [vmem:[%s5 + $0x48] sm:$0xff]
    %v2030 = vld [vmem:[%s5 + $0x50] sm:$0xff]
    %v2031 = vld [vmem:[%s5 + $0x58] sm:$0xff]
    %v2032 = vld [vmem:[%s5 + $0x60] sm:$0xff]
    %v2033 = vld [vmem:[%s5 + $0x68] sm:$0xff]
    %v2034 = vld [vmem:[%s5 + $0x70] sm:$0xff]
    %v2035 = vld [vmem:[%s5 + $0x78] sm:$0xff]
    %v2037 = vsel %vm122, %v2026, 0
    %v2040 = vsel %vm122, %v2027, 0
    %2042 = vmatprep.subr.mxu0 %v2029
    %2043 = vmatpush1.msra.mxu0 %v2028
    %2044 = vmatprep.subr.mxu0 %v2031
    %2045 = vmatpush1.msra.mxu0 %v2030
    %2046 = vmatprep.subr.mxu0 %v2033
    %2047 = vmatpush1.msra.mxu0 %v2032
    %2048 = vmatprep.subr.mxu0 %v2035
    %2049 = vmatpush1.msra.mxu0 %v2034
    %2050 = vmatprep.subr.mxu0 0.0
    %2051 = vmatpush1.msra.mxu0 0.0
    %2052 = vmatprep.subr.mxu0 0.0
    %2053 = vmatpush1.msra.mxu0 0.0
    %2054 = vmatprep.subr.mxu0 0.0
    %2055 = vmatpush1.msra.mxu0 0.0
    %2056 = vmatprep.subr.mxu0 0.0
    %2057 = vmatpush1.msra.mxu0 0.0
    %2058 = vmatprep.subr.mxu0 0.0
    %2059 = vmatpush1.msra.mxu0 0.0
    %2060 = vmatprep.subr.mxu0 0.0
    %2061 = vmatpush1.msra.mxu0 0.0
    %2062 = vmatprep.subr.mxu0 0.0
    %2063 = vmatpush1.msra.mxu0 0.0
    %2064 = vmatprep.subr.mxu0 0.0
    %2065 = vmatpush1.msra.mxu0 0.0
    %2066 = vmatprep.subr.mxu0 0.0
    %2067 = vmatpush1.msra.mxu0 0.0
    %2068 = vmatprep.subr.mxu0 0.0
    %2069 = vmatpush1.msra.mxu0 0.0
    %2070 = vmatprep.subr.mxu0 0.0
    %2071 = vmatpush1.msra.mxu0 0.0
    %2072 = vmatprep.subr.mxu0 0.0
    %2073 = vmatpush1.msra.mxu0 0.0
    %2074 = vmatprep.subr.mxu0 0.0
    %2075 = vmatpush1.msra.mxu0 0.0
    %2076 = vmatprep.subr.mxu0 0.0
    %2077 = vmatpush1.msra.mxu0 0.0
    %2078 = vmatprep.subr.mxu0 0.0
    %2079 = vmatpush1.msra.mxu0 0.0
    %2080 = vmatprep.subr.mxu0 0.0
    %2081 = vmatpush1.msra.mxu0 0.0
    %2082 = vmatprep.subr.mxu0 0.0
    %2083 = vmatpush1.msra.mxu0 0.0
    %2084 = vmatprep.subr.mxu0 0.0
    %2085 = vmatpush1.msra.mxu0 0.0
    %2086 = vmatprep.subr.mxu0 0.0
    %2087 = vmatpush1.msra.mxu0 0.0
    %2088 = vmatprep.subr.mxu0 0.0
    %2089 = vmatpush1.msra.mxu0 0.0
    %2090 = vmatprep.subr.mxu0 0.0
    %2091 = vmatpush1.msra.mxu0 0.0
    %2092 = vmatprep.subr.mxu0 0.0
    %2093 = vmatpush1.msra.mxu0 0.0
    %2094 = vmatprep.subr.mxu0 0.0
    %2095 = vmatpush1.msra.mxu0 0.0
    %2096 = vmatprep.subr.mxu0 0.0
    %2097 = vmatpush1.msra.mxu0 0.0
    %2098 = vmatprep.subr.mxu0 0.0
    %2099 = vmatpush1.msra.mxu0 0.0
    %2100 = vmatprep.subr.mxu0 0.0
    %2101 = vmatpush1.msra.mxu0 0.0
    %2102 = vmatprep.subr.mxu0 0.0
    %2103 = vmatpush1.msra.mxu0 0.0
    %2104 = vmatprep.subr.mxu0 0.0
    %2105 = vmatpush1.msra.mxu0 0.0
    %2106 = vmatprep.mubr.f32.mxu0 0.0
    %2107 = vmatmul.mubr.f32.gmra.mrb[0].mxu0 %v2037
    %v2108 = vpop.f32.mrb[0].mxu0
    %v2109 = vadd.f32 0.0, %v2108
    %v2110 = vpop.f32.mrb[0].mxu0
    %v2111 = vadd.f32 0.0, %v2110
    %2112 = vmatprep.mubr.f32.mxu0 0.0
    %2113 = vmatmul.mubr.f32.gmra.mrb[0].mxu0 %v2040
    %v2114 = vpop.f32.mrb[0].mxu0
    %v2115 = vadd.f32 0.0, %v2114
    %v2116 = vpop.f32.mrb[0].mxu0
    %v2117 = vadd.f32 0.0, %v2116
    %2118 = vdwg.mxu0
    %v2120 = vsel %vm122, %v2016, 0
    %v2123 = vsel %vm122, %v2017, 0
    %2125 = vmatprep.subr.mxu0 %v2019
    %2126 = vmatpush1.msra.mxu0 %v2018
    %2127 = vmatprep.subr.mxu0 %v2021
    %2128 = vmatpush1.msra.mxu0 %v2020
    %2129 = vmatprep.subr.mxu0 %v2023
    %2130 = vmatpush1.msra.mxu0 %v2022
    %2131 = vmatprep.subr.mxu0 %v2025
    %2132 = vmatpush1.msra.mxu0 %v2024
    %2133 = vmatprep.subr.mxu0 0.0
    %2134 = vmatpush1.msra.mxu0 0.0
    %2135 = vmatprep.subr.mxu0 0.0
    %2136 = vmatpush1.msra.mxu0 0.0
    %2137 = vmatprep.subr.mxu0 0.0
    %2138 = vmatpush1.msra.mxu0 0.0
    %2139 = vmatprep.subr.mxu0 0.0
    %2140 = vmatpush1.msra.mxu0 0.0
    %2141 = vmatprep.subr.mxu0 0.0
    %2142 = vmatpush1.msra.mxu0 0.0
    %2143 = vmatprep.subr.mxu0 0.0
    %2144 = vmatpush1.msra.mxu0 0.0
    %2145 = vmatprep.subr.mxu0 0.0
    %2146 = vmatpush1.msra.mxu0 0.0
    %2147 = vmatprep.subr.mxu0 0.0
    %2148 = vmatpush1.msra.mxu0 0.0
    %2149 = vmatprep.subr.mxu0 0.0
    %2150 = vmatpush1.msra.mxu0 0.0
    %2151 = vmatprep.subr.mxu0 0.0
    %2152 = vmatpush1.msra.mxu0 0.0
    %2153 = vmatprep.subr.mxu0 0.0
    %2154 = vmatpush1.msra.mxu0 0.0
    %2155 = vmatprep.subr.mxu0 0.0
    %2156 = vmatpush1.msra.mxu0 0.0
    %2157 = vmatprep.subr.mxu0 0.0
    %2158 = vmatpush1.msra.mxu0 0.0
    %2159 = vmatprep.subr.mxu0 0.0
    %2160 = vmatpush1.msra.mxu0 0.0
    %2161 = vmatprep.subr.mxu0 0.0
    %2162 = vmatpush1.msra.mxu0 0.0
    %2163 = vmatprep.subr.mxu0 0.0
    %2164 = vmatpush1.msra.mxu0 0.0
    %2165 = vmatprep.subr.mxu0 0.0
    %2166 = vmatpush1.msra.mxu0 0.0
    %2167 = vmatprep.subr.mxu0 0.0
    %2168 = vmatpush1.msra.mxu0 0.0
    %2169 = vmatprep.subr.mxu0 0.0
    %2170 = vmatpush1.msra.mxu0 0.0
    %2171 = vmatprep.subr.mxu0 0.0
    %2172 = vmatpush1.msra.mxu0 0.0
    %2173 = vmatprep.subr.mxu0 0.0
    %2174 = vmatpush1.msra.mxu0 0.0
    %2175 = vmatprep.subr.mxu0 0.0
    %2176 = vmatpush1.msra.mxu0 0.0
    %2177 = vmatprep.subr.mxu0 0.0
    %2178 = vmatpush1.msra.mxu0 0.0
    %2179 = vmatprep.subr.mxu0 0.0
    %2180 = vmatpush1.msra.mxu0 0.0
    %2181 = vmatprep.subr.mxu0 0.0
    %2182 = vmatpush1.msra.mxu0 0.0
    %2183 = vmatprep.subr.mxu0 0.0
    %2184 = vmatpush1.msra.mxu0 0.0
    %2185 = vmatprep.subr.mxu0 0.0
    %2186 = vmatpush1.msra.mxu0 0.0
    %2187 = vmatprep.subr.mxu0 0.0
    %2188 = vmatpush1.msra.mxu0 0.0
    %2189 = vmatprep.mubr.f32.mxu0 0.0
    %2190 = vmatmul.mubr.f32.gmra.mrb[0].mxu0 %v2120
    %v2191 = vpop.f32.mrb[0].mxu0
    %v2192 = vadd.f32 %v2109, %v2191
    %v2193 = vpop.f32.mrb[0].mxu0
    %v2194 = vadd.f32 %v2111, %v2193
    %2195 = vmatprep.mubr.f32.mxu0 0.0
    %2196 = vmatmul.mubr.f32.gmra.mrb[0].mxu0 %v2123
    %v2197 = vpop.f32.mrb[0].mxu0
    %v2198 = vadd.f32 %v2115, %v2197
    %v2199 = vpop.f32.mrb[0].mxu0
    %v2200 = vadd.f32 %v2117, %v2199
    %2201 = vdwg.mxu0
    %v2202 = vld [vmem:[%s8] sm:$0x3]
    %v2204 = vlaneseq
    %v2205 = vshrl.u32 %v2204, 7
    %v2206 = vsub.s32 0, %v2205
    %v2207 = vrot.slane %v2202, %v2206
    %v2208 = vlaneseq
    %v2209 = vshrl.u32 %v2208, 7
    %v2210 = vsub.s32 1, %v2209
    %v2211 = vrot.slane %v2202, %v2210
    %v2214 = vadd.f32 %v2192, %v2207
    %v2215 = vadd.f32 %v2194, %v2211
    %v2216 = vadd.f32 %v2198, %v2207
    %v2217 = vadd.f32 %v2200, %v2211
    %v2218 = vld [vmem:[#allocation9] sm:$0xff]
    %v2219 = vld [vmem:[#allocation9 + $0x8] sm:$0xff]
    %v2220 = vld [vmem:[#allocation9 + $0x10] sm:$0xff]
    %v2221 = vld [vmem:[#allocation9 + $0x18] sm:$0xff]
    %2222 = vmatprep.subr.mxu0 0.0
    %2223 = vmatpush1.msra.mxu0 %v2218
    %2224 = vmatprep.subr.mxu0 0.0
    %2225 = vmatpush1.msra.mxu0 %v2219
    %2226 = vmatprep.subr.mxu0 0.0
    %2227 = vmatpush1.msra.mxu0 %v2220
    %2228 = vmatprep.subr.mxu0 0.0
    %2229 = vmatpush1.msra.mxu0 %v2221
    %2230 = vmatprep.subr.mxu0 0.0
    %2231 = vmatpush1.msra.mxu0 0.0
    %2232 = vmatprep.subr.mxu0 0.0
    %2233 = vmatpush1.msra.mxu0 0.0
    %2234 = vmatprep.subr.mxu0 0.0
    %2235 = vmatpush1.msra.mxu0 0.0
    %2236 = vmatprep.subr.mxu0 0.0
    %2237 = vmatpush1.msra.mxu0 0.0
    %2238 = vmatprep.subr.mxu0 0.0
    %2239 = vmatpush1.msra.mxu0 0.0
    %2240 = vmatprep.subr.mxu0 0.0
    %2241 = vmatpush1.msra.mxu0 0.0
    %2242 = vmatprep.subr.mxu0 0.0
    %2243 = vmatpush1.msra.mxu0 0.0
    %2244 = vmatprep.subr.mxu0 0.0
    %2245 = vmatpush1.msra.mxu0 0.0
    %2246 = vmatprep.subr.mxu0 0.0
    %2247 = vmatpush1.msra.mxu0 0.0
    %2248 = vmatprep.subr.mxu0 0.0
    %2249 = vmatpush1.msra.mxu0 0.0
    %2250 = vmatprep.subr.mxu0 0.0
    %2251 = vmatpush1.msra.mxu0 0.0
    %2252 = vmatprep.subr.mxu0 0.0
    %2253 = vmatpush1.msra.mxu0 0.0
    %2254 = vmatprep.subr.mxu0 0.0
    %2255 = vmatpush1.msra.mxu0 0.0
    %2256 = vmatprep.subr.mxu0 0.0
    %2257 = vmatpush1.msra.mxu0 0.0
    %2258 = vmatprep.subr.mxu0 0.0
    %2259 = vmatpush1.msra.mxu0 0.0
    %2260 = vmatprep.subr.mxu0 0.0
    %2261 = vmatpush1.msra.mxu0 0.0
    %2262 = vmatprep.subr.mxu0 0.0
    %2263 = vmatpush1.msra.mxu0 0.0
    %2264 = vmatprep.subr.mxu0 0.0
    %2265 = vmatpush1.msra.mxu0 0.0
    %2266 = vmatprep.subr.mxu0 0.0
    %2267 = vmatpush1.msra.mxu0 0.0
    %2268 = vmatprep.subr.mxu0 0.0
    %2269 = vmatpush1.msra.mxu0 0.0
    %2270 = vmatprep.subr.mxu0 0.0
    %2271 = vmatpush1.msra.mxu0 0.0
    %2272 = vmatprep.subr.mxu0 0.0
    %2273 = vmatpush1.msra.mxu0 0.0
    %2274 = vmatprep.subr.mxu0 0.0
    %2275 = vmatpush1.msra.mxu0 0.0
    %2276 = vmatprep.subr.mxu0 0.0
    %2277 = vmatpush1.msra.mxu0 0.0
    %2278 = vmatprep.subr.mxu0 0.0
    %2279 = vmatpush1.msra.mxu0 0.0
    %2280 = vmatprep.subr.mxu0 0.0
    %2281 = vmatpush1.msra.mxu0 0.0
    %2282 = vmatprep.subr.mxu0 0.0
    %2283 = vmatpush1.msra.mxu0 0.0
    %2284 = vmatprep.subr.mxu0 0.0
    %2285 = vmatpush1.msra.mxu0 0.0
    %2286 = vmatprep.mubr.f32.mxu0 0.0
    %2287 = vmatmul.mubr.f32.gmra.mrb[0].mxu0 %v211
    %v2288 = vpop.f32.mrb[0].mxu0
    %v2289 = vadd.f32 0.0, %v2288
    %v2290 = vpop.f32.mrb[0].mxu0
    %2291 = vdwg.mxu0
    %v2292 = vadd.f32 %v2214, %v2289
    %v2293 = vld [vmem:[#allocation10] sm:$0xff]
    %v2294 = vld [vmem:[#allocation10 + $0x8] sm:$0xff]
    %v2295 = vld [vmem:[#allocation10 + $0x10] sm:$0xff]
    %v2296 = vld [vmem:[#allocation10 + $0x18] sm:$0xff]
    %2297 = vmatprep.subr.mxu0 0.0
    %2298 = vmatpush1.msra.mxu0 %v2293
    %2299 = vmatprep.subr.mxu0 0.0
    %2300 = vmatpush1.msra.mxu0 %v2294
    %2301 = vmatprep.subr.mxu0 0.0
    %2302 = vmatpush1.msra.mxu0 %v2295
    %2303 = vmatprep.subr.mxu0 0.0
    %2304 = vmatpush1.msra.mxu0 %v2296
    %2305 = vmatprep.subr.mxu0 0.0
    %2306 = vmatpush1.msra.mxu0 0.0
    %2307 = vmatprep.subr.mxu0 0.0
    %2308 = vmatpush1.msra.mxu0 0.0
    %2309 = vmatprep.subr.mxu0 0.0
    %2310 = vmatpush1.msra.mxu0 0.0
    %2311 = vmatprep.subr.mxu0 0.0
    %2312 = vmatpush1.msra.mxu0 0.0
    %2313 = vmatprep.subr.mxu0 0.0
    %2314 = vmatpush1.msra.mxu0 0.0
    %2315 = vmatprep.subr.mxu0 0.0
    %2316 = vmatpush1.msra.mxu0 0.0
    %2317 = vmatprep.subr.mxu0 0.0
    %2318 = vmatpush1.msra.mxu0 0.0
    %2319 = vmatprep.subr.mxu0 0.0
    %2320 = vmatpush1.msra.mxu0 0.0
    %2321 = vmatprep.subr.mxu0 0.0
    %2322 = vmatpush1.msra.mxu0 0.0
    %2323 = vmatprep.subr.mxu0 0.0
    %2324 = vmatpush1.msra.mxu0 0.0
    %2325 = vmatprep.subr.mxu0 0.0
    %2326 = vmatpush1.msra.mxu0 0.0
    %2327 = vmatprep.subr.mxu0 0.0
    %2328 = vmatpush1.msra.mxu0 0.0
    %2329 = vmatprep.subr.mxu0 0.0
    %2330 = vmatpush1.msra.mxu0 0.0
    %2331 = vmatprep.subr.mxu0 0.0
    %2332 = vmatpush1.msra.mxu0 0.0
    %2333 = vmatprep.subr.mxu0 0.0
    %2334 = vmatpush1.msra.mxu0 0.0
    %2335 = vmatprep.subr.mxu0 0.0
    %2336 = vmatpush1.msra.mxu0 0.0
    %2337 = vmatprep.subr.mxu0 0.0
    %2338 = vmatpush1.msra.mxu0 0.0
    %2339 = vmatprep.subr.mxu0 0.0
    %2340 = vmatpush1.msra.mxu0 0.0
    %2341 = vmatprep.subr.mxu0 0.0
    %2342 = vmatpush1.msra.mxu0 0.0
    %2343 = vmatprep.subr.mxu0 0.0
    %2344 = vmatpush1.msra.mxu0 0.0
    %2345 = vmatprep.subr.mxu0 0.0
    %2346 = vmatpush1.msra.mxu0 0.0
    %2347 = vmatprep.subr.mxu0 0.0
    %2348 = vmatpush1.msra.mxu0 0.0
    %2349 = vmatprep.subr.mxu0 0.0
    %2350 = vmatpush1.msra.mxu0 0.0
    %2351 = vmatprep.subr.mxu0 0.0
    %2352 = vmatpush1.msra.mxu0 0.0
    %2353 = vmatprep.subr.mxu0 0.0
    %2354 = vmatpush1.msra.mxu0 0.0
    %2355 = vmatprep.subr.mxu0 0.0
    %2356 = vmatpush1.msra.mxu0 0.0
    %2357 = vmatprep.subr.mxu0 0.0
    %2358 = vmatpush1.msra.mxu0 0.0
    %2359 = vmatprep.subr.mxu0 0.0
    %2360 = vmatpush1.msra.mxu0 0.0
    %2361 = vmatprep.mubr.f32.mxu0 0.0
    %2362 = vmatmul.mubr.f32.gmra.mrb[0].mxu0 %v211
    %v2363 = vpop.f32.mrb[0].mxu0
    %v2364 = vadd.f32 0.0, %v2363
    %v2365 = vpop.f32.mrb[0].mxu0
    %2366 = vdwg.mxu0
    %v2368 = vrot.slane %v2364, 2
    %v2370 = vadd.f32 %v2217, %v2368
    %v2371 = vxor.u32 %v2292, 2147483648
    %v2372 = vmul.f32 %v2371, 1.442695
    %v2373 = vpow.pop %v2372
    %v2374 = vadd.f32 %v2373, 1.0
    %v2375 = vrcp.pop %v2374
    %v2376 = vmul.f32 1.0, %v2375
    %v2377 = vtanh.pop %v2292
    %v2378 = vmul.f32 %v2376, 0.0
    %2380 = vrot.lane.b32.xlu0 %v2377, 64
    %v2381 = vpop.permute.xlu0 %2380
    %v2383 = vmul.f32 %v2376, %v2381
    %2385 = vrot.lane.b32.xlu0 %v2383, 32
    %v2386 = vpop.permute.xlu0 %2385
    %v2388 = vadd.f32 %v2378, %v2386
    %v2389 = vtanh.pop %v2388
    %2391 = vrot.lane.b32.xlu0 %v2389, 64
    %v2392 = vpop.permute.xlu0 %2391
    %v2394 = vmul.f32 %v2376, %v2392
    %v2395 = vxor.u32 %v2370, 2147483648
    %v2396 = vmul.f32 %v2395, 1.442695
    %v2397 = vpow.pop %v2396
    %v2398 = vadd.f32 %v2397, 1.0
    %v2399 = vrcp.pop %v2398
    %v2400 = vmul.f32 1.0, %v2399
    %v2401 = vtanh.pop %v2370
    %v2402 = vmul.f32 %v2400, 0.0
    %2404 = vrot.lane.b32.xlu0 %v2401, 64
    %v2405 = vpop.permute.xlu0 %2404
    %v2407 = vmul.f32 %v2400, %v2405
    %2409 = vrot.lane.b32.xlu0 %v2407, 32
    %v2410 = vpop.permute.xlu0 %2409
    %v2412 = vadd.f32 %v2402, %v2410
    %v2413 = vtanh.pop %v2412
    %2415 = vrot.lane.b32.xlu0 %v2413, 64
    %v2416 = vpop.permute.xlu0 %2415
    %v2418 = vmul.f32 %v2400, %v2416
    %2420 = vrot.lane.b32.xlu0 %v2394, 32
    %v2421 = vpop.permute.xlu0 %2420
    %v2422 = vsel %vm122, %v2421, 0
    %2424 = vmatprep.subr.mxu0 0.0
    %2425 = vmatpush1.msra.mxu0 %v2218
    %2426 = vmatprep.subr.mxu0 0.0
    %2427 = vmatpush1.msra.mxu0 %v2219
    %2428 = vmatprep.subr.mxu0 0.0
    %2429 = vmatpush1.msra.mxu0 %v2220
    %2430 = vmatprep.subr.mxu0 0.0
    %2431 = vmatpush1.msra.mxu0 %v2221
    %2432 = vmatprep.subr.mxu0 0.0
    %2433 = vmatpush1.msra.mxu0 0.0
    %2434 = vmatprep.subr.mxu0 0.0
    %2435 = vmatpush1.msra.mxu0 0.0
    %2436 = vmatprep.subr.mxu0 0.0
    %2437 = vmatpush1.msra.mxu0 0.0
    %2438 = vmatprep.subr.mxu0 0.0
    %2439 = vmatpush1.msra.mxu0 0.0
    %2440 = vmatprep.subr.mxu0 0.0
    %2441 = vmatpush1.msra.mxu0 0.0
    %2442 = vmatprep.subr.mxu0 0.0
    %2443 = vmatpush1.msra.mxu0 0.0
    %2444 = vmatprep.subr.mxu0 0.0
    %2445 = vmatpush1.msra.mxu0 0.0
    %2446 = vmatprep.subr.mxu0 0.0
    %2447 = vmatpush1.msra.mxu0 0.0
    %2448 = vmatprep.subr.mxu0 0.0
    %2449 = vmatpush1.msra.mxu0 0.0
    %2450 = vmatprep.subr.mxu0 0.0
    %2451 = vmatpush1.msra.mxu0 0.0
    %2452 = vmatprep.subr.mxu0 0.0
    %2453 = vmatpush1.msra.mxu0 0.0
    %2454 = vmatprep.subr.mxu0 0.0
    %2455 = vmatpush1.msra.mxu0 0.0
    %2456 = vmatprep.subr.mxu0 0.0
    %2457 = vmatpush1.msra.mxu0 0.0
    %2458 = vmatprep.subr.mxu0 0.0
    %2459 = vmatpush1.msra.mxu0 0.0
    %2460 = vmatprep.subr.mxu0 0.0
    %2461 = vmatpush1.msra.mxu0 0.0
    %2462 = vmatprep.subr.mxu0 0.0
    %2463 = vmatpush1.msra.mxu0 0.0
    %2464 = vmatprep.subr.mxu0 0.0
    %2465 = vmatpush1.msra.mxu0 0.0
    %2466 = vmatprep.subr.mxu0 0.0
    %2467 = vmatpush1.msra.mxu0 0.0
    %2468 = vmatprep.subr.mxu0 0.0
    %2469 = vmatpush1.msra.mxu0 0.0
    %2470 = vmatprep.subr.mxu0 0.0
    %2471 = vmatpush1.msra.mxu0 0.0
    %2472 = vmatprep.subr.mxu0 0.0
    %2473 = vmatpush1.msra.mxu0 0.0
    %2474 = vmatprep.subr.mxu0 0.0
    %2475 = vmatpush1.msra.mxu0 0.0
    %2476 = vmatprep.subr.mxu0 0.0
    %2477 = vmatpush1.msra.mxu0 0.0
    %2478 = vmatprep.subr.mxu0 0.0
    %2479 = vmatpush1.msra.mxu0 0.0
    %2480 = vmatprep.subr.mxu0 0.0
    %2481 = vmatpush1.msra.mxu0 0.0
    %2482 = vmatprep.subr.mxu0 0.0
    %2483 = vmatpush1.msra.mxu0 0.0
    %2484 = vmatprep.subr.mxu0 0.0
    %2485 = vmatpush1.msra.mxu0 0.0
    %2486 = vmatprep.subr.mxu0 0.0
    %2487 = vmatpush1.msra.mxu0 0.0
    %2488 = vmatprep.mubr.f32.mxu0 0.0
    %2489 = vmatmul.mubr.f32.gmra.mrb[0].mxu0 %v2422
    %v2490 = vpop.f32.mrb[0].mxu0
    %v2491 = vadd.f32 0.0, %v2490
    %v2492 = vpop.f32.mrb[0].mxu0
    %2493 = vdwg.mxu0
    %v2495 = vrot.slane %v2491, 6
    %v2497 = vadd.f32 %v2214, %v2495
    %v2499 = vrot.slane %v2418, 6
    %2500 = vrot.lane.b32.xlu0 %v2499, 32
    %v2501 = vpop.permute.xlu0 %2500
    %v2502 = vsel %vm122, %v2501, 0
    %2504 = vmatprep.subr.mxu0 0.0
    %2505 = vmatpush1.msra.mxu0 %v2293
    %2506 = vmatprep.subr.mxu0 0.0
    %2507 = vmatpush1.msra.mxu0 %v2294
    %2508 = vmatprep.subr.mxu0 0.0
    %2509 = vmatpush1.msra.mxu0 %v2295
    %2510 = vmatprep.subr.mxu0 0.0
    %2511 = vmatpush1.msra.mxu0 %v2296
    %2512 = vmatprep.subr.mxu0 0.0
    %2513 = vmatpush1.msra.mxu0 0.0
    %2514 = vmatprep.subr.mxu0 0.0
    %2515 = vmatpush1.msra.mxu0 0.0
    %2516 = vmatprep.subr.mxu0 0.0
    %2517 = vmatpush1.msra.mxu0 0.0
    %2518 = vmatprep.subr.mxu0 0.0
    %2519 = vmatpush1.msra.mxu0 0.0
    %2520 = vmatprep.subr.mxu0 0.0
    %2521 = vmatpush1.msra.mxu0 0.0
    %2522 = vmatprep.subr.mxu0 0.0
    %2523 = vmatpush1.msra.mxu0 0.0
    %2524 = vmatprep.subr.mxu0 0.0
    %2525 = vmatpush1.msra.mxu0 0.0
    %2526 = vmatprep.subr.mxu0 0.0
    %2527 = vmatpush1.msra.mxu0 0.0
    %2528 = vmatprep.subr.mxu0 0.0
    %2529 = vmatpush1.msra.mxu0 0.0
    %2530 = vmatprep.subr.mxu0 0.0
    %2531 = vmatpush1.msra.mxu0 0.0
    %2532 = vmatprep.subr.mxu0 0.0
    %2533 = vmatpush1.msra.mxu0 0.0
    %2534 = vmatprep.subr.mxu0 0.0
    %2535 = vmatpush1.msra.mxu0 0.0
    %2536 = vmatprep.subr.mxu0 0.0
    %2537 = vmatpush1.msra.mxu0 0.0
    %2538 = vmatprep.subr.mxu0 0.0
    %2539 = vmatpush1.msra.mxu0 0.0
    %2540 = vmatprep.subr.mxu0 0.0
    %2541 = vmatpush1.msra.mxu0 0.0
    %2542 = vmatprep.subr.mxu0 0.0
    %2543 = vmatpush1.msra.mxu0 0.0
    %2544 = vmatprep.subr.mxu0 0.0
    %2545 = vmatpush1.msra.mxu0 0.0
    %2546 = vmatprep.subr.mxu0 0.0
    %2547 = vmatpush1.msra.mxu0 0.0
    %2548 = vmatprep.subr.mxu0 0.0
    %2549 = vmatpush1.msra.mxu0 0.0
    %2550 = vmatprep.subr.mxu0 0.0
    %2551 = vmatpush1.msra.mxu0 0.0
    %2552 = vmatprep.subr.mxu0 0.0
    %2553 = vmatpush1.msra.mxu0 0.0
    %2554 = vmatprep.subr.mxu0 0.0
    %2555 = vmatpush1.msra.mxu0 0.0
    %2556 = vmatprep.subr.mxu0 0.0
    %2557 = vmatpush1.msra.mxu0 0.0
    %2558 = vmatprep.subr.mxu0 0.0
    %2559 = vmatpush1.msra.mxu0 0.0
    %2560 = vmatprep.subr.mxu0 0.0
    %2561 = vmatpush1.msra.mxu0 0.0
    %2562 = vmatprep.subr.mxu0 0.0
    %2563 = vmatpush1.msra.mxu0 0.0
    %2564 = vmatprep.subr.mxu0 0.0
    %2565 = vmatpush1.msra.mxu0 0.0
    %2566 = vmatprep.subr.mxu0 0.0
    %2567 = vmatpush1.msra.mxu0 0.0
    %2568 = vmatprep.mubr.f32.mxu0 0.0
    %2569 = vmatmul.mubr.f32.gmra.mrb[0].mxu0 %v2502
    %v2570 = vpop.f32.mrb[0].mxu0
    %v2571 = vadd.f32 0.0, %v2570
    %v2572 = vpop.f32.mrb[0].mxu0
    %2573 = vdwg.mxu0
    %v2575 = vrot.slane %v2571, 4
    %v2577 = vadd.f32 %v2217, %v2575
    %v2578 = vxor.u32 %v2497, 2147483648
    %v2579 = vmul.f32 %v2578, 1.442695
    %v2580 = vpow.pop %v2579
    %v2581 = vadd.f32 %v2580, 1.0
    %v2582 = vrcp.pop %v2581
    %v2583 = vmul.f32 1.0, %v2582
    %v2584 = vtanh.pop %v2497
    %v2586 = vrot.slane %v2388, 6
    %v2588 = vmul.f32 %v2583, %v2586
    %2590 = vrot.lane.b32.xlu0 %v2584, 64
    %v2591 = vpop.permute.xlu0 %2590
    %v2593 = vmul.f32 %v2583, %v2591
    %2595 = vrot.lane.b32.xlu0 %v2593, 32
    %v2596 = vpop.permute.xlu0 %2595
    %v2598 = vadd.f32 %v2588, %v2596
    %v2599 = vtanh.pop %v2598
    %2601 = vrot.lane.b32.xlu0 %v2599, 64
    %v2602 = vpop.permute.xlu0 %2601
    %v2604 = vmul.f32 %v2583, %v2602
    %v2605 = vxor.u32 %v2577, 2147483648
    %v2606 = vmul.f32 %v2605, 1.442695
    %v2607 = vpow.pop %v2606
    %v2608 = vadd.f32 %v2607, 1.0
    %v2609 = vrcp.pop %v2608
    %v2610 = vmul.f32 1.0, %v2609
    %v2611 = vtanh.pop %v2577
    %v2613 = vrot.slane %v2412, 2
    %v2615 = vmul.f32 %v2610, %v2613
    %2617 = vrot.lane.b32.xlu0 %v2611, 64
    %v2618 = vpop.permute.xlu0 %2617
    %v2620 = vmul.f32 %v2610, %v2618
    %2622 = vrot.lane.b32.xlu0 %v2620, 32
    %v2623 = vpop.permute.xlu0 %2622
    %v2625 = vadd.f32 %v2615, %v2623
    %v2626 = vtanh.pop %v2625
    %2628 = vrot.lane.b32.xlu0 %v2626, 64
    %v2629 = vpop.permute.xlu0 %2628
    %v2631 = vmul.f32 %v2610, %v2629
    %v2633 = vrot.slane %v2604, 2
    %2634 = vrot.lane.b32.xlu0 %v2633, 32
    %v2635 = vpop.permute.xlu0 %2634
    %v2636 = vsel %vm122, %v2635, 0
    %2638 = vmatprep.subr.mxu0 0.0
    %2639 = vmatpush1.msra.mxu0 %v2218
    %2640 = vmatprep.subr.mxu0 0.0
    %2641 = vmatpush1.msra.mxu0 %v2219
    %2642 = vmatprep.subr.mxu0 0.0
    %2643 = vmatpush1.msra.mxu0 %v2220
    %2644 = vmatprep.subr.mxu0 0.0
    %2645 = vmatpush1.msra.mxu0 %v2221
    %2646 = vmatprep.subr.mxu0 0.0
    %2647 = vmatpush1.msra.mxu0 0.0
    %2648 = vmatprep.subr.mxu0 0.0
    %2649 = vmatpush1.msra.mxu0 0.0
    %2650 = vmatprep.subr.mxu0 0.0
    %2651 = vmatpush1.msra.mxu0 0.0
    %2652 = vmatprep.subr.mxu0 0.0
    %2653 = vmatpush1.msra.mxu0 0.0
    %2654 = vmatprep.subr.mxu0 0.0
    %2655 = vmatpush1.msra.mxu0 0.0
    %2656 = vmatprep.subr.mxu0 0.0
    %2657 = vmatpush1.msra.mxu0 0.0
    %2658 = vmatprep.subr.mxu0 0.0
    %2659 = vmatpush1.msra.mxu0 0.0
    %2660 = vmatprep.subr.mxu0 0.0
    %2661 = vmatpush1.msra.mxu0 0.0
    %2662 = vmatprep.subr.mxu0 0.0
    %2663 = vmatpush1.msra.mxu0 0.0
    %2664 = vmatprep.subr.mxu0 0.0
    %2665 = vmatpush1.msra.mxu0 0.0
    %2666 = vmatprep.subr.mxu0 0.0
    %2667 = vmatpush1.msra.mxu0 0.0
    %2668 = vmatprep.subr.mxu0 0.0
    %2669 = vmatpush1.msra.mxu0 0.0
    %2670 = vmatprep.subr.mxu0 0.0
    %2671 = vmatpush1.msra.mxu0 0.0
    %2672 = vmatprep.subr.mxu0 0.0
    %2673 = vmatpush1.msra.mxu0 0.0
    %2674 = vmatprep.subr.mxu0 0.0
    %2675 = vmatpush1.msra.mxu0 0.0
    %2676 = vmatprep.subr.mxu0 0.0
    %2677 = vmatpush1.msra.mxu0 0.0
    %2678 = vmatprep.subr.mxu0 0.0
    %2679 = vmatpush1.msra.mxu0 0.0
    %2680 = vmatprep.subr.mxu0 0.0
    %2681 = vmatpush1.msra.mxu0 0.0
    %2682 = vmatprep.subr.mxu0 0.0
    %2683 = vmatpush1.msra.mxu0 0.0
    %2684 = vmatprep.subr.mxu0 0.0
    %2685 = vmatpush1.msra.mxu0 0.0
    %2686 = vmatprep.subr.mxu0 0.0
    %2687 = vmatpush1.msra.mxu0 0.0
    %2688 = vmatprep.subr.mxu0 0.0
    %2689 = vmatpush1.msra.mxu0 0.0
    %2690 = vmatprep.subr.mxu0 0.0
    %2691 = vmatpush1.msra.mxu0 0.0
    %2692 = vmatprep.subr.mxu0 0.0
    %2693 = vmatpush1.msra.mxu0 0.0
    %2694 = vmatprep.subr.mxu0 0.0
    %2695 = vmatpush1.msra.mxu0 0.0
    %2696 = vmatprep.subr.mxu0 0.0
    %2697 = vmatpush1.msra.mxu0 0.0
    %2698 = vmatprep.subr.mxu0 0.0
    %2699 = vmatpush1.msra.mxu0 0.0
    %2700 = vmatprep.subr.mxu0 0.0
    %2701 = vmatpush1.msra.mxu0 0.0
    %2702 = vmatprep.mubr.f32.mxu0 0.0
    %2703 = vmatmul.mubr.f32.gmra.mrb[0].mxu0 %v2636
    %v2704 = vpop.f32.mrb[0].mxu0
    %v2705 = vadd.f32 0.0, %v2704
    %v2706 = vpop.f32.mrb[0].mxu0
    %2707 = vdwg.mxu0
    %v2709 = vrot.slane %v2705, 4
    %v2711 = vadd.f32 %v2214, %v2709
    %v2713 = vrot.slane %v2631, 4
    %2714 = vrot.lane.b32.xlu0 %v2713, 32
    %v2715 = vpop.permute.xlu0 %2714
    %v2716 = vsel %vm122, %v2715, 0
    %2718 = vmatprep.subr.mxu0 0.0
    %2719 = vmatpush1.msra.mxu0 %v2293
    %2720 = vmatprep.subr.mxu0 0.0
    %2721 = vmatpush1.msra.mxu0 %v2294
    %2722 = vmatprep.subr.mxu0 0.0
    %2723 = vmatpush1.msra.mxu0 %v2295
    %2724 = vmatprep.subr.mxu0 0.0
    %2725 = vmatpush1.msra.mxu0 %v2296
    %2726 = vmatprep.subr.mxu0 0.0
    %2727 = vmatpush1.msra.mxu0 0.0
    %2728 = vmatprep.subr.mxu0 0.0
    %2729 = vmatpush1.msra.mxu0 0.0
    %2730 = vmatprep.subr.mxu0 0.0
    %2731 = vmatpush1.msra.mxu0 0.0
    %2732 = vmatprep.subr.mxu0 0.0
    %2733 = vmatpush1.msra.mxu0 0.0
    %2734 = vmatprep.subr.mxu0 0.0
    %2735 = vmatpush1.msra.mxu0 0.0
    %2736 = vmatprep.subr.mxu0 0.0
    %2737 = vmatpush1.msra.mxu0 0.0
    %2738 = vmatprep.subr.mxu0 0.0
    %2739 = vmatpush1.msra.mxu0 0.0
    %2740 = vmatprep.subr.mxu0 0.0
    %2741 = vmatpush1.msra.mxu0 0.0
    %2742 = vmatprep.subr.mxu0 0.0
    %2743 = vmatpush1.msra.mxu0 0.0
    %2744 = vmatprep.subr.mxu0 0.0
    %2745 = vmatpush1.msra.mxu0 0.0
    %2746 = vmatprep.subr.mxu0 0.0
    %2747 = vmatpush1.msra.mxu0 0.0
    %2748 = vmatprep.subr.mxu0 0.0
    %2749 = vmatpush1.msra.mxu0 0.0
    %2750 = vmatprep.subr.mxu0 0.0
    %2751 = vmatpush1.msra.mxu0 0.0
    %2752 = vmatprep.subr.mxu0 0.0
    %2753 = vmatpush1.msra.mxu0 0.0
    %2754 = vmatprep.subr.mxu0 0.0
    %2755 = vmatpush1.msra.mxu0 0.0
    %2756 = vmatprep.subr.mxu0 0.0
    %2757 = vmatpush1.msra.mxu0 0.0
    %2758 = vmatprep.subr.mxu0 0.0
    %2759 = vmatpush1.msra.mxu0 0.0
    %2760 = vmatprep.subr.mxu0 0.0
    %2761 = vmatpush1.msra.mxu0 0.0
    %2762 = vmatprep.subr.mxu0 0.0
    %2763 = vmatpush1.msra.mxu0 0.0
    %2764 = vmatprep.subr.mxu0 0.0
    %2765 = vmatpush1.msra.mxu0 0.0
    %2766 = vmatprep.subr.mxu0 0.0
    %2767 = vmatpush1.msra.mxu0 0.0
    %2768 = vmatprep.subr.mxu0 0.0
    %2769 = vmatpush1.msra.mxu0 0.0
    %2770 = vmatprep.subr.mxu0 0.0
    %2771 = vmatpush1.msra.mxu0 0.0
    %2772 = vmatprep.subr.mxu0 0.0
    %2773 = vmatpush1.msra.mxu0 0.0
    %2774 = vmatprep.subr.mxu0 0.0
    %2775 = vmatpush1.msra.mxu0 0.0
    %2776 = vmatprep.subr.mxu0 0.0
    %2777 = vmatpush1.msra.mxu0 0.0
    %2778 = vmatprep.subr.mxu0 0.0
    %2779 = vmatpush1.msra.mxu0 0.0
    %2780 = vmatprep.subr.mxu0 0.0
    %2781 = vmatpush1.msra.mxu0 0.0
    %2782 = vmatprep.mubr.f32.mxu0 0.0
    %2783 = vmatmul.mubr.f32.gmra.mrb[0].mxu0 %v2716
    %v2784 = vpop.f32.mrb[0].mxu0
    %v2785 = vadd.f32 0.0, %v2784
    %v2786 = vpop.f32.mrb[0].mxu0
    %2787 = vdwg.mxu0
    %v2789 = vrot.slane %v2785, 6
    %v2791 = vadd.f32 %v2217, %v2789
    %v2792 = vxor.u32 %v2711, 2147483648
    %v2793 = vmul.f32 %v2792, 1.442695
    %v2794 = vpow.pop %v2793
    %v2795 = vadd.f32 %v2794, 1.0
    %v2796 = vrcp.pop %v2795
    %v2797 = vmul.f32 1.0, %v2796
    %v2798 = vtanh.pop %v2711
    %v2800 = vrot.slane %v2598, 6
    %v2802 = vmul.f32 %v2797, %v2800
    %2804 = vrot.lane.b32.xlu0 %v2798, 64
    %v2805 = vpop.permute.xlu0 %2804
    %v2807 = vmul.f32 %v2797, %v2805
    %2809 = vrot.lane.b32.xlu0 %v2807, 32
    %v2810 = vpop.permute.xlu0 %2809
    %v2812 = vadd.f32 %v2802, %v2810
    %v2813 = vtanh.pop %v2812
    %2815 = vrot.lane.b32.xlu0 %v2813, 64
    %v2816 = vpop.permute.xlu0 %2815
    %v2818 = vmul.f32 %v2797, %v2816
    %v2819 = vxor.u32 %v2791, 2147483648
    %v2820 = vmul.f32 %v2819, 1.442695
    %v2821 = vpow.pop %v2820
    %v2822 = vadd.f32 %v2821, 1.0
    %v2823 = vrcp.pop %v2822
    %v2824 = vmul.f32 1.0, %v2823
    %v2825 = vtanh.pop %v2791
    %v2827 = vrot.slane %v2625, 2
    %v2829 = vmul.f32 %v2824, %v2827
    %2831 = vrot.lane.b32.xlu0 %v2825, 64
    %v2832 = vpop.permute.xlu0 %2831
    %v2834 = vmul.f32 %v2824, %v2832
    %2836 = vrot.lane.b32.xlu0 %v2834, 32
    %v2837 = vpop.permute.xlu0 %2836
    %v2839 = vadd.f32 %v2829, %v2837
    %v2840 = vtanh.pop %v2839
    %2842 = vrot.lane.b32.xlu0 %v2840, 64
    %v2843 = vpop.permute.xlu0 %2842
    %v2845 = vmul.f32 %v2824, %v2843
    %v2847 = vrot.slane %v2818, 4
    %2848 = vrot.lane.b32.xlu0 %v2847, 32
    %v2849 = vpop.permute.xlu0 %2848
    %v2850 = vsel %vm122, %v2849, 0
    %2852 = vmatprep.subr.mxu0 0.0
    %2853 = vmatpush1.msra.mxu0 %v2218
    %2854 = vmatprep.subr.mxu0 0.0
    %2855 = vmatpush1.msra.mxu0 %v2219
    %2856 = vmatprep.subr.mxu0 0.0
    %2857 = vmatpush1.msra.mxu0 %v2220
    %2858 = vmatprep.subr.mxu0 0.0
    %2859 = vmatpush1.msra.mxu0 %v2221
    %2860 = vmatprep.subr.mxu0 0.0
    %2861 = vmatpush1.msra.mxu0 0.0
    %2862 = vmatprep.subr.mxu0 0.0
    %2863 = vmatpush1.msra.mxu0 0.0
    %2864 = vmatprep.subr.mxu0 0.0
    %2865 = vmatpush1.msra.mxu0 0.0
    %2866 = vmatprep.subr.mxu0 0.0
    %2867 = vmatpush1.msra.mxu0 0.0
    %2868 = vmatprep.subr.mxu0 0.0
    %2869 = vmatpush1.msra.mxu0 0.0
    %2870 = vmatprep.subr.mxu0 0.0
    %2871 = vmatpush1.msra.mxu0 0.0
    %2872 = vmatprep.subr.mxu0 0.0
    %2873 = vmatpush1.msra.mxu0 0.0
    %2874 = vmatprep.subr.mxu0 0.0
    %2875 = vmatpush1.msra.mxu0 0.0
    %2876 = vmatprep.subr.mxu0 0.0
    %2877 = vmatpush1.msra.mxu0 0.0
    %2878 = vmatprep.subr.mxu0 0.0
    %2879 = vmatpush1.msra.mxu0 0.0
    %2880 = vmatprep.subr.mxu0 0.0
    %2881 = vmatpush1.msra.mxu0 0.0
    %2882 = vmatprep.subr.mxu0 0.0
    %2883 = vmatpush1.msra.mxu0 0.0
    %2884 = vmatprep.subr.mxu0 0.0
    %2885 = vmatpush1.msra.mxu0 0.0
    %2886 = vmatprep.subr.mxu0 0.0
    %2887 = vmatpush1.msra.mxu0 0.0
    %2888 = vmatprep.subr.mxu0 0.0
    %2889 = vmatpush1.msra.mxu0 0.0
    %2890 = vmatprep.subr.mxu0 0.0
    %2891 = vmatpush1.msra.mxu0 0.0
    %2892 = vmatprep.subr.mxu0 0.0
    %2893 = vmatpush1.msra.mxu0 0.0
    %2894 = vmatprep.subr.mxu0 0.0
    %2895 = vmatpush1.msra.mxu0 0.0
    %2896 = vmatprep.subr.mxu0 0.0
    %2897 = vmatpush1.msra.mxu0 0.0
    %2898 = vmatprep.subr.mxu0 0.0
    %2899 = vmatpush1.msra.mxu0 0.0
    %2900 = vmatprep.subr.mxu0 0.0
    %2901 = vmatpush1.msra.mxu0 0.0
    %2902 = vmatprep.subr.mxu0 0.0
    %2903 = vmatpush1.msra.mxu0 0.0
    %2904 = vmatprep.subr.mxu0 0.0
    %2905 = vmatpush1.msra.mxu0 0.0
    %2906 = vmatprep.subr.mxu0 0.0
    %2907 = vmatpush1.msra.mxu0 0.0
    %2908 = vmatprep.subr.mxu0 0.0
    %2909 = vmatpush1.msra.mxu0 0.0
    %2910 = vmatprep.subr.mxu0 0.0
    %2911 = vmatpush1.msra.mxu0 0.0
    %2912 = vmatprep.subr.mxu0 0.0
    %2913 = vmatpush1.msra.mxu0 0.0
    %2914 = vmatprep.subr.mxu0 0.0
    %2915 = vmatpush1.msra.mxu0 0.0
    %2916 = vmatprep.mubr.f32.mxu0 0.0
    %2917 = vmatmul.mubr.f32.gmra.mrb[0].mxu0 %v2850
    %v2918 = vpop.f32.mrb[0].mxu0
    %v2919 = vadd.f32 0.0, %v2918
    %v2920 = vpop.f32.mrb[0].mxu0
    %2921 = vdwg.mxu0
    %v2923 = vrot.slane %v2919, 2
    %v2925 = vadd.f32 %v2214, %v2923
    %v2927 = vrot.slane %v2845, 2
    %2928 = vrot.lane.b32.xlu0 %v2927, 32
    %v2929 = vpop.permute.xlu0 %2928
    %v2930 = vsel %vm122, %v2929, 0
    %2932 = vmatprep.subr.mxu0 0.0
    %2933 = vmatpush1.msra.mxu0 %v2293
    %2934 = vmatprep.subr.mxu0 0.0
    %2935 = vmatpush1.msra.mxu0 %v2294
    %2936 = vmatprep.subr.mxu0 0.0
    %2937 = vmatpush1.msra.mxu0 %v2295
    %2938 = vmatprep.subr.mxu0 0.0
    %2939 = vmatpush1.msra.mxu0 %v2296
    %2940 = vmatprep.subr.mxu0 0.0
    %2941 = vmatpush1.msra.mxu0 0.0
    %2942 = vmatprep.subr.mxu0 0.0
    %2943 = vmatpush1.msra.mxu0 0.0
    %2944 = vmatprep.subr.mxu0 0.0
    %2945 = vmatpush1.msra.mxu0 0.0
    %2946 = vmatprep.subr.mxu0 0.0
    %2947 = vmatpush1.msra.mxu0 0.0
    %2948 = vmatprep.subr.mxu0 0.0
    %2949 = vmatpush1.msra.mxu0 0.0
    %2950 = vmatprep.subr.mxu0 0.0
    %2951 = vmatpush1.msra.mxu0 0.0
    %2952 = vmatprep.subr.mxu0 0.0
    %2953 = vmatpush1.msra.mxu0 0.0
    %2954 = vmatprep.subr.mxu0 0.0
    %2955 = vmatpush1.msra.mxu0 0.0
    %2956 = vmatprep.subr.mxu0 0.0
    %2957 = vmatpush1.msra.mxu0 0.0
    %2958 = vmatprep.subr.mxu0 0.0
    %2959 = vmatpush1.msra.mxu0 0.0
    %2960 = vmatprep.subr.mxu0 0.0
    %2961 = vmatpush1.msra.mxu0 0.0
    %2962 = vmatprep.subr.mxu0 0.0
    %2963 = vmatpush1.msra.mxu0 0.0
    %2964 = vmatprep.subr.mxu0 0.0
    %2965 = vmatpush1.msra.mxu0 0.0
    %2966 = vmatprep.subr.mxu0 0.0
    %2967 = vmatpush1.msra.mxu0 0.0
    %2968 = vmatprep.subr.mxu0 0.0
    %2969 = vmatpush1.msra.mxu0 0.0
    %2970 = vmatprep.subr.mxu0 0.0
    %2971 = vmatpush1.msra.mxu0 0.0
    %2972 = vmatprep.subr.mxu0 0.0
    %2973 = vmatpush1.msra.mxu0 0.0
    %2974 = vmatprep.subr.mxu0 0.0
    %2975 = vmatpush1.msra.mxu0 0.0
    %2976 = vmatprep.subr.mxu0 0.0
    %2977 = vmatpush1.msra.mxu0 0.0
    %2978 = vmatprep.subr.mxu0 0.0
    %2979 = vmatpush1.msra.mxu0 0.0
    %2980 = vmatprep.subr.mxu0 0.0
    %2981 = vmatpush1.msra.mxu0 0.0
    %2982 = vmatprep.subr.mxu0 0.0
    %2983 = vmatpush1.msra.mxu0 0.0
    %2984 = vmatprep.subr.mxu0 0.0
    %2985 = vmatpush1.msra.mxu0 0.0
    %2986 = vmatprep.subr.mxu0 0.0
    %2987 = vmatpush1.msra.mxu0 0.0
    %2988 = vmatprep.subr.mxu0 0.0
    %2989 = vmatpush1.msra.mxu0 0.0
    %2990 = vmatprep.subr.mxu0 0.0
    %2991 = vmatpush1.msra.mxu0 0.0
    %2992 = vmatprep.subr.mxu0 0.0
    %2993 = vmatpush1.msra.mxu0 0.0
    %2994 = vmatprep.subr.mxu0 0.0
    %2995 = vmatpush1.msra.mxu0 0.0
    %2996 = vmatprep.mubr.f32.mxu0 0.0
    %2997 = vmatmul.mubr.f32.gmra.mrb[0].mxu0 %v2930
    %v2998 = vpop.f32.mrb[0].mxu0
    %v2999 = vadd.f32 0.0, %v2998
    %v3000 = vpop.f32.mrb[0].mxu0
    %3001 = vdwg.mxu0
    %v3002 = vadd.f32 %v2217, %v2999
    %v3003 = vxor.u32 %v2925, 2147483648
    %v3004 = vmul.f32 %v3003, 1.442695
    %v3005 = vpow.pop %v3004
    %v3006 = vadd.f32 %v3005, 1.0
    %v3007 = vrcp.pop %v3006
    %v3008 = vmul.f32 1.0, %v3007
    %v3009 = vtanh.pop %v2925
    %v3011 = vrot.slane %v2812, 6
    %v3013 = vmul.f32 %v3008, %v3011
    %3015 = vrot.lane.b32.xlu0 %v3009, 64
    %v3016 = vpop.permute.xlu0 %3015
    %v3018 = vmul.f32 %v3008, %v3016
    %3020 = vrot.lane.b32.xlu0 %v3018, 32
    %v3021 = vpop.permute.xlu0 %3020
    %v3023 = vadd.f32 %v3013, %v3021
    %v3024 = vtanh.pop %v3023
    %3026 = vrot.lane.b32.xlu0 %v3024, 64
    %v3027 = vpop.permute.xlu0 %3026
    %v3029 = vmul.f32 %v3008, %v3027
    %v3030 = vxor.u32 %v3002, 2147483648
    %v3031 = vmul.f32 %v3030, 1.442695
    %v3032 = vpow.pop %v3031
    %v3033 = vadd.f32 %v3032, 1.0
    %v3034 = vrcp.pop %v3033
    %v3035 = vmul.f32 1.0, %v3034
    %v3036 = vtanh.pop %v3002
    %v3038 = vrot.slane %v2839, 2
    %v3040 = vmul.f32 %v3035, %v3038
    %3042 = vrot.lane.b32.xlu0 %v3036, 64
    %v3043 = vpop.permute.xlu0 %3042
    %v3045 = vmul.f32 %v3035, %v3043
    %3047 = vrot.lane.b32.xlu0 %v3045, 32
    %v3048 = vpop.permute.xlu0 %3047
    %v3050 = vadd.f32 %v3040, %v3048
    %v3051 = vtanh.pop %v3050
    %3053 = vrot.lane.b32.xlu0 %v3051, 64
    %v3054 = vpop.permute.xlu0 %3053
    %v3056 = vmul.f32 %v3035, %v3054
    %v3058 = vrot.slane %v3029, 6
    %3059 = vrot.lane.b32.xlu0 %v3058, 32
    %v3060 = vpop.permute.xlu0 %3059
    %v3061 = vsel %vm122, %v3060, 0
    %3063 = vmatprep.subr.mxu0 0.0
    %3064 = vmatpush1.msra.mxu0 %v2218
    %3065 = vmatprep.subr.mxu0 0.0
    %3066 = vmatpush1.msra.mxu0 %v2219
    %3067 = vmatprep.subr.mxu0 0.0
    %3068 = vmatpush1.msra.mxu0 %v2220
    %3069 = vmatprep.subr.mxu0 0.0
    %3070 = vmatpush1.msra.mxu0 %v2221
    %3071 = vmatprep.subr.mxu0 0.0
    %3072 = vmatpush1.msra.mxu0 0.0
    %3073 = vmatprep.subr.mxu0 0.0
    %3074 = vmatpush1.msra.mxu0 0.0
    %3075 = vmatprep.subr.mxu0 0.0
    %3076 = vmatpush1.msra.mxu0 0.0
    %3077 = vmatprep.subr.mxu0 0.0
    %3078 = vmatpush1.msra.mxu0 0.0
    %3079 = vmatprep.subr.mxu0 0.0
    %3080 = vmatpush1.msra.mxu0 0.0
    %3081 = vmatprep.subr.mxu0 0.0
    %3082 = vmatpush1.msra.mxu0 0.0
    %3083 = vmatprep.subr.mxu0 0.0
    %3084 = vmatpush1.msra.mxu0 0.0
    %3085 = vmatprep.subr.mxu0 0.0
    %3086 = vmatpush1.msra.mxu0 0.0
    %3087 = vmatprep.subr.mxu0 0.0
    %3088 = vmatpush1.msra.mxu0 0.0
    %3089 = vmatprep.subr.mxu0 0.0
    %3090 = vmatpush1.msra.mxu0 0.0
    %3091 = vmatprep.subr.mxu0 0.0
    %3092 = vmatpush1.msra.mxu0 0.0
    %3093 = vmatprep.subr.mxu0 0.0
    %3094 = vmatpush1.msra.mxu0 0.0
    %3095 = vmatprep.subr.mxu0 0.0
    %3096 = vmatpush1.msra.mxu0 0.0
    %3097 = vmatprep.subr.mxu0 0.0
    %3098 = vmatpush1.msra.mxu0 0.0
    %3099 = vmatprep.subr.mxu0 0.0
    %3100 = vmatpush1.msra.mxu0 0.0
    %3101 = vmatprep.subr.mxu0 0.0
    %3102 = vmatpush1.msra.mxu0 0.0
    %3103 = vmatprep.subr.mxu0 0.0
    %3104 = vmatpush1.msra.mxu0 0.0
    %3105 = vmatprep.subr.mxu0 0.0
    %3106 = vmatpush1.msra.mxu0 0.0
    %3107 = vmatprep.subr.mxu0 0.0
    %3108 = vmatpush1.msra.mxu0 0.0
    %3109 = vmatprep.subr.mxu0 0.0
    %3110 = vmatpush1.msra.mxu0 0.0
    %3111 = vmatprep.subr.mxu0 0.0
    %3112 = vmatpush1.msra.mxu0 0.0
    %3113 = vmatprep.subr.mxu0 0.0
    %3114 = vmatpush1.msra.mxu0 0.0
    %3115 = vmatprep.subr.mxu0 0.0
    %3116 = vmatpush1.msra.mxu0 0.0
    %3117 = vmatprep.subr.mxu0 0.0
    %3118 = vmatpush1.msra.mxu0 0.0
    %3119 = vmatprep.subr.mxu0 0.0
    %3120 = vmatpush1.msra.mxu0 0.0
    %3121 = vmatprep.subr.mxu0 0.0
    %3122 = vmatpush1.msra.mxu0 0.0
    %3123 = vmatprep.subr.mxu0 0.0
    %3124 = vmatpush1.msra.mxu0 0.0
    %3125 = vmatprep.subr.mxu0 0.0
    %3126 = vmatpush1.msra.mxu0 0.0
    %3127 = vmatprep.mubr.f32.mxu0 0.0
    %3128 = vmatmul.mubr.f32.gmra.mrb[0].mxu0 %v3061
    %v3129 = vpop.f32.mrb[0].mxu0
    %v3130 = vadd.f32 0.0, %v3129
    %v3131 = vpop.f32.mrb[0].mxu0
    %3132 = vdwg.mxu0
    %v3133 = vadd.f32 %v2216, %v3130
    %3135 = vrot.lane.b32.xlu0 %v3056, 32
    %v3136 = vpop.permute.xlu0 %3135
    %v3137 = vsel %vm122, %v3136, 0
    %3139 = vmatprep.subr.mxu0 0.0
    %3140 = vmatpush1.msra.mxu0 %v2293
    %3141 = vmatprep.subr.mxu0 0.0
    %3142 = vmatpush1.msra.mxu0 %v2294
    %3143 = vmatprep.subr.mxu0 0.0
    %3144 = vmatpush1.msra.mxu0 %v2295
    %3145 = vmatprep.subr.mxu0 0.0
    %3146 = vmatpush1.msra.mxu0 %v2296
    %3147 = vmatprep.subr.mxu0 0.0
    %3148 = vmatpush1.msra.mxu0 0.0
    %3149 = vmatprep.subr.mxu0 0.0
    %3150 = vmatpush1.msra.mxu0 0.0
    %3151 = vmatprep.subr.mxu0 0.0
    %3152 = vmatpush1.msra.mxu0 0.0
    %3153 = vmatprep.subr.mxu0 0.0
    %3154 = vmatpush1.msra.mxu0 0.0
    %3155 = vmatprep.subr.mxu0 0.0
    %3156 = vmatpush1.msra.mxu0 0.0
    %3157 = vmatprep.subr.mxu0 0.0
    %3158 = vmatpush1.msra.mxu0 0.0
    %3159 = vmatprep.subr.mxu0 0.0
    %3160 = vmatpush1.msra.mxu0 0.0
    %3161 = vmatprep.subr.mxu0 0.0
    %3162 = vmatpush1.msra.mxu0 0.0
    %3163 = vmatprep.subr.mxu0 0.0
    %3164 = vmatpush1.msra.mxu0 0.0
    %3165 = vmatprep.subr.mxu0 0.0
    %3166 = vmatpush1.msra.mxu0 0.0
    %3167 = vmatprep.subr.mxu0 0.0
    %3168 = vmatpush1.msra.mxu0 0.0
    %3169 = vmatprep.subr.mxu0 0.0
    %3170 = vmatpush1.msra.mxu0 0.0
    %3171 = vmatprep.subr.mxu0 0.0
    %3172 = vmatpush1.msra.mxu0 0.0
    %3173 = vmatprep.subr.mxu0 0.0
    %3174 = vmatpush1.msra.mxu0 0.0
    %3175 = vmatprep.subr.mxu0 0.0
    %3176 = vmatpush1.msra.mxu0 0.0
    %3177 = vmatprep.subr.mxu0 0.0
    %3178 = vmatpush1.msra.mxu0 0.0
    %3179 = vmatprep.subr.mxu0 0.0
    %3180 = vmatpush1.msra.mxu0 0.0
    %3181 = vmatprep.subr.mxu0 0.0
    %3182 = vmatpush1.msra.mxu0 0.0
    %3183 = vmatprep.subr.mxu0 0.0
    %3184 = vmatpush1.msra.mxu0 0.0
    %3185 = vmatprep.subr.mxu0 0.0
    %3186 = vmatpush1.msra.mxu0 0.0
    %3187 = vmatprep.subr.mxu0 0.0
    %3188 = vmatpush1.msra.mxu0 0.0
    %3189 = vmatprep.subr.mxu0 0.0
    %3190 = vmatpush1.msra.mxu0 0.0
    %3191 = vmatprep.subr.mxu0 0.0
    %3192 = vmatpush1.msra.mxu0 0.0
    %3193 = vmatprep.subr.mxu0 0.0
    %3194 = vmatpush1.msra.mxu0 0.0
    %3195 = vmatprep.subr.mxu0 0.0
    %3196 = vmatpush1.msra.mxu0 0.0
    %3197 = vmatprep.subr.mxu0 0.0
    %3198 = vmatpush1.msra.mxu0 0.0
    %3199 = vmatprep.subr.mxu0 0.0
    %3200 = vmatpush1.msra.mxu0 0.0
    %3201 = vmatprep.subr.mxu0 0.0
    %3202 = vmatpush1.msra.mxu0 0.0
    %3203 = vmatprep.mubr.f32.mxu0 0.0
    %3204 = vmatmul.mubr.f32.gmra.mrb[0].mxu0 %v3137
    %v3205 = vpop.f32.mrb[0].mxu0
    %v3206 = vadd.f32 0.0, %v3205
    %v3207 = vpop.f32.mrb[0].mxu0
    %3208 = vdwg.mxu0
    %v3210 = vrot.slane %v3206, 2
    %v3212 = vadd.f32 %v2215, %v3210
    %v3213 = vxor.u32 %v3133, 2147483648
    %v3214 = vmul.f32 %v3213, 1.442695
    %v3215 = vpow.pop %v3214
    %v3216 = vadd.f32 %v3215, 1.0
    %v3217 = vrcp.pop %v3216
    %v3218 = vmul.f32 1.0, %v3217
    %v3219 = vtanh.pop %v3133
    %v3221 = vrot.slane %v3023, 6
    %v3223 = vmul.f32 %v3218, %v3221
    %3225 = vrot.lane.b32.xlu0 %v3219, 64
    %v3226 = vpop.permute.xlu0 %3225
    %v3228 = vmul.f32 %v3218, %v3226
    %3230 = vrot.lane.b32.xlu0 %v3228, 32
    %v3231 = vpop.permute.xlu0 %3230
    %v3233 = vadd.f32 %v3223, %v3231
    %v3234 = vtanh.pop %v3233
    %3236 = vrot.lane.b32.xlu0 %v3234, 64
    %v3237 = vpop.permute.xlu0 %3236
    %v3239 = vmul.f32 %v3218, %v3237
    %v3240 = vxor.u32 %v3212, 2147483648
    %v3241 = vmul.f32 %v3240, 1.442695
    %v3242 = vpow.pop %v3241
    %v3243 = vadd.f32 %v3242, 1.0
    %v3244 = vrcp.pop %v3243
    %v3245 = vmul.f32 1.0, %v3244
    %v3246 = vtanh.pop %v3212
    %v3248 = vrot.slane %v3050, 2
    %v3250 = vmul.f32 %v3245, %v3248
    %3252 = vrot.lane.b32.xlu0 %v3246, 64
    %v3253 = vpop.permute.xlu0 %3252
    %v3255 = vmul.f32 %v3245, %v3253
    %3257 = vrot.lane.b32.xlu0 %v3255, 32
    %v3258 = vpop.permute.xlu0 %3257
    %v3260 = vadd.f32 %v3250, %v3258
    %v3261 = vtanh.pop %v3260
    %3263 = vrot.lane.b32.xlu0 %v3261, 64
    %v3264 = vpop.permute.xlu0 %3263
    %v3266 = vmul.f32 %v3245, %v3264
    %3268 = vrot.lane.b32.xlu0 %v3239, 32
    %v3269 = vpop.permute.xlu0 %3268
    %v3270 = vsel %vm122, %v3269, 0
    %3272 = vmatprep.subr.mxu0 0.0
    %3273 = vmatpush1.msra.mxu0 %v2218
    %3274 = vmatprep.subr.mxu0 0.0
    %3275 = vmatpush1.msra.mxu0 %v2219
    %3276 = vmatprep.subr.mxu0 0.0
    %3277 = vmatpush1.msra.mxu0 %v2220
    %3278 = vmatprep.subr.mxu0 0.0
    %3279 = vmatpush1.msra.mxu0 %v2221
    %3280 = vmatprep.subr.mxu0 0.0
    %3281 = vmatpush1.msra.mxu0 0.0
    %3282 = vmatprep.subr.mxu0 0.0
    %3283 = vmatpush1.msra.mxu0 0.0
    %3284 = vmatprep.subr.mxu0 0.0
    %3285 = vmatpush1.msra.mxu0 0.0
    %3286 = vmatprep.subr.mxu0 0.0
    %3287 = vmatpush1.msra.mxu0 0.0
    %3288 = vmatprep.subr.mxu0 0.0
    %3289 = vmatpush1.msra.mxu0 0.0
    %3290 = vmatprep.subr.mxu0 0.0
    %3291 = vmatpush1.msra.mxu0 0.0
    %3292 = vmatprep.subr.mxu0 0.0
    %3293 = vmatpush1.msra.mxu0 0.0
    %3294 = vmatprep.subr.mxu0 0.0
    %3295 = vmatpush1.msra.mxu0 0.0
    %3296 = vmatprep.subr.mxu0 0.0
    %3297 = vmatpush1.msra.mxu0 0.0
    %3298 = vmatprep.subr.mxu0 0.0
    %3299 = vmatpush1.msra.mxu0 0.0
    %3300 = vmatprep.subr.mxu0 0.0
    %3301 = vmatpush1.msra.mxu0 0.0
    %3302 = vmatprep.subr.mxu0 0.0
    %3303 = vmatpush1.msra.mxu0 0.0
    %3304 = vmatprep.subr.mxu0 0.0
    %3305 = vmatpush1.msra.mxu0 0.0
    %3306 = vmatprep.subr.mxu0 0.0
    %3307 = vmatpush1.msra.mxu0 0.0
    %3308 = vmatprep.subr.mxu0 0.0
    %3309 = vmatpush1.msra.mxu0 0.0
    %3310 = vmatprep.subr.mxu0 0.0
    %3311 = vmatpush1.msra.mxu0 0.0
    %3312 = vmatprep.subr.mxu0 0.0
    %3313 = vmatpush1.msra.mxu0 0.0
    %3314 = vmatprep.subr.mxu0 0.0
    %3315 = vmatpush1.msra.mxu0 0.0
    %3316 = vmatprep.subr.mxu0 0.0
    %3317 = vmatpush1.msra.mxu0 0.0
    %3318 = vmatprep.subr.mxu0 0.0
    %3319 = vmatpush1.msra.mxu0 0.0
    %3320 = vmatprep.subr.mxu0 0.0
    %3321 = vmatpush1.msra.mxu0 0.0
    %3322 = vmatprep.subr.mxu0 0.0
    %3323 = vmatpush1.msra.mxu0 0.0
    %3324 = vmatprep.subr.mxu0 0.0
    %3325 = vmatpush1.msra.mxu0 0.0
    %3326 = vmatprep.subr.mxu0 0.0
    %3327 = vmatpush1.msra.mxu0 0.0
    %3328 = vmatprep.subr.mxu0 0.0
    %3329 = vmatpush1.msra.mxu0 0.0
    %3330 = vmatprep.subr.mxu0 0.0
    %3331 = vmatpush1.msra.mxu0 0.0
    %3332 = vmatprep.subr.mxu0 0.0
    %3333 = vmatpush1.msra.mxu0 0.0
    %3334 = vmatprep.subr.mxu0 0.0
    %3335 = vmatpush1.msra.mxu0 0.0
    %3336 = vmatprep.mubr.f32.mxu0 0.0
    %3337 = vmatmul.mubr.f32.gmra.mrb[0].mxu0 %v3270
    %v3338 = vpop.f32.mrb[0].mxu0
    %v3339 = vadd.f32 0.0, %v3338
    %v3340 = vpop.f32.mrb[0].mxu0
    %3341 = vdwg.mxu0
    %v3343 = vrot.slane %v3339, 6
    %v3345 = vadd.f32 %v2216, %v3343
    %v3347 = vrot.slane %v3266, 6
    %3348 = vrot.lane.b32.xlu0 %v3347, 32
    %v3349 = vpop.permute.xlu0 %3348
    %v3350 = vsel %vm122, %v3349, 0
    %3352 = vmatprep.subr.mxu0 0.0
    %3353 = vmatpush1.msra.mxu0 %v2293
    %3354 = vmatprep.subr.mxu0 0.0
    %3355 = vmatpush1.msra.mxu0 %v2294
    %3356 = vmatprep.subr.mxu0 0.0
    %3357 = vmatpush1.msra.mxu0 %v2295
    %3358 = vmatprep.subr.mxu0 0.0
    %3359 = vmatpush1.msra.mxu0 %v2296
    %3360 = vmatprep.subr.mxu0 0.0
    %3361 = vmatpush1.msra.mxu0 0.0
    %3362 = vmatprep.subr.mxu0 0.0
    %3363 = vmatpush1.msra.mxu0 0.0
    %3364 = vmatprep.subr.mxu0 0.0
    %3365 = vmatpush1.msra.mxu0 0.0
    %3366 = vmatprep.subr.mxu0 0.0
    %3367 = vmatpush1.msra.mxu0 0.0
    %3368 = vmatprep.subr.mxu0 0.0
    %3369 = vmatpush1.msra.mxu0 0.0
    %3370 = vmatprep.subr.mxu0 0.0
    %3371 = vmatpush1.msra.mxu0 0.0
    %3372 = vmatprep.subr.mxu0 0.0
    %3373 = vmatpush1.msra.mxu0 0.0
    %3374 = vmatprep.subr.mxu0 0.0
    %3375 = vmatpush1.msra.mxu0 0.0
    %3376 = vmatprep.subr.mxu0 0.0
    %3377 = vmatpush1.msra.mxu0 0.0
    %3378 = vmatprep.subr.mxu0 0.0
    %3379 = vmatpush1.msra.mxu0 0.0
    %3380 = vmatprep.subr.mxu0 0.0
    %3381 = vmatpush1.msra.mxu0 0.0
    %3382 = vmatprep.subr.mxu0 0.0
    %3383 = vmatpush1.msra.mxu0 0.0
    %3384 = vmatprep.subr.mxu0 0.0
    %3385 = vmatpush1.msra.mxu0 0.0
    %3386 = vmatprep.subr.mxu0 0.0
    %3387 = vmatpush1.msra.mxu0 0.0
    %3388 = vmatprep.subr.mxu0 0.0
    %3389 = vmatpush1.msra.mxu0 0.0
    %3390 = vmatprep.subr.mxu0 0.0
    %3391 = vmatpush1.msra.mxu0 0.0
    %3392 = vmatprep.subr.mxu0 0.0
    %3393 = vmatpush1.msra.mxu0 0.0
    %3394 = vmatprep.subr.mxu0 0.0
    %3395 = vmatpush1.msra.mxu0 0.0
    %3396 = vmatprep.subr.mxu0 0.0
    %3397 = vmatpush1.msra.mxu0 0.0
    %3398 = vmatprep.subr.mxu0 0.0
    %3399 = vmatpush1.msra.mxu0 0.0
    %3400 = vmatprep.subr.mxu0 0.0
    %3401 = vmatpush1.msra.mxu0 0.0
    %3402 = vmatprep.subr.mxu0 0.0
    %3403 = vmatpush1.msra.mxu0 0.0
    %3404 = vmatprep.subr.mxu0 0.0
    %3405 = vmatpush1.msra.mxu0 0.0
    %3406 = vmatprep.subr.mxu0 0.0
    %3407 = vmatpush1.msra.mxu0 0.0
    %3408 = vmatprep.subr.mxu0 0.0
    %3409 = vmatpush1.msra.mxu0 0.0
    %3410 = vmatprep.subr.mxu0 0.0
    %3411 = vmatpush1.msra.mxu0 0.0
    %3412 = vmatprep.subr.mxu0 0.0
    %3413 = vmatpush1.msra.mxu0 0.0
    %3414 = vmatprep.subr.mxu0 0.0
    %3415 = vmatpush1.msra.mxu0 0.0
    %3416 = vmatprep.mubr.f32.mxu0 0.0
    %3417 = vmatmul.mubr.f32.gmra.mrb[0].mxu0 %v3350
    %v3418 = vpop.f32.mrb[0].mxu0
    %v3419 = vadd.f32 0.0, %v3418
    %v3420 = vpop.f32.mrb[0].mxu0
    %3421 = vdwg.mxu0
    %v3423 = vrot.slane %v3419, 4
    %v3425 = vadd.f32 %v2215, %v3423
    %v3426 = vxor.u32 %v3345, 2147483648
    %v3427 = vmul.f32 %v3426, 1.442695
    %v3428 = vpow.pop %v3427
    %v3429 = vadd.f32 %v3428, 1.0
    %v3430 = vrcp.pop %v3429
    %v3431 = vmul.f32 1.0, %v3430
    %v3432 = vtanh.pop %v3345
    %v3434 = vrot.slane %v3233, 6
    %v3436 = vmul.f32 %v3431, %v3434
    %3438 = vrot.lane.b32.xlu0 %v3432, 64
    %v3439 = vpop.permute.xlu0 %3438
    %v3441 = vmul.f32 %v3431, %v3439
    %3443 = vrot.lane.b32.xlu0 %v3441, 32
    %v3444 = vpop.permute.xlu0 %3443
    %v3446 = vadd.f32 %v3436, %v3444
    %v3447 = vtanh.pop %v3446
    %3449 = vrot.lane.b32.xlu0 %v3447, 64
    %v3450 = vpop.permute.xlu0 %3449
    %v3452 = vmul.f32 %v3431, %v3450
    %v3453 = vxor.u32 %v3425, 2147483648
    %v3454 = vmul.f32 %v3453, 1.442695
    %v3455 = vpow.pop %v3454
    %v3456 = vadd.f32 %v3455, 1.0
    %v3457 = vrcp.pop %v3456
    %v3458 = vmul.f32 1.0, %v3457
    %v3459 = vtanh.pop %v3425
    %v3461 = vrot.slane %v3260, 2
    %v3463 = vmul.f32 %v3458, %v3461
    %3465 = vrot.lane.b32.xlu0 %v3459, 64
    %v3466 = vpop.permute.xlu0 %3465
    %v3468 = vmul.f32 %v3458, %v3466
    %3470 = vrot.lane.b32.xlu0 %v3468, 32
    %v3471 = vpop.permute.xlu0 %3470
    %v3473 = vadd.f32 %v3463, %v3471
    %v3474 = vtanh.pop %v3473
    %3476 = vrot.lane.b32.xlu0 %v3474, 64
    %v3477 = vpop.permute.xlu0 %3476
    %v3479 = vmul.f32 %v3458, %v3477
    %v3481 = vrot.slane %v3452, 2
    %3482 = vrot.lane.b32.xlu0 %v3481, 32
    %v3483 = vpop.permute.xlu0 %3482
    %v3484 = vsel %vm122, %v3483, 0
    %3486 = vmatprep.subr.mxu0 0.0
    %3487 = vmatpush1.msra.mxu0 %v2218
    %3488 = vmatprep.subr.mxu0 0.0
    %3489 = vmatpush1.msra.mxu0 %v2219
    %3490 = vmatprep.subr.mxu0 0.0
    %3491 = vmatpush1.msra.mxu0 %v2220
    %3492 = vmatprep.subr.mxu0 0.0
    %3493 = vmatpush1.msra.mxu0 %v2221
    %3494 = vmatprep.subr.mxu0 0.0
    %3495 = vmatpush1.msra.mxu0 0.0
    %3496 = vmatprep.subr.mxu0 0.0
    %3497 = vmatpush1.msra.mxu0 0.0
    %3498 = vmatprep.subr.mxu0 0.0
    %3499 = vmatpush1.msra.mxu0 0.0
    %3500 = vmatprep.subr.mxu0 0.0
    %3501 = vmatpush1.msra.mxu0 0.0
    %3502 = vmatprep.subr.mxu0 0.0
    %3503 = vmatpush1.msra.mxu0 0.0
    %3504 = vmatprep.subr.mxu0 0.0
    %3505 = vmatpush1.msra.mxu0 0.0
    %3506 = vmatprep.subr.mxu0 0.0
    %3507 = vmatpush1.msra.mxu0 0.0
    %3508 = vmatprep.subr.mxu0 0.0
    %3509 = vmatpush1.msra.mxu0 0.0
    %3510 = vmatprep.subr.mxu0 0.0
    %3511 = vmatpush1.msra.mxu0 0.0
    %3512 = vmatprep.subr.mxu0 0.0
    %3513 = vmatpush1.msra.mxu0 0.0
    %3514 = vmatprep.subr.mxu0 0.0
    %3515 = vmatpush1.msra.mxu0 0.0
    %3516 = vmatprep.subr.mxu0 0.0
    %3517 = vmatpush1.msra.mxu0 0.0
    %3518 = vmatprep.subr.mxu0 0.0
    %3519 = vmatpush1.msra.mxu0 0.0
    %3520 = vmatprep.subr.mxu0 0.0
    %3521 = vmatpush1.msra.mxu0 0.0
    %3522 = vmatprep.subr.mxu0 0.0
    %3523 = vmatpush1.msra.mxu0 0.0
    %3524 = vmatprep.subr.mxu0 0.0
    %3525 = vmatpush1.msra.mxu0 0.0
    %3526 = vmatprep.subr.mxu0 0.0
    %3527 = vmatpush1.msra.mxu0 0.0
    %3528 = vmatprep.subr.mxu0 0.0
    %3529 = vmatpush1.msra.mxu0 0.0
    %3530 = vmatprep.subr.mxu0 0.0
    %3531 = vmatpush1.msra.mxu0 0.0
    %3532 = vmatprep.subr.mxu0 0.0
    %3533 = vmatpush1.msra.mxu0 0.0
    %3534 = vmatprep.subr.mxu0 0.0
    %3535 = vmatpush1.msra.mxu0 0.0
    %3536 = vmatprep.subr.mxu0 0.0
    %3537 = vmatpush1.msra.mxu0 0.0
    %3538 = vmatprep.subr.mxu0 0.0
    %3539 = vmatpush1.msra.mxu0 0.0
    %3540 = vmatprep.subr.mxu0 0.0
    %3541 = vmatpush1.msra.mxu0 0.0
    %3542 = vmatprep.subr.mxu0 0.0
    %3543 = vmatpush1.msra.mxu0 0.0
    %3544 = vmatprep.subr.mxu0 0.0
    %3545 = vmatpush1.msra.mxu0 0.0
    %3546 = vmatprep.subr.mxu0 0.0
    %3547 = vmatpush1.msra.mxu0 0.0
    %3548 = vmatprep.subr.mxu0 0.0
    %3549 = vmatpush1.msra.mxu0 0.0
    %3550 = vmatprep.mubr.f32.mxu0 0.0
    %3551 = vmatmul.mubr.f32.gmra.mrb[0].mxu0 %v3484
    %v3552 = vpop.f32.mrb[0].mxu0
    %v3553 = vadd.f32 0.0, %v3552
    %v3554 = vpop.f32.mrb[0].mxu0
    %3555 = vdwg.mxu0
    %v3557 = vrot.slane %v3553, 4
    %v3559 = vadd.f32 %v2216, %v3557
    %v3561 = vrot.slane %v3479, 4
    %3562 = vrot.lane.b32.xlu0 %v3561, 32
    %v3563 = vpop.permute.xlu0 %3562
    %v3564 = vsel %vm122, %v3563, 0
    %3566 = vmatprep.subr.mxu0 0.0
    %3567 = vmatpush1.msra.mxu0 %v2293
    %3568 = vmatprep.subr.mxu0 0.0
    %3569 = vmatpush1.msra.mxu0 %v2294
    %3570 = vmatprep.subr.mxu0 0.0
    %3571 = vmatpush1.msra.mxu0 %v2295
    %3572 = vmatprep.subr.mxu0 0.0
    %3573 = vmatpush1.msra.mxu0 %v2296
    %3574 = vmatprep.subr.mxu0 0.0
    %3575 = vmatpush1.msra.mxu0 0.0
    %3576 = vmatprep.subr.mxu0 0.0
    %3577 = vmatpush1.msra.mxu0 0.0
    %3578 = vmatprep.subr.mxu0 0.0
    %3579 = vmatpush1.msra.mxu0 0.0
    %3580 = vmatprep.subr.mxu0 0.0
    %3581 = vmatpush1.msra.mxu0 0.0
    %3582 = vmatprep.subr.mxu0 0.0
    %3583 = vmatpush1.msra.mxu0 0.0
    %3584 = vmatprep.subr.mxu0 0.0
    %3585 = vmatpush1.msra.mxu0 0.0
    %3586 = vmatprep.subr.mxu0 0.0
    %3587 = vmatpush1.msra.mxu0 0.0
    %3588 = vmatprep.subr.mxu0 0.0
    %3589 = vmatpush1.msra.mxu0 0.0
    %3590 = vmatprep.subr.mxu0 0.0
    %3591 = vmatpush1.msra.mxu0 0.0
    %3592 = vmatprep.subr.mxu0 0.0
    %3593 = vmatpush1.msra.mxu0 0.0
    %3594 = vmatprep.subr.mxu0 0.0
    %3595 = vmatpush1.msra.mxu0 0.0
    %3596 = vmatprep.subr.mxu0 0.0
    %3597 = vmatpush1.msra.mxu0 0.0
    %3598 = vmatprep.subr.mxu0 0.0
    %3599 = vmatpush1.msra.mxu0 0.0
    %3600 = vmatprep.subr.mxu0 0.0
    %3601 = vmatpush1.msra.mxu0 0.0
    %3602 = vmatprep.subr.mxu0 0.0
    %3603 = vmatpush1.msra.mxu0 0.0
    %3604 = vmatprep.subr.mxu0 0.0
    %3605 = vmatpush1.msra.mxu0 0.0
    %3606 = vmatprep.subr.mxu0 0.0
    %3607 = vmatpush1.msra.mxu0 0.0
    %3608 = vmatprep.subr.mxu0 0.0
    %3609 = vmatpush1.msra.mxu0 0.0
    %3610 = vmatprep.subr.mxu0 0.0
    %3611 = vmatpush1.msra.mxu0 0.0
    %3612 = vmatprep.subr.mxu0 0.0
    %3613 = vmatpush1.msra.mxu0 0.0
    %3614 = vmatprep.subr.mxu0 0.0
    %3615 = vmatpush1.msra.mxu0 0.0
    %3616 = vmatprep.subr.mxu0 0.0
    %3617 = vmatpush1.msra.mxu0 0.0
    %3618 = vmatprep.subr.mxu0 0.0
    %3619 = vmatpush1.msra.mxu0 0.0
    %3620 = vmatprep.subr.mxu0 0.0
    %3621 = vmatpush1.msra.mxu0 0.0
    %3622 = vmatprep.subr.mxu0 0.0
    %3623 = vmatpush1.msra.mxu0 0.0
    %3624 = vmatprep.subr.mxu0 0.0
    %3625 = vmatpush1.msra.mxu0 0.0
    %3626 = vmatprep.subr.mxu0 0.0
    %3627 = vmatpush1.msra.mxu0 0.0
    %3628 = vmatprep.subr.mxu0 0.0
    %3629 = vmatpush1.msra.mxu0 0.0
    %3630 = vmatprep.mubr.f32.mxu0 0.0
    %3631 = vmatmul.mubr.f32.gmra.mrb[0].mxu0 %v3564
    %v3632 = vpop.f32.mrb[0].mxu0
    %v3633 = vadd.f32 0.0, %v3632
    %v3634 = vpop.f32.mrb[0].mxu0
    %3635 = vdwg.mxu0
    %v3637 = vrot.slane %v3633, 6
    %v3639 = vadd.f32 %v2215, %v3637
    %v3640 = vxor.u32 %v3559, 2147483648
    %v3641 = vmul.f32 %v3640, 1.442695
    %v3642 = vpow.pop %v3641
    %v3643 = vadd.f32 %v3642, 1.0
    %v3644 = vrcp.pop %v3643
    %v3645 = vmul.f32 1.0, %v3644
    %v3646 = vtanh.pop %v3559
    %v3648 = vrot.slane %v3446, 6
    %v3650 = vmul.f32 %v3645, %v3648
    %3652 = vrot.lane.b32.xlu0 %v3646, 64
    %v3653 = vpop.permute.xlu0 %3652
    %v3655 = vmul.f32 %v3645, %v3653
    %3657 = vrot.lane.b32.xlu0 %v3655, 32
    %v3658 = vpop.permute.xlu0 %3657
    %v3660 = vadd.f32 %v3650, %v3658
    %v3661 = vtanh.pop %v3660
    %3663 = vrot.lane.b32.xlu0 %v3661, 64
    %v3664 = vpop.permute.xlu0 %3663
    %v3666 = vmul.f32 %v3645, %v3664
    %v3667 = vxor.u32 %v3639, 2147483648
    %v3668 = vmul.f32 %v3667, 1.442695
    %v3669 = vpow.pop %v3668
    %v3670 = vadd.f32 %v3669, 1.0
    %v3671 = vrcp.pop %v3670
    %v3672 = vmul.f32 1.0, %v3671
    %v3673 = vtanh.pop %v3639
    %v3675 = vrot.slane %v3473, 2
    %v3677 = vmul.f32 %v3672, %v3675
    %3679 = vrot.lane.b32.xlu0 %v3673, 64
    %v3680 = vpop.permute.xlu0 %3679
    %v3682 = vmul.f32 %v3672, %v3680
    %3684 = vrot.lane.b32.xlu0 %v3682, 32
    %v3685 = vpop.permute.xlu0 %3684
    %v3687 = vadd.f32 %v3677, %v3685
    %v3688 = vtanh.pop %v3687
    %3690 = vrot.lane.b32.xlu0 %v3688, 64
    %v3691 = vpop.permute.xlu0 %3690
    %v3693 = vmul.f32 %v3672, %v3691
    %v3695 = vrot.slane %v3666, 4
    %3696 = vrot.lane.b32.xlu0 %v3695, 32
    %v3697 = vpop.permute.xlu0 %3696
    %v3698 = vsel %vm122, %v3697, 0
    %3700 = vmatprep.subr.mxu0 0.0
    %3701 = vmatpush1.msra.mxu0 %v2218
    %3702 = vmatprep.subr.mxu0 0.0
    %3703 = vmatpush1.msra.mxu0 %v2219
    %3704 = vmatprep.subr.mxu0 0.0
    %3705 = vmatpush1.msra.mxu0 %v2220
    %3706 = vmatprep.subr.mxu0 0.0
    %3707 = vmatpush1.msra.mxu0 %v2221
    %3708 = vmatprep.subr.mxu0 0.0
    %3709 = vmatpush1.msra.mxu0 0.0
    %3710 = vmatprep.subr.mxu0 0.0
    %3711 = vmatpush1.msra.mxu0 0.0
    %3712 = vmatprep.subr.mxu0 0.0
    %3713 = vmatpush1.msra.mxu0 0.0
    %3714 = vmatprep.subr.mxu0 0.0
    %3715 = vmatpush1.msra.mxu0 0.0
    %3716 = vmatprep.subr.mxu0 0.0
    %3717 = vmatpush1.msra.mxu0 0.0
    %3718 = vmatprep.subr.mxu0 0.0
    %3719 = vmatpush1.msra.mxu0 0.0
    %3720 = vmatprep.subr.mxu0 0.0
    %3721 = vmatpush1.msra.mxu0 0.0
    %3722 = vmatprep.subr.mxu0 0.0
    %3723 = vmatpush1.msra.mxu0 0.0
    %3724 = vmatprep.subr.mxu0 0.0
    %3725 = vmatpush1.msra.mxu0 0.0
    %3726 = vmatprep.subr.mxu0 0.0
    %3727 = vmatpush1.msra.mxu0 0.0
    %3728 = vmatprep.subr.mxu0 0.0
    %3729 = vmatpush1.msra.mxu0 0.0
    %3730 = vmatprep.subr.mxu0 0.0
    %3731 = vmatpush1.msra.mxu0 0.0
    %3732 = vmatprep.subr.mxu0 0.0
    %3733 = vmatpush1.msra.mxu0 0.0
    %3734 = vmatprep.subr.mxu0 0.0
    %3735 = vmatpush1.msra.mxu0 0.0
    %3736 = vmatprep.subr.mxu0 0.0
    %3737 = vmatpush1.msra.mxu0 0.0
    %3738 = vmatprep.subr.mxu0 0.0
    %3739 = vmatpush1.msra.mxu0 0.0
    %3740 = vmatprep.subr.mxu0 0.0
    %3741 = vmatpush1.msra.mxu0 0.0
    %3742 = vmatprep.subr.mxu0 0.0
    %3743 = vmatpush1.msra.mxu0 0.0
    %3744 = vmatprep.subr.mxu0 0.0
    %3745 = vmatpush1.msra.mxu0 0.0
    %3746 = vmatprep.subr.mxu0 0.0
    %3747 = vmatpush1.msra.mxu0 0.0
    %3748 = vmatprep.subr.mxu0 0.0
    %3749 = vmatpush1.msra.mxu0 0.0
    %3750 = vmatprep.subr.mxu0 0.0
    %3751 = vmatpush1.msra.mxu0 0.0
    %3752 = vmatprep.subr.mxu0 0.0
    %3753 = vmatpush1.msra.mxu0 0.0
    %3754 = vmatprep.subr.mxu0 0.0
    %3755 = vmatpush1.msra.mxu0 0.0
    %3756 = vmatprep.subr.mxu0 0.0
    %3757 = vmatpush1.msra.mxu0 0.0
    %3758 = vmatprep.subr.mxu0 0.0
    %3759 = vmatpush1.msra.mxu0 0.0
    %3760 = vmatprep.subr.mxu0 0.0
    %3761 = vmatpush1.msra.mxu0 0.0
    %3762 = vmatprep.subr.mxu0 0.0
    %3763 = vmatpush1.msra.mxu0 0.0
    %3764 = vmatprep.mubr.f32.mxu0 0.0
    %3765 = vmatmul.mubr.f32.gmra.mrb[0].mxu0 %v3698
    %v3766 = vpop.f32.mrb[0].mxu0
    %v3767 = vadd.f32 0.0, %v3766
    %v3768 = vpop.f32.mrb[0].mxu0
    %3769 = vdwg.mxu0
    %v3771 = vrot.slane %v3767, 2
    %v3773 = vadd.f32 %v2216, %v3771
    %v3775 = vrot.slane %v3693, 2
    %3776 = vrot.lane.b32.xlu0 %v3775, 32
    %v3777 = vpop.permute.xlu0 %3776
    %v3778 = vsel %vm122, %v3777, 0
    %3780 = vmatprep.subr.mxu0 0.0
    %3781 = vmatpush1.msra.mxu0 %v2293
    %3782 = vmatprep.subr.mxu0 0.0
    %3783 = vmatpush1.msra.mxu0 %v2294
    %3784 = vmatprep.subr.mxu0 0.0
    %3785 = vmatpush1.msra.mxu0 %v2295
    %3786 = vmatprep.subr.mxu0 0.0
    %3787 = vmatpush1.msra.mxu0 %v2296
    %3788 = vmatprep.subr.mxu0 0.0
    %3789 = vmatpush1.msra.mxu0 0.0
    %3790 = vmatprep.subr.mxu0 0.0
    %3791 = vmatpush1.msra.mxu0 0.0
    %3792 = vmatprep.subr.mxu0 0.0
    %3793 = vmatpush1.msra.mxu0 0.0
    %3794 = vmatprep.subr.mxu0 0.0
    %3795 = vmatpush1.msra.mxu0 0.0
    %3796 = vmatprep.subr.mxu0 0.0
    %3797 = vmatpush1.msra.mxu0 0.0
    %3798 = vmatprep.subr.mxu0 0.0
    %3799 = vmatpush1.msra.mxu0 0.0
    %3800 = vmatprep.subr.mxu0 0.0
    %3801 = vmatpush1.msra.mxu0 0.0
    %3802 = vmatprep.subr.mxu0 0.0
    %3803 = vmatpush1.msra.mxu0 0.0
    %3804 = vmatprep.subr.mxu0 0.0
    %3805 = vmatpush1.msra.mxu0 0.0
    %3806 = vmatprep.subr.mxu0 0.0
    %3807 = vmatpush1.msra.mxu0 0.0
    %3808 = vmatprep.subr.mxu0 0.0
    %3809 = vmatpush1.msra.mxu0 0.0
    %3810 = vmatprep.subr.mxu0 0.0
    %3811 = vmatpush1.msra.mxu0 0.0
    %3812 = vmatprep.subr.mxu0 0.0
    %3813 = vmatpush1.msra.mxu0 0.0
    %3814 = vmatprep.subr.mxu0 0.0
    %3815 = vmatpush1.msra.mxu0 0.0
    %3816 = vmatprep.subr.mxu0 0.0
    %3817 = vmatpush1.msra.mxu0 0.0
    %3818 = vmatprep.subr.mxu0 0.0
    %3819 = vmatpush1.msra.mxu0 0.0
    %3820 = vmatprep.subr.mxu0 0.0
    %3821 = vmatpush1.msra.mxu0 0.0
    %3822 = vmatprep.subr.mxu0 0.0
    %3823 = vmatpush1.msra.mxu0 0.0
    %3824 = vmatprep.subr.mxu0 0.0
    %3825 = vmatpush1.msra.mxu0 0.0
    %3826 = vmatprep.subr.mxu0 0.0
    %3827 = vmatpush1.msra.mxu0 0.0
    %3828 = vmatprep.subr.mxu0 0.0
    %3829 = vmatpush1.msra.mxu0 0.0
    %3830 = vmatprep.subr.mxu0 0.0
    %3831 = vmatpush1.msra.mxu0 0.0
    %3832 = vmatprep.subr.mxu0 0.0
    %3833 = vmatpush1.msra.mxu0 0.0
    %3834 = vmatprep.subr.mxu0 0.0
    %3835 = vmatpush1.msra.mxu0 0.0
    %3836 = vmatprep.subr.mxu0 0.0
    %3837 = vmatpush1.msra.mxu0 0.0
    %3838 = vmatprep.subr.mxu0 0.0
    %3839 = vmatpush1.msra.mxu0 0.0
    %3840 = vmatprep.subr.mxu0 0.0
    %3841 = vmatpush1.msra.mxu0 0.0
    %3842 = vmatprep.subr.mxu0 0.0
    %3843 = vmatpush1.msra.mxu0 0.0
    %3844 = vmatprep.mubr.f32.mxu0 0.0
    %3845 = vmatmul.mubr.f32.gmra.mrb[0].mxu0 %v3778
    %v3846 = vpop.f32.mrb[0].mxu0
    %v3847 = vadd.f32 0.0, %v3846
    %v3848 = vpop.f32.mrb[0].mxu0
    %3849 = vdwg.mxu0
    %v3850 = vadd.f32 %v2215, %v3847
    %v3851 = vxor.u32 %v3773, 2147483648
    %v3852 = vmul.f32 %v3851, 1.442695
    %v3853 = vpow.pop %v3852
    %v3854 = vadd.f32 %v3853, 1.0
    %v3855 = vrcp.pop %v3854
    %v3856 = vmul.f32 1.0, %v3855
    %v3857 = vtanh.pop %v3773
    %v3859 = vrot.slane %v3660, 6
    %v3861 = vmul.f32 %v3856, %v3859
    %3863 = vrot.lane.b32.xlu0 %v3857, 64
    %v3864 = vpop.permute.xlu0 %3863
    %v3866 = vmul.f32 %v3856, %v3864
    %3868 = vrot.lane.b32.xlu0 %v3866, 32
    %v3869 = vpop.permute.xlu0 %3868
    %v3871 = vadd.f32 %v3861, %v3869
    %v3872 = vtanh.pop %v3871
    %3874 = vrot.lane.b32.xlu0 %v3872, 64
    %v3875 = vpop.permute.xlu0 %3874
    %v3877 = vmul.f32 %v3856, %v3875
    %v3878 = vxor.u32 %v3850, 2147483648
    %v3879 = vmul.f32 %v3878, 1.442695
    %v3880 = vpow.pop %v3879
    %v3881 = vadd.f32 %v3880, 1.0
    %v3882 = vrcp.pop %v3881
    %v3883 = vmul.f32 1.0, %v3882
    %v3884 = vtanh.pop %v3850
    %v3886 = vrot.slane %v3687, 2
    %v3888 = vmul.f32 %v3883, %v3886
    %3890 = vrot.lane.b32.xlu0 %v3884, 64
    %v3891 = vpop.permute.xlu0 %3890
    %v3893 = vmul.f32 %v3883, %v3891
    %3895 = vrot.lane.b32.xlu0 %v3893, 32
    %v3896 = vpop.permute.xlu0 %3895
    %v3898 = vadd.f32 %v3888, %v3896
    %v3899 = vtanh.pop %v3898
    %3901 = vrot.lane.b32.xlu0 %v3899, 64
    %v3902 = vpop.permute.xlu0 %3901
    %v3904 = vmul.f32 %v3883, %v3902
    %v3905 = vld [vmem:[%s9] sm:$0xff]
    %v3906 = vld [vmem:[%s9 + $0x8] sm:$0xff]
    %v3907 = vld [vmem:[%s9 + $0x10] sm:$0xff]
    %v3908 = vld [vmem:[%s9 + $0x18] sm:$0xff]
    %v3909 = vld [vmem:[%s9 + $0x20] sm:$0xff]
    %v3910 = vld [vmem:[%s9 + $0x28] sm:$0xff]
    %v3911 = vld [vmem:[%s9 + $0x30] sm:$0xff]
    %v3912 = vld [vmem:[%s9 + $0x38] sm:$0xff]
    %3914 = vrot.lane.b32.xlu0 %v3904, 32
    %v3915 = vpop.permute.xlu0 %3914
    %v3916 = vsel %vm122, %v3915, 0
    %3918 = vmatprep.subr.mxu0 0.0
    %3919 = vmatpush1.msra.mxu0 %v3909
    %3920 = vmatprep.subr.mxu0 0.0
    %3921 = vmatpush1.msra.mxu0 %v3910
    %3922 = vmatprep.subr.mxu0 0.0
    %3923 = vmatpush1.msra.mxu0 %v3911
    %3924 = vmatprep.subr.mxu0 0.0
    %3925 = vmatpush1.msra.mxu0 %v3912
    %3926 = vmatprep.subr.mxu0 0.0
    %3927 = vmatpush1.msra.mxu0 0.0
    %3928 = vmatprep.subr.mxu0 0.0
    %3929 = vmatpush1.msra.mxu0 0.0
    %3930 = vmatprep.subr.mxu0 0.0
    %3931 = vmatpush1.msra.mxu0 0.0
    %3932 = vmatprep.subr.mxu0 0.0
    %3933 = vmatpush1.msra.mxu0 0.0
    %3934 = vmatprep.subr.mxu0 0.0
    %3935 = vmatpush1.msra.mxu0 0.0
    %3936 = vmatprep.subr.mxu0 0.0
    %3937 = vmatpush1.msra.mxu0 0.0
    %3938 = vmatprep.subr.mxu0 0.0
    %3939 = vmatpush1.msra.mxu0 0.0
    %3940 = vmatprep.subr.mxu0 0.0
    %3941 = vmatpush1.msra.mxu0 0.0
    %3942 = vmatprep.subr.mxu0 0.0
    %3943 = vmatpush1.msra.mxu0 0.0
    %3944 = vmatprep.subr.mxu0 0.0
    %3945 = vmatpush1.msra.mxu0 0.0
    %3946 = vmatprep.subr.mxu0 0.0
    %3947 = vmatpush1.msra.mxu0 0.0
    %3948 = vmatprep.subr.mxu0 0.0
    %3949 = vmatpush1.msra.mxu0 0.0
    %3950 = vmatprep.subr.mxu0 0.0
    %3951 = vmatpush1.msra.mxu0 0.0
    %3952 = vmatprep.subr.mxu0 0.0
    %3953 = vmatpush1.msra.mxu0 0.0
    %3954 = vmatprep.subr.mxu0 0.0
    %3955 = vmatpush1.msra.mxu0 0.0
    %3956 = vmatprep.subr.mxu0 0.0
    %3957 = vmatpush1.msra.mxu0 0.0
    %3958 = vmatprep.subr.mxu0 0.0
    %3959 = vmatpush1.msra.mxu0 0.0
    %3960 = vmatprep.subr.mxu0 0.0
    %3961 = vmatpush1.msra.mxu0 0.0
    %3962 = vmatprep.subr.mxu0 0.0
    %3963 = vmatpush1.msra.mxu0 0.0
    %3964 = vmatprep.subr.mxu0 0.0
    %3965 = vmatpush1.msra.mxu0 0.0
    %3966 = vmatprep.subr.mxu0 0.0
    %3967 = vmatpush1.msra.mxu0 0.0
    %3968 = vmatprep.subr.mxu0 0.0
    %3969 = vmatpush1.msra.mxu0 0.0
    %3970 = vmatprep.subr.mxu0 0.0
    %3971 = vmatpush1.msra.mxu0 0.0
    %3972 = vmatprep.subr.mxu0 0.0
    %3973 = vmatpush1.msra.mxu0 0.0
    %3974 = vmatprep.subr.mxu0 0.0
    %3975 = vmatpush1.msra.mxu0 0.0
    %3976 = vmatprep.subr.mxu0 0.0
    %3977 = vmatpush1.msra.mxu0 0.0
    %3978 = vmatprep.subr.mxu0 0.0
    %3979 = vmatpush1.msra.mxu0 0.0
    %3980 = vmatprep.subr.mxu0 0.0
    %3981 = vmatpush1.msra.mxu0 0.0
    %3982 = vmatprep.mubr.f32.mxu0 0.0
    %3983 = vmatmul.mubr.f32.gmra.mrb[0].mxu0 %v3916
    %v3984 = vpop.f32.mrb[0].mxu0
    %v3985 = vadd.f32 0.0, %v3984
    %v3986 = vpop.f32.mrb[0].mxu0
    %3987 = vdwg.mxu0
    %v3989 = vrot.slane %v3877, 6
    %3990 = vrot.lane.b32.xlu0 %v3989, 32
    %v3991 = vpop.permute.xlu0 %3990
    %v3992 = vsel %vm122, %v3991, 0
    %3994 = vmatprep.subr.mxu0 0.0
    %3995 = vmatpush1.msra.mxu0 %v3905
    %3996 = vmatprep.subr.mxu0 0.0
    %3997 = vmatpush1.msra.mxu0 %v3906
    %3998 = vmatprep.subr.mxu0 0.0
    %3999 = vmatpush1.msra.mxu0 %v3907
    %4000 = vmatprep.subr.mxu0 0.0
    %4001 = vmatpush1.msra.mxu0 %v3908
    %4002 = vmatprep.subr.mxu0 0.0
    %4003 = vmatpush1.msra.mxu0 0.0
    %4004 = vmatprep.subr.mxu0 0.0
    %4005 = vmatpush1.msra.mxu0 0.0
    %4006 = vmatprep.subr.mxu0 0.0
    %4007 = vmatpush1.msra.mxu0 0.0
    %4008 = vmatprep.subr.mxu0 0.0
    %4009 = vmatpush1.msra.mxu0 0.0
    %4010 = vmatprep.subr.mxu0 0.0
    %4011 = vmatpush1.msra.mxu0 0.0
    %4012 = vmatprep.subr.mxu0 0.0
    %4013 = vmatpush1.msra.mxu0 0.0
    %4014 = vmatprep.subr.mxu0 0.0
    %4015 = vmatpush1.msra.mxu0 0.0
    %4016 = vmatprep.subr.mxu0 0.0
    %4017 = vmatpush1.msra.mxu0 0.0
    %4018 = vmatprep.subr.mxu0 0.0
    %4019 = vmatpush1.msra.mxu0 0.0
    %4020 = vmatprep.subr.mxu0 0.0
    %4021 = vmatpush1.msra.mxu0 0.0
    %4022 = vmatprep.subr.mxu0 0.0
    %4023 = vmatpush1.msra.mxu0 0.0
    %4024 = vmatprep.subr.mxu0 0.0
    %4025 = vmatpush1.msra.mxu0 0.0
    %4026 = vmatprep.subr.mxu0 0.0
    %4027 = vmatpush1.msra.mxu0 0.0
    %4028 = vmatprep.subr.mxu0 0.0
    %4029 = vmatpush1.msra.mxu0 0.0
    %4030 = vmatprep.subr.mxu0 0.0
    %4031 = vmatpush1.msra.mxu0 0.0
    %4032 = vmatprep.subr.mxu0 0.0
    %4033 = vmatpush1.msra.mxu0 0.0
    %4034 = vmatprep.subr.mxu0 0.0
    %4035 = vmatpush1.msra.mxu0 0.0
    %4036 = vmatprep.subr.mxu0 0.0
    %4037 = vmatpush1.msra.mxu0 0.0
    %4038 = vmatprep.subr.mxu0 0.0
    %4039 = vmatpush1.msra.mxu0 0.0
    %4040 = vmatprep.subr.mxu0 0.0
    %4041 = vmatpush1.msra.mxu0 0.0
    %4042 = vmatprep.subr.mxu0 0.0
    %4043 = vmatpush1.msra.mxu0 0.0
    %4044 = vmatprep.subr.mxu0 0.0
    %4045 = vmatpush1.msra.mxu0 0.0
    %4046 = vmatprep.subr.mxu0 0.0
    %4047 = vmatpush1.msra.mxu0 0.0
    %4048 = vmatprep.subr.mxu0 0.0
    %4049 = vmatpush1.msra.mxu0 0.0
    %4050 = vmatprep.subr.mxu0 0.0
    %4051 = vmatpush1.msra.mxu0 0.0
    %4052 = vmatprep.subr.mxu0 0.0
    %4053 = vmatpush1.msra.mxu0 0.0
    %4054 = vmatprep.subr.mxu0 0.0
    %4055 = vmatpush1.msra.mxu0 0.0
    %4056 = vmatprep.subr.mxu0 0.0
    %4057 = vmatpush1.msra.mxu0 0.0
    %4058 = vmatprep.mubr.f32.mxu0 0.0
    %4059 = vmatmul.mubr.f32.gmra.mrb[0].mxu0 %v3992
    %v4060 = vpop.f32.mrb[0].mxu0
    %v4061 = vadd.f32 %v3985, %v4060
    %v4062 = vpop.f32.mrb[0].mxu0
    %4063 = vdwg.mxu0
    %v4064 = vld [vmem:[%s10] sm:$0x1]
    %v4066 = vlaneseq
    %v4067 = vshrl.u32 %v4066, 7
    %v4068 = vsub.s32 0, %v4067
    %v4069 = vrot.slane %v4064, %v4068
    %v4071 = vadd.f32 %v4061, %v4069
    %v4072 = vmax.f32 %v4071, 0.0
    %v4073 = vld [vmem:[%s11] sm:$0xff]
    %v4074 = vld [vmem:[%s11 + $0x8] sm:$0xff]
    %v4075 = vld [vmem:[%s11 + $0x10] sm:$0xff]
    %v4076 = vld [vmem:[%s11 + $0x18] sm:$0xff]
    %v4077 = vld [vmem:[%s11 + $0x20] sm:$0xff]
    %v4078 = vld [vmem:[%s11 + $0x28] sm:$0xff]
    %v4079 = vld [vmem:[%s11 + $0x30] sm:$0xff]
    %v4080 = vld [vmem:[%s11 + $0x38] sm:$0xff]
    %v4081 = vld [vmem:[%s12] sm:$0x1]
    %v4083 = vlaneseq
    %v4084 = vshrl.u32 %v4083, 7
    %v4085 = vsub.s32 0, %v4084
    %v4086 = vrot.slane %v4081, %v4085
    %vm4088 = vcmask 523264
    %v4090 = vsel %vm4088, %v4072, 0
    %4092 = vmatprep.subr.mxu0 0.0
    %4093 = vmatpush1.msra.mxu0 %v4073
    %4094 = vmatprep.subr.mxu0 0.0
    %4095 = vmatpush1.msra.mxu0 %v4074
    %4096 = vmatprep.subr.mxu0 0.0
    %4097 = vmatpush1.msra.mxu0 %v4075
    %4098 = vmatprep.subr.mxu0 0.0
    %4099 = vmatpush1.msra.mxu0 %v4076
    %4100 = vmatprep.subr.mxu0 0.0
    %4101 = vmatpush1.msra.mxu0 %v4077
    %4102 = vmatprep.subr.mxu0 0.0
    %4103 = vmatpush1.msra.mxu0 %v4078
    %4104 = vmatprep.subr.mxu0 0.0
    %4105 = vmatpush1.msra.mxu0 %v4079
    %4106 = vmatprep.subr.mxu0 0.0
    %4107 = vmatpush1.msra.mxu0 %v4080
    %4108 = vmatprep.subr.mxu0 0.0
    %4109 = vmatpush1.msra.mxu0 0.0
    %4110 = vmatprep.subr.mxu0 0.0
    %4111 = vmatpush1.msra.mxu0 0.0
    %4112 = vmatprep.subr.mxu0 0.0
    %4113 = vmatpush1.msra.mxu0 0.0
    %4114 = vmatprep.subr.mxu0 0.0
    %4115 = vmatpush1.msra.mxu0 0.0
    %4116 = vmatprep.subr.mxu0 0.0
    %4117 = vmatpush1.msra.mxu0 0.0
    %4118 = vmatprep.subr.mxu0 0.0
    %4119 = vmatpush1.msra.mxu0 0.0
    %4120 = vmatprep.subr.mxu0 0.0
    %4121 = vmatpush1.msra.mxu0 0.0
    %4122 = vmatprep.subr.mxu0 0.0
    %4123 = vmatpush1.msra.mxu0 0.0
    %4124 = vmatprep.subr.mxu0 0.0
    %4125 = vmatpush1.msra.mxu0 0.0
    %4126 = vmatprep.subr.mxu0 0.0
    %4127 = vmatpush1.msra.mxu0 0.0
    %4128 = vmatprep.subr.mxu0 0.0
    %4129 = vmatpush1.msra.mxu0 0.0
    %4130 = vmatprep.subr.mxu0 0.0
    %4131 = vmatpush1.msra.mxu0 0.0
    %4132 = vmatprep.subr.mxu0 0.0
    %4133 = vmatpush1.msra.mxu0 0.0
    %4134 = vmatprep.subr.mxu0 0.0
    %4135 = vmatpush1.msra.mxu0 0.0
    %4136 = vmatprep.subr.mxu0 0.0
    %4137 = vmatpush1.msra.mxu0 0.0
    %4138 = vmatprep.subr.mxu0 0.0
    %4139 = vmatpush1.msra.mxu0 0.0
    %4140 = vmatprep.subr.mxu0 0.0
    %4141 = vmatpush1.msra.mxu0 0.0
    %4142 = vmatprep.subr.mxu0 0.0
    %4143 = vmatpush1.msra.mxu0 0.0
    %4144 = vmatprep.subr.mxu0 0.0
    %4145 = vmatpush1.msra.mxu0 0.0
    %4146 = vmatprep.subr.mxu0 0.0
    %4147 = vmatpush1.msra.mxu0 0.0
    %4148 = vmatprep.subr.mxu0 0.0
    %4149 = vmatpush1.msra.mxu0 0.0
    %4150 = vmatprep.subr.mxu0 0.0
    %4151 = vmatpush1.msra.mxu0 0.0
    %4152 = vmatprep.subr.mxu0 0.0
    %4153 = vmatpush1.msra.mxu0 0.0
    %4154 = vmatprep.subr.mxu0 0.0
    %4155 = vmatpush1.msra.mxu0 0.0
    %4156 = vmatprep.mubr.f32.mxu0 0.0
    %4157 = vmatmul.mubr.f32.gmra.mrb[0].mxu0 %v4090
    %v4158 = vpop.f32.mrb[0].mxu0
    %v4159 = vadd.f32 %v4086, %v4158
    %v4160 = vpop.f32.mrb[0].mxu0
    %4161 = vdwg.mxu0
    %4162 = vst [vmem:[#allocation12] sm:$0x3] %v4159
    // Predicated region
    $region70: #{forward.1} parent=1 // pred_check
      _
    $region71: #{forward.1} parent=1 // pred_check_branch
      %4164 = sbr.rel (0) target = $region73
    $region72: #{forward.1} parent=1 // pred_region
      %s4166 = ssub.s32 32, 32
      %4167 = vsyncadd [#allocation6], %s4166
      %s4169 = sshll.u32 [#allocation12], 4
      %s4170 = int_to_ptr.vmem [resolvable:$true] %s4169
      %4172 = dma.vmem_to_hbm [thread:$0]  %s4170, 32, %s13, [#allocation6]
    $region73: #{forward.1} parent=1 // pred_fallthru
      _
    // Predicated region
    $region74: #{forward.1} parent=1 // pred_check
      _
    $region75: #{forward.1} parent=1 // pred_check_branch
      %4174 = sbr.rel (0) target = $region77
    $region76: #{forward.1} parent=1 // pred_region
      %4175 = dma.done [#allocation6], 32
    $region77: #{forward.1} parent=1 // pred_fallthru
      _
    %4176 = vsyncpa [#allocation5], 1
    %4177 = vsyncpa [#allocation8], 1
    %4178 = vsyncpa [#allocation11], 1
    %4179 = vsyncpa [#allocation6], 1

</llo_original>
